<compile_context>
chip_gen: v6e
topology: v6e:2x2x1
jax: 0.10.0
libtpu: 0.0.40
codegen_flags: <defaults>
</compile_context>

<pallas_src>
import functools

import jax
import jax.numpy as jnp
from jax.experimental import pallas as pl
from jax.experimental.pallas import tpu as pltpu


def _cparams():
    return pltpu.CompilerParams(
        dimension_semantics=("parallel",),
        vmem_limit_bytes=32 * 1024 * 1024,
    )


# ----------------------------------------------------------------------------
# Pallas kernel 1: O = act(A @ W + bias), tiled over M, bf16 in / f32 accumulate
# ----------------------------------------------------------------------------
def _matmul_bias_kernel(a_ref, w_ref, b_ref, o_ref, *, relu):
    acc = jnp.dot(a_ref[...], w_ref[...], preferred_element_type=jnp.float32)
    acc = acc + b_ref[...]              # bias (1, N) broadcasts over rows
    if relu:
        acc = jnp.maximum(acc, 0.0)
    o_ref[...] = acc


def pallas_matmul_bias(a, w, bias, relu, tm_max=512):
    """a: (M, K), w: (K, N) bf16, bias: (1, N) f32  ->  (M, N) f32."""
    M, K = a.shape
    K2, N = w.shape
    assert K == K2
    if a.dtype != jnp.bfloat16:
        a = a.astype(jnp.bfloat16)
    TM = M if M <= tm_max else tm_max          # tm_max is a multiple of 8/16
    grid = (pl.cdiv(M, TM),)
    return pl.pallas_call(
        functools.partial(_matmul_bias_kernel, relu=relu),
        out_shape=jax.ShapeDtypeStruct((M, N), jnp.float32),
        grid=grid,
        in_specs=[
            pl.BlockSpec((TM, K), lambda i: (i, 0)),
            pl.BlockSpec((K, N), lambda i: (0, 0)),
            pl.BlockSpec((1, N), lambda i: (0, 0)),
        ],
        out_specs=pl.BlockSpec((TM, N), lambda i: (i, 0)),
        compiler_params=_cparams(),
    )(a, w, bias)


# ----------------------------------------------------------------------------
# Pallas kernel 2: grouped adaptive per-patch product on the VPU (no padding)
#   out[g, p, f] = relu( sum_k a[g, p, k] * kern[g, f, k] + bias[g, f] )
# ----------------------------------------------------------------------------
def _adaptive_kernel(a_ref, k_ref, b_ref, o_ref, *, F):
    a = a_ref[...]                      # (G, P, 27) f32
    k = k_ref[...]                      # (G, F, 27) f32
    bias = b_ref[...]                   # (G, 1, F)  f32
    cols = []
    for f in range(F):                  # F is small & static -> unrolled VPU MACs
        of = jnp.sum(a * k[:, f:f + 1, :], axis=-1, keepdims=True)   # (G, P, 1)
        cols.append(of + bias[:, :, f:f + 1])
    out = jnp.concatenate(cols, axis=-1)                             # (G, P, F)
    o_ref[...] = jnp.maximum(out, 0.0)


def pallas_adaptive_matmul(a, kern, bias, F, g_max=64):
    """a: (B, P, K) f32, kern: (B, F, K) f32, bias: (B, 1, F) f32 -> (B, P, F) f32."""
    B, P, K = a.shape
    G = B if B <= g_max else g_max
    grid = (pl.cdiv(B, G),)
    return pl.pallas_call(
        functools.partial(_adaptive_kernel, F=F),
        out_shape=jax.ShapeDtypeStruct((B, P, F), jnp.float32),
        grid=grid,
        in_specs=[
            pl.BlockSpec((G, P, K), lambda i: (i, 0, 0)),
            pl.BlockSpec((G, F, K), lambda i: (i, 0, 0)),
            pl.BlockSpec((G, 1, F), lambda i: (i, 0, 0)),
        ],
        out_specs=pl.BlockSpec((G, P, F), lambda i: (i, 0, 0)),
        compiler_params=_cparams(),
    )(a, kern, bias)


# ----------------------------------------------------------------------------
# JAX glue: channels-last im2col, torch-order unfold, conv, shuffles
# ----------------------------------------------------------------------------
def im2col_nhwc(x, kh, kw, pad):
    """x: (N, H, W, C) -> (N*OH*OW, kh*kw*C), column order (ky, kx, c)."""
    N, H, W, C = x.shape
    xp = jnp.pad(x, ((0, 0), (pad, pad), (pad, pad), (0, 0)))
    OH = H + 2 * pad - kh + 1
    OW = W + 2 * pad - kw + 1
    cols = [xp[:, i:i + OH, j:j + OW, :] for i in range(kh) for j in range(kw)]
    patches = jnp.concatenate(cols, axis=-1)          # (N, OH, OW, kh*kw*C)
    return patches.reshape(N * OH * OW, kh * kw * C), OH, OW


def unfold_cmajor(x, kh, kw, pad):
    """torch F.unfold ordering: (N, OH*OW, C*kh*kw), index = c*kh*kw + ky*kw + kx."""
    N, H, W, C = x.shape
    xp = jnp.pad(x, ((0, 0), (pad, pad), (pad, pad), (0, 0)))
    OH = H + 2 * pad - kh + 1
    OW = W + 2 * pad - kw + 1
    cols = [xp[:, i:i + OH, j:j + OW, :] for i in range(kh) for j in range(kw)]
    patches = jnp.stack(cols, axis=-1)                # (N, OH, OW, C, kh*kw)
    return patches.reshape(N, OH * OW, C * kh * kw)


def conv2d_nhwc(x, w_mat, bias, kh, kw, pad, relu):
    """PyTorch-semantics Conv2d (stride 1) in NHWC via im2col + Pallas MXU matmul."""
    N, H, W, C = x.shape
    A, OH, OW = im2col_nhwc(x.astype(jnp.bfloat16), kh, kw, pad)
    out = pallas_matmul_bias(A, w_mat, bias, relu)    # (N*OH*OW, Cout) f32
    return out.reshape(N, OH, OW, -1)


def space_to_batch_nhwc(x, ph, pw):
    N, H, W, C = x.shape
    nh, nw = H // ph, W // pw
    p = x.reshape(N, nh, ph, nw, pw, C).transpose(0, 1, 3, 2, 4, 5)
    return p.reshape(N * nh * nw, ph, pw, C), nh, nw


def batch_to_space_nhwc(patches, N, nh, nw):
    _, ph, pw, C = patches.shape
    p = patches.reshape(N, nh, nw, ph, pw, C).transpose(0, 1, 3, 2, 4, 5)
    return p.reshape(N, nh * ph, nw * pw, C)


def pixel_shuffle_nhwc(x, s):
    N, H, W, C = x.shape
    Cout = C // (s * s)
    y = x.reshape(N, H, W, Cout, s, s).transpose(0, 1, 4, 2, 5, 3)
    return y.reshape(N, H * s, W * s, Cout)


# ----------------------------------------------------------------------------
# Params (all reshapes / casts / concatenations hoisted to init)
# ----------------------------------------------------------------------------
def init_params(key, F, scale):
    ks = jax.random.split(key, 12)

    def conv_w(k, cout, cin, kh, kw):
        w = 0.05 * jax.random.normal(k, (cout, cin, kh, kw), jnp.float32)
        # matmul form for NHWC im2col: rows ordered (ky, kx, c); bf16 for the MXU
        return jnp.transpose(w, (2, 3, 1, 0)).reshape(kh * kw * cin, cout).astype(jnp.bfloat16)

    def conv_b(k, n):
        return (0.05 * jax.random.normal(k, (n,), jnp.float32)).reshape(1, n)

    wk, bk = conv_w(ks[2], 27 * F, 256, 3, 3), conv_b(ks[3], 27 * F)
    wb, bb = conv_w(ks[4], F, 256, 3, 3), conv_b(ks[5], F)
    return {
        # AdaptiveConv
        "wf": conv_w(ks[0], 256, 3, 3, 3), "bf": conv_b(ks[1], 256),
        # kernel- and bias-predictor convs fused into one matmul at init
        "wkb": jnp.concatenate([wk, wb], axis=1), "bkb": jnp.concatenate([bk, bb], axis=1),
        # RegularConv
        "w1": conv_w(ks[6], 128, F, 5, 5), "b1": conv_b(ks[7], 128),
        "w2": conv_w(ks[8], 32, 128, 3, 3), "b2": conv_b(ks[9], 32),
        "w3": conv_w(ks[10], 3 * scale * scale, 32, 3, 3), "b3": conv_b(ks[11], 3 * scale * scale),
    }


# ----------------------------------------------------------------------------
# Model forward (F, scale, patch_shape are static Python ints)
# ----------------------------------------------------------------------------
def adaptive_forward(params, x, F):
    """x: (B, 5, 5, 3) NHWC -> (B, 5, 5, F) NHWC."""
    B, ph, pw, _ = x.shape
    feature = conv2d_nhwc(x, params["wf"], params["bf"], 3, 3, 0, relu=True)   # (B,3,3,256)
    x_unf = unfold_cmajor(x, 3, 3, 1)                                          # (B,25,27) f32
    A_feat, _, _ = im2col_nhwc(feature.astype(jnp.bfloat16), 3, 3, 0)          # (B, 2304)
    kb = pallas_matmul_bias(A_feat, params["wkb"], params["bkb"], relu=False)  # (B, 28F)
    kern = kb[:, :27 * F].reshape(B, F, 27)                                    # (B,F,27)
    bias = kb[:, 27 * F:].reshape(B, 1, F)                                     # (B,1,F)
    out = pallas_adaptive_matmul(x_unf, kern, bias, F)                         # (B,25,F)
    return out.reshape(B, ph, pw, F)


def sr_model_forward(params, x, F, scale, patch_shape=(5, 5)):
    """x: (N, 3, H, W) NCHW (matching PyTorch) -> (N, 3, H*scale, W*scale) NCHW."""
    N = x.shape[0]
    ph, pw = patch_shape
    x = jnp.transpose(x, (0, 2, 3, 1))                         # to NHWC, once
    patches, nh, nw = space_to_batch_nhwc(x, ph, pw)
    out = adaptive_forward(params, patches, F)                 # (B, 5, 5, F)
    out = batch_to_space_nhwc(out, N, nh, nw)                  # (N, H, W, F)
    out = conv2d_nhwc(out, params["w1"], params["b1"], 5, 5, 2, relu=True)
    out = conv2d_nhwc(out, params["w2"], params["b2"], 3, 3, 1, relu=True)
    out = conv2d_nhwc(out, params["w3"], params["b3"], 3, 3, 1, relu=False)
    out = pixel_shuffle_nhwc(out, scale)                       # (N, H*s, W*s, 3)
    return jnp.transpose(out, (0, 3, 1, 2))                    # back to NCHW, once


if __name__ == "__main__":
    F, scale, patch_shape = 4, 2, (5, 5)   # patch 5x5 is required by AdaptiveConv's reshape
    key = jax.random.PRNGKey(0)
    pkey, xkey = jax.random.split(key)
    params = init_params(pkey, F, scale)
    x = jax.random.normal(xkey, (2, 3, 10, 10), jnp.float32)   # N=2, 3ch, 10x10 -> 2x2 patches

    fwd = jax.jit(functools.partial(sr_model_forward, F=F, scale=scale,
                                    patch_shape=patch_shape))
    y = jax.block_until_ready(fwd(params, x))
    assert y.shape == (2, 3, 10 * scale, 10 * scale), y.shape
    assert bool(jnp.isfinite(y).all())
    print("KERNEL_OK")
</pallas_src>

<mosaic_0001>
module attributes {stable_mosaic.version = 11 : i64} {
  func.func @_matmul_bias_kernel(%arg0: i32, %arg1: memref<72x27xbf16, #tpu.memory_space<vmem>>, %arg2: memref<27x256xbf16, #tpu.memory_space<vmem>>, %arg3: memref<1x256xf32, #tpu.memory_space<vmem>>, %arg4: memref<72x256xf32, #tpu.memory_space<vmem>>) attributes {dimension_semantics = [#tpu.dimension_semantics<parallel>], iteration_bounds = array<i64: 1>, scalar_prefetch = 0 : i64, scratch_operands = 0 : i64, tpu.core_type = #tpu.core_type<tc>, window_params = [{transform_indices = @transform_0, window_bounds = array<i64: 72, 27>}, {pipeline_mode = #tpu.pipeline_mode<synchronous>, transform_indices = @transform_1, window_bounds = array<i64: 27, 256>}, {pipeline_mode = #tpu.pipeline_mode<synchronous>, transform_indices = @transform_2, window_bounds = array<i64: 1, 256>}, {transform_indices = @transform_3, window_bounds = array<i64: 72, 256>}]} {
    %c0 = arith.constant 0 : index
    %c0_0 = arith.constant 0 : index
    %0 = vector.load %arg1[%c0, %c0_0] : memref<72x27xbf16, #tpu.memory_space<vmem>>, vector<72x27xbf16>
    %c0_1 = arith.constant 0 : index
    %c0_2 = arith.constant 0 : index
    %1 = vector.load %arg2[%c0_1, %c0_2] : memref<27x256xbf16, #tpu.memory_space<vmem>>, vector<27x256xbf16>
    %cst = arith.constant dense<0.000000e+00> : vector<72x256xf32>
    %2 = tpu.matmul %0, %1, %cst {dimension_numbers = #tpu.dot_dimension_numbers<[1], [0], [0], [1], [0, 0, 1, 1], [], []>} : vector<72x27xbf16>, vector<27x256xbf16>, vector<72x256xf32> -> vector<72x256xf32>
    %c0_3 = arith.constant 0 : index
    %c0_4 = arith.constant 0 : index
    %3 = vector.load %arg3[%c0_3, %c0_4] : memref<1x256xf32, #tpu.memory_space<vmem>>, vector<1x256xf32>
    %4 = vector.broadcast %3 : vector<1x256xf32> to vector<72x256xf32>
    %5 = arith.addf %2, %4 : vector<72x256xf32>
    %cst_5 = arith.constant 0.000000e+00 : f32
    %6 = vector.broadcast %cst_5 : f32 to vector<72x256xf32>
    %7 = arith.maximumf %5, %6 : vector<72x256xf32>
    %c0_6 = arith.constant 0 : index
    %c0_7 = arith.constant 0 : index
    %8 = vector.load %arg4[%c0_6, %c0_7] : memref<72x256xf32, #tpu.memory_space<vmem>>, vector<72x256xf32>
    tpu.vector_store %arg4[%c0_6, %c0_7], %7 {strides = array<i32>} : memref<72x256xf32, #tpu.memory_space<vmem>>, vector<72x256xf32>,
    return
  }
  func.func @transform_0(%arg0: i32) -> (i32, i32) {
    %c0_i32 = arith.constant 0 : i32
    %c0_i32_0 = arith.constant 0 : i32
    return %arg0, %c0_i32 : i32, i32
  }
  func.func @transform_1(%arg0: i32) -> (i32, i32) {
    %c0_i32 = arith.constant 0 : i32
    %c0_i32_0 = arith.constant 0 : i32
    %c0_i32_1 = arith.constant 0 : i32
    return %c0_i32, %c0_i32_0 : i32, i32
  }
  func.func @transform_2(%arg0: i32) -> (i32, i32) {
    %c0_i32 = arith.constant 0 : i32
    %c0_i32_0 = arith.constant 0 : i32
    %c0_i32_1 = arith.constant 0 : i32
    return %c0_i32, %c0_i32_0 : i32, i32
  }
  func.func @transform_3(%arg0: i32) -> (i32, i32) {
    %c0_i32 = arith.constant 0 : i32
    %c0_i32_0 = arith.constant 0 : i32
    return %arg0, %c0_i32 : i32, i32
  }
}

module attributes {stable_mosaic.version = 11 : i64} {
  func.func @_matmul_bias_kernel(%arg0: i32, %arg1: memref<8x2304xbf16, #tpu.memory_space<vmem>>, %arg2: memref<2304x112xbf16, #tpu.memory_space<vmem>>, %arg3: memref<1x112xf32, #tpu.memory_space<vmem>>, %arg4: memref<8x112xf32, #tpu.memory_space<vmem>>) attributes {dimension_semantics = [#tpu.dimension_semantics<parallel>], iteration_bounds = array<i64: 1>, scalar_prefetch = 0 : i64, scratch_operands = 0 : i64, tpu.core_type = #tpu.core_type<tc>, window_params = [{transform_indices = @transform_0, window_bounds = array<i64: 8, 2304>}, {pipeline_mode = #tpu.pipeline_mode<synchronous>, transform_indices = @transform_1, window_bounds = array<i64: 2304, 112>}, {pipeline_mode = #tpu.pipeline_mode<synchronous>, transform_indices = @transform_2, window_bounds = array<i64: 1, 112>}, {transform_indices = @transform_3, window_bounds = array<i64: 8, 112>}]} {
    %c0 = arith.constant 0 : index
    %c0_0 = arith.constant 0 : index
    %0 = vector.load %arg1[%c0, %c0_0] : memref<8x2304xbf16, #tpu.memory_space<vmem>>, vector<8x2304xbf16>
    %c0_1 = arith.constant 0 : index
    %c0_2 = arith.constant 0 : index
    %1 = vector.load %arg2[%c0_1, %c0_2] : memref<2304x112xbf16, #tpu.memory_space<vmem>>, vector<2304x112xbf16>
    %cst = arith.constant dense<0.000000e+00> : vector<8x112xf32>
    %2 = tpu.matmul %0, %1, %cst {dimension_numbers = #tpu.dot_dimension_numbers<[1], [0], [0], [1], [0, 0, 1, 1], [], []>} : vector<8x2304xbf16>, vector<2304x112xbf16>, vector<8x112xf32> -> vector<8x112xf32>
    %c0_3 = arith.constant 0 : index
    %c0_4 = arith.constant 0 : index
    %3 = vector.load %arg3[%c0_3, %c0_4] : memref<1x112xf32, #tpu.memory_space<vmem>>, vector<1x112xf32>
    %4 = vector.broadcast %3 : vector<1x112xf32> to vector<8x112xf32>
    %5 = arith.addf %2, %4 : vector<8x112xf32>
    %c0_5 = arith.constant 0 : index
    %c0_6 = arith.constant 0 : index
    %6 = vector.load %arg4[%c0_5, %c0_6] : memref<8x112xf32, #tpu.memory_space<vmem>>, vector<8x112xf32>
    tpu.vector_store %arg4[%c0_5, %c0_6], %5 {strides = array<i32>} : memref<8x112xf32, #tpu.memory_space<vmem>>, vector<8x112xf32>,
    return
  }
  func.func @transform_0(%arg0: i32) -> (i32, i32) {
    %c0_i32 = arith.constant 0 : i32
    %c0_i32_0 = arith.constant 0 : i32
    return %arg0, %c0_i32 : i32, i32
  }
  func.func @transform_1(%arg0: i32) -> (i32, i32) {
    %c0_i32 = arith.constant 0 : i32
    %c0_i32_0 = arith.constant 0 : i32
    %c0_i32_1 = arith.constant 0 : i32
    return %c0_i32, %c0_i32_0 : i32, i32
  }
  func.func @transform_2(%arg0: i32) -> (i32, i32) {
    %c0_i32 = arith.constant 0 : i32
    %c0_i32_0 = arith.constant 0 : i32
    %c0_i32_1 = arith.constant 0 : i32
    return %c0_i32, %c0_i32_0 : i32, i32
  }
  func.func @transform_3(%arg0: i32) -> (i32, i32) {
    %c0_i32 = arith.constant 0 : i32
    %c0_i32_0 = arith.constant 0 : i32
    return %arg0, %c0_i32 : i32, i32
  }
}

module attributes {stable_mosaic.version = 11 : i64} {
  func.func @_adaptive_kernel(%arg0: i32, %arg1: memref<8x25x27xf32, #tpu.memory_space<vmem>>, %arg2: memref<8x4x27xf32, #tpu.memory_space<vmem>>, %arg3: memref<8x1x4xf32, #tpu.memory_space<vmem>>, %arg4: memref<8x25x4xf32, #tpu.memory_space<vmem>>) attributes {dimension_semantics = [#tpu.dimension_semantics<parallel>], iteration_bounds = array<i64: 1>, scalar_prefetch = 0 : i64, scratch_operands = 0 : i64, tpu.core_type = #tpu.core_type<tc>, window_params = [{transform_indices = @transform_0, window_bounds = array<i64: 8, 25, 27>}, {transform_indices = @transform_1, window_bounds = array<i64: 8, 4, 27>}, {transform_indices = @transform_2, window_bounds = array<i64: 8, 1, 4>}, {transform_indices = @transform_3, window_bounds = array<i64: 8, 25, 4>}]} {
    %c0 = arith.constant 0 : index
    %c0_0 = arith.constant 0 : index
    %c0_1 = arith.constant 0 : index
    %0 = vector.load %arg1[%c0, %c0_0, %c0_1] : memref<8x25x27xf32, #tpu.memory_space<vmem>>, vector<8x25x27xf32>
    %c0_2 = arith.constant 0 : index
    %c0_3 = arith.constant 0 : index
    %c0_4 = arith.constant 0 : index
    %1 = vector.load %arg2[%c0_2, %c0_3, %c0_4] : memref<8x4x27xf32, #tpu.memory_space<vmem>>, vector<8x4x27xf32>
    %c0_5 = arith.constant 0 : index
    %c0_6 = arith.constant 0 : index
    %c0_7 = arith.constant 0 : index
    %2 = vector.load %arg3[%c0_5, %c0_6, %c0_7] : memref<8x1x4xf32, #tpu.memory_space<vmem>>, vector<8x1x4xf32>
    %3 = vector.extract_strided_slice %1 {offsets = [0, 0, 0], sizes = [8, 1, 27], strides = [1, 1, 1]} : vector<8x4x27xf32> to vector<8x1x27xf32>
    %4 = vector.broadcast %3 : vector<8x1x27xf32> to vector<8x25x27xf32>
    %5 = arith.mulf %0, %4 : vector<8x25x27xf32>
    %cst = arith.constant dense<0.000000e+00> : vector<8x25xf32>
    %6 = vector.multi_reduction <add>, %5, %cst [2] : vector<8x25x27xf32> to vector<8x25xf32>
    %7 = vector.shape_cast %6 : vector<8x25xf32> to vector<8x25x1xf32>
    %8 = vector.extract_strided_slice %2 {offsets = [0, 0, 0], sizes = [8, 1, 1], strides = [1, 1, 1]} : vector<8x1x4xf32> to vector<8x1x1xf32>
    %9 = vector.broadcast %8 : vector<8x1x1xf32> to vector<8x25x1xf32>
    %10 = arith.addf %7, %9 : vector<8x25x1xf32>
    %11 = vector.extract_strided_slice %1 {offsets = [0, 1, 0], sizes = [8, 1, 27], strides = [1, 1, 1]} : vector<8x4x27xf32> to vector<8x1x27xf32>
    %12 = vector.broadcast %11 : vector<8x1x27xf32> to vector<8x25x27xf32>
    %13 = arith.mulf %0, %12 : vector<8x25x27xf32>
    %cst_8 = arith.constant dense<0.000000e+00> : vector<8x25xf32>
    %14 = vector.multi_reduction <add>, %13, %cst_8 [2] : vector<8x25x27xf32> to vector<8x25xf32>
    %15 = vector.shape_cast %14 : vector<8x25xf32> to vector<8x25x1xf32>
    %16 = vector.extract_strided_slice %2 {offsets = [0, 0, 1], sizes = [8, 1, 1], strides = [1, 1, 1]} : vector<8x1x4xf32> to vector<8x1x1xf32>
    %17 = vector.broadcast %16 : vector<8x1x1xf32> to vector<8x25x1xf32>
    %18 = arith.addf %15, %17 : vector<8x25x1xf32>
    %19 = vector.extract_strided_slice %1 {offsets = [0, 2, 0], sizes = [8, 1, 27], strides = [1, 1, 1]} : vector<8x4x27xf32> to vector<8x1x27xf32>
    %20 = vector.broadcast %19 : vector<8x1x27xf32> to vector<8x25x27xf32>
    %21 = arith.mulf %0, %20 : vector<8x25x27xf32>
    %cst_9 = arith.constant dense<0.000000e+00> : vector<8x25xf32>
    %22 = vector.multi_reduction <add>, %21, %cst_9 [2] : vector<8x25x27xf32> to vector<8x25xf32>
    %23 = vector.shape_cast %22 : vector<8x25xf32> to vector<8x25x1xf32>
    %24 = vector.extract_strided_slice %2 {offsets = [0, 0, 2], sizes = [8, 1, 1], strides = [1, 1, 1]} : vector<8x1x4xf32> to vector<8x1x1xf32>
    %25 = vector.broadcast %24 : vector<8x1x1xf32> to vector<8x25x1xf32>
    %26 = arith.addf %23, %25 : vector<8x25x1xf32>
    %27 = vector.extract_strided_slice %1 {offsets = [0, 3, 0], sizes = [8, 1, 27], strides = [1, 1, 1]} : vector<8x4x27xf32> to vector<8x1x27xf32>
    %28 = vector.broadcast %27 : vector<8x1x27xf32> to vector<8x25x27xf32>
    %29 = arith.mulf %0, %28 : vector<8x25x27xf32>
    %cst_10 = arith.constant dense<0.000000e+00> : vector<8x25xf32>
    %30 = vector.multi_reduction <add>, %29, %cst_10 [2] : vector<8x25x27xf32> to vector<8x25xf32>
    %31 = vector.shape_cast %30 : vector<8x25xf32> to vector<8x25x1xf32>
    %32 = vector.extract_strided_slice %2 {offsets = [0, 0, 3], sizes = [8, 1, 1], strides = [1, 1, 1]} : vector<8x1x4xf32> to vector<8x1x1xf32>
    %33 = vector.broadcast %32 : vector<8x1x1xf32> to vector<8x25x1xf32>
    %34 = arith.addf %31, %33 : vector<8x25x1xf32>
    %35 = tpu.concatenate %10, %18, %26, %34 in 2 : vector<8x25x1xf32>, vector<8x25x1xf32>, vector<8x25x1xf32>, vector<8x25x1xf32> -> vector<8x25x4xf32>
    %cst_11 = arith.constant 0.000000e+00 : f32
    %36 = vector.broadcast %cst_11 : f32 to vector<8x25x4xf32>
    %37 = arith.maximumf %35, %36 : vector<8x25x4xf32>
    %c0_12 = arith.constant 0 : index
    %c0_13 = arith.constant 0 : index
    %c0_14 = arith.constant 0 : index
    %38 = vector.load %arg4[%c0_12, %c0_13, %c0_14] : memref<8x25x4xf32, #tpu.memory_space<vmem>>, vector<8x25x4xf32>
    tpu.vector_store %arg4[%c0_12, %c0_13, %c0_14], %37 {strides = array<i32>} : memref<8x25x4xf32, #tpu.memory_space<vmem>>, vector<8x25x4xf32>,
    return
  }
  func.func @transform_0(%arg0: i32) -> (i32, i32, i32) {
    %c0_i32 = arith.constant 0 : i32
    %c0_i32_0 = arith.constant 0 : i32
    %c0_i32_1 = arith.constant 0 : i32
    return %arg0, %c0_i32, %c0_i32_0 : i32, i32, i32
  }
  func.func @transform_1(%arg0: i32) -> (i32, i32, i32) {
    %c0_i32 = arith.constant 0 : i32
    %c0_i32_0 = arith.constant 0 : i32
    %c0_i32_1 = arith.constant 0 : i32
    return %arg0, %c0_i32, %c0_i32_0 : i32, i32, i32
  }
  func.func @transform_2(%arg0: i32) -> (i32, i32, i32) {
    %c0_i32 = arith.constant 0 : i32
    %c0_i32_0 = arith.constant 0 : i32
    %c0_i32_1 = arith.constant 0 : i32
    return %arg0, %c0_i32, %c0_i32_0 : i32, i32, i32
  }
  func.func @transform_3(%arg0: i32) -> (i32, i32, i32) {
    %c0_i32 = arith.constant 0 : i32
    %c0_i32_0 = arith.constant 0 : i32
    %c0_i32_1 = arith.constant 0 : i32
    return %arg0, %c0_i32, %c0_i32_0 : i32, i32, i32
  }
}

module attributes {stable_mosaic.version = 11 : i64} {
  func.func @_matmul_bias_kernel(%arg0: i32, %arg1: memref<200x100xbf16, #tpu.memory_space<vmem>>, %arg2: memref<100x128xbf16, #tpu.memory_space<vmem>>, %arg3: memref<1x128xf32, #tpu.memory_space<vmem>>, %arg4: memref<200x128xf32, #tpu.memory_space<vmem>>) attributes {dimension_semantics = [#tpu.dimension_semantics<parallel>], iteration_bounds = array<i64: 1>, scalar_prefetch = 0 : i64, scratch_operands = 0 : i64, tpu.core_type = #tpu.core_type<tc>, window_params = [{transform_indices = @transform_0, window_bounds = array<i64: 200, 100>}, {pipeline_mode = #tpu.pipeline_mode<synchronous>, transform_indices = @transform_1, window_bounds = array<i64: 100, 128>}, {pipeline_mode = #tpu.pipeline_mode<synchronous>, transform_indices = @transform_2, window_bounds = array<i64: 1, 128>}, {transform_indices = @transform_3, window_bounds = array<i64: 200, 128>}]} {
    %c0 = arith.constant 0 : index
    %c0_0 = arith.constant 0 : index
    %0 = vector.load %arg1[%c0, %c0_0] : memref<200x100xbf16, #tpu.memory_space<vmem>>, vector<200x100xbf16>
    %c0_1 = arith.constant 0 : index
    %c0_2 = arith.constant 0 : index
    %1 = vector.load %arg2[%c0_1, %c0_2] : memref<100x128xbf16, #tpu.memory_space<vmem>>, vector<100x128xbf16>
    %cst = arith.constant dense<0.000000e+00> : vector<200x128xf32>
    %2 = tpu.matmul %0, %1, %cst {dimension_numbers = #tpu.dot_dimension_numbers<[1], [0], [0], [1], [0, 0, 1, 1], [], []>} : vector<200x100xbf16>, vector<100x128xbf16>, vector<200x128xf32> -> vector<200x128xf32>
    %c0_3 = arith.constant 0 : index
    %c0_4 = arith.constant 0 : index
    %3 = vector.load %arg3[%c0_3, %c0_4] : memref<1x128xf32, #tpu.memory_space<vmem>>, vector<1x128xf32>
    %4 = vector.broadcast %3 : vector<1x128xf32> to vector<200x128xf32>
    %5 = arith.addf %2, %4 : vector<200x128xf32>
    %cst_5 = arith.constant 0.000000e+00 : f32
    %6 = vector.broadcast %cst_5 : f32 to vector<200x128xf32>
    %7 = arith.maximumf %5, %6 : vector<200x128xf32>
    %c0_6 = arith.constant 0 : index
    %c0_7 = arith.constant 0 : index
    %8 = vector.load %arg4[%c0_6, %c0_7] : memref<200x128xf32, #tpu.memory_space<vmem>>, vector<200x128xf32>
    tpu.vector_store %arg4[%c0_6, %c0_7], %7 {strides = array<i32>} : memref<200x128xf32, #tpu.memory_space<vmem>>, vector<200x128xf32>,
    return
  }
  func.func @transform_0(%arg0: i32) -> (i32, i32) {
    %c0_i32 = arith.constant 0 : i32
    %c0_i32_0 = arith.constant 0 : i32
    return %arg0, %c0_i32 : i32, i32
  }
  func.func @transform_1(%arg0: i32) -> (i32, i32) {
    %c0_i32 = arith.constant 0 : i32
    %c0_i32_0 = arith.constant 0 : i32
    %c0_i32_1 = arith.constant 0 : i32
    return %c0_i32, %c0_i32_0 : i32, i32
  }
  func.func @transform_2(%arg0: i32) -> (i32, i32) {
    %c0_i32 = arith.constant 0 : i32
    %c0_i32_0 = arith.constant 0 : i32
    %c0_i32_1 = arith.constant 0 : i32
    return %c0_i32, %c0_i32_0 : i32, i32
  }
  func.func @transform_3(%arg0: i32) -> (i32, i32) {
    %c0_i32 = arith.constant 0 : i32
    %c0_i32_0 = arith.constant 0 : i32
    return %arg0, %c0_i32 : i32, i32
  }
}

module attributes {stable_mosaic.version = 11 : i64} {
  func.func @_matmul_bias_kernel(%arg0: i32, %arg1: memref<200x1152xbf16, #tpu.memory_space<vmem>>, %arg2: memref<1152x32xbf16, #tpu.memory_space<vmem>>, %arg3: memref<1x32xf32, #tpu.memory_space<vmem>>, %arg4: memref<200x32xf32, #tpu.memory_space<vmem>>) attributes {dimension_semantics = [#tpu.dimension_semantics<parallel>], iteration_bounds = array<i64: 1>, scalar_prefetch = 0 : i64, scratch_operands = 0 : i64, tpu.core_type = #tpu.core_type<tc>, window_params = [{transform_indices = @transform_0, window_bounds = array<i64: 200, 1152>}, {pipeline_mode = #tpu.pipeline_mode<synchronous>, transform_indices = @transform_1, window_bounds = array<i64: 1152, 32>}, {pipeline_mode = #tpu.pipeline_mode<synchronous>, transform_indices = @transform_2, window_bounds = array<i64: 1, 32>}, {transform_indices = @transform_3, window_bounds = array<i64: 200, 32>}]} {
    %c0 = arith.constant 0 : index
    %c0_0 = arith.constant 0 : index
    %0 = vector.load %arg1[%c0, %c0_0] : memref<200x1152xbf16, #tpu.memory_space<vmem>>, vector<200x1152xbf16>
    %c0_1 = arith.constant 0 : index
    %c0_2 = arith.constant 0 : index
    %1 = vector.load %arg2[%c0_1, %c0_2] : memref<1152x32xbf16, #tpu.memory_space<vmem>>, vector<1152x32xbf16>
    %cst = arith.constant dense<0.000000e+00> : vector<200x32xf32>
    %2 = tpu.matmul %0, %1, %cst {dimension_numbers = #tpu.dot_dimension_numbers<[1], [0], [0], [1], [0, 0, 1, 1], [], []>} : vector<200x1152xbf16>, vector<1152x32xbf16>, vector<200x32xf32> -> vector<200x32xf32>
    %c0_3 = arith.constant 0 : index
    %c0_4 = arith.constant 0 : index
    %3 = vector.load %arg3[%c0_3, %c0_4] : memref<1x32xf32, #tpu.memory_space<vmem>>, vector<1x32xf32>
    %4 = vector.broadcast %3 : vector<1x32xf32> to vector<200x32xf32>
    %5 = arith.addf %2, %4 : vector<200x32xf32>
    %cst_5 = arith.constant 0.000000e+00 : f32
    %6 = vector.broadcast %cst_5 : f32 to vector<200x32xf32>
    %7 = arith.maximumf %5, %6 : vector<200x32xf32>
    %c0_6 = arith.constant 0 : index
    %c0_7 = arith.constant 0 : index
    %8 = vector.load %arg4[%c0_6, %c0_7] : memref<200x32xf32, #tpu.memory_space<vmem>>, vector<200x32xf32>
    tpu.vector_store %arg4[%c0_6, %c0_7], %7 {strides = array<i32>} : memref<200x32xf32, #tpu.memory_space<vmem>>, vector<200x32xf32>,
    return
  }
  func.func @transform_0(%arg0: i32) -> (i32, i32) {
    %c0_i32 = arith.constant 0 : i32
    %c0_i32_0 = arith.constant 0 : i32
    return %arg0, %c0_i32 : i32, i32
  }
  func.func @transform_1(%arg0: i32) -> (i32, i32) {
    %c0_i32 = arith.constant 0 : i32
    %c0_i32_0 = arith.constant 0 : i32
    %c0_i32_1 = arith.constant 0 : i32
    return %c0_i32, %c0_i32_0 : i32, i32
  }
  func.func @transform_2(%arg0: i32) -> (i32, i32) {
    %c0_i32 = arith.constant 0 : i32
    %c0_i32_0 = arith.constant 0 : i32
    %c0_i32_1 = arith.constant 0 : i32
    return %c0_i32, %c0_i32_0 : i32, i32
  }
  func.func @transform_3(%arg0: i32) -> (i32, i32) {
    %c0_i32 = arith.constant 0 : i32
    %c0_i32_0 = arith.constant 0 : i32
    return %arg0, %c0_i32 : i32, i32
  }
}

module attributes {stable_mosaic.version = 11 : i64} {
  func.func @_matmul_bias_kernel(%arg0: i32, %arg1: memref<200x288xbf16, #tpu.memory_space<vmem>>, %arg2: memref<288x12xbf16, #tpu.memory_space<vmem>>, %arg3: memref<1x12xf32, #tpu.memory_space<vmem>>, %arg4: memref<200x12xf32, #tpu.memory_space<vmem>>) attributes {dimension_semantics = [#tpu.dimension_semantics<parallel>], iteration_bounds = array<i64: 1>, scalar_prefetch = 0 : i64, scratch_operands = 0 : i64, tpu.core_type = #tpu.core_type<tc>, window_params = [{transform_indices = @transform_0, window_bounds = array<i64: 200, 288>}, {pipeline_mode = #tpu.pipeline_mode<synchronous>, transform_indices = @transform_1, window_bounds = array<i64: 288, 12>}, {pipeline_mode = #tpu.pipeline_mode<synchronous>, transform_indices = @transform_2, window_bounds = array<i64: 1, 12>}, {transform_indices = @transform_3, window_bounds = array<i64: 200, 12>}]} {
    %c0 = arith.constant 0 : index
    %c0_0 = arith.constant 0 : index
    %0 = vector.load %arg1[%c0, %c0_0] : memref<200x288xbf16, #tpu.memory_space<vmem>>, vector<200x288xbf16>
    %c0_1 = arith.constant 0 : index
    %c0_2 = arith.constant 0 : index
    %1 = vector.load %arg2[%c0_1, %c0_2] : memref<288x12xbf16, #tpu.memory_space<vmem>>, vector<288x12xbf16>
    %cst = arith.constant dense<0.000000e+00> : vector<200x12xf32>
    %2 = tpu.matmul %0, %1, %cst {dimension_numbers = #tpu.dot_dimension_numbers<[1], [0], [0], [1], [0, 0, 1, 1], [], []>} : vector<200x288xbf16>, vector<288x12xbf16>, vector<200x12xf32> -> vector<200x12xf32>
    %c0_3 = arith.constant 0 : index
    %c0_4 = arith.constant 0 : index
    %3 = vector.load %arg3[%c0_3, %c0_4] : memref<1x12xf32, #tpu.memory_space<vmem>>, vector<1x12xf32>
    %4 = vector.broadcast %3 : vector<1x12xf32> to vector<200x12xf32>
    %5 = arith.addf %2, %4 : vector<200x12xf32>
    %c0_5 = arith.constant 0 : index
    %c0_6 = arith.constant 0 : index
    %6 = vector.load %arg4[%c0_5, %c0_6] : memref<200x12xf32, #tpu.memory_space<vmem>>, vector<200x12xf32>
    tpu.vector_store %arg4[%c0_5, %c0_6], %5 {strides = array<i32>} : memref<200x12xf32, #tpu.memory_space<vmem>>, vector<200x12xf32>,
    return
  }
  func.func @transform_0(%arg0: i32) -> (i32, i32) {
    %c0_i32 = arith.constant 0 : i32
    %c0_i32_0 = arith.constant 0 : i32
    return %arg0, %c0_i32 : i32, i32
  }
  func.func @transform_1(%arg0: i32) -> (i32, i32) {
    %c0_i32 = arith.constant 0 : i32
    %c0_i32_0 = arith.constant 0 : i32
    %c0_i32_1 = arith.constant 0 : i32
    return %c0_i32, %c0_i32_0 : i32, i32
  }
  func.func @transform_2(%arg0: i32) -> (i32, i32) {
    %c0_i32 = arith.constant 0 : i32
    %c0_i32_0 = arith.constant 0 : i32
    %c0_i32_1 = arith.constant 0 : i32
    return %c0_i32, %c0_i32_0 : i32, i32
  }
  func.func @transform_3(%arg0: i32) -> (i32, i32) {
    %c0_i32 = arith.constant 0 : i32
    %c0_i32_0 = arith.constant 0 : i32
    return %arg0, %c0_i32 : i32, i32
  }
}

</mosaic_0001>

<llo_original>
// kernel: sr_model_forward.6
$region0: #{sr_model_forward.6}
  #allocation0 [shape = 'u32[]', space=smem, size = 0x4, offset = 0x4, fixed_abs, tag = 'smem constant byte address 0x4 - core index']
  #allocation1 [shape = 'u32[144,128]{1,0:T(1,128)}', space=vmem, size = 0x12000, scoped, tag = 'internal scratch']
  %s0 = inlined_call_operand.vmem [shape: bf16[72,27], index: 0, kind: input, shape index: {}]
  %s1 = inlined_call_operand.vmem [shape: bf16[27,256], index: 1, kind: input, shape index: {}]
  %s2 = inlined_call_operand.vmem [shape: f32[1,256], index: 2, kind: input, shape index: {}]
  %s3 = inlined_call_operand.vmem [shape: f32[72,256], index: 3, kind: output, shape index: {}]
  %s4 = sld [smem:[#allocation0]]
  $region22: #{sr_model_forward.6} parent=0
    _
  %s6 = ssub.s32 1, %s4
  %s7 = scalar_select 0, %s6, %s4
  // Predicated region
  $region2: #{sr_model_forward.6} parent=0 // pred_check
    _
  $region3: #{sr_model_forward.6} parent=0 // pred_check_branch
    %9 = sbr.rel (0) target = $region5
  $region4: #{sr_model_forward.6} parent=0 // pred_region
    _
  $region5: #{sr_model_forward.6} parent=0 // pred_fallthru
    _
  // Predicated region
  $region6: #{sr_model_forward.6} parent=0 // pred_check
    _
  $region7: #{sr_model_forward.6} parent=0 // pred_check_branch
    %11 = sbr.rel (0) target = $region9
  $region8: #{sr_model_forward.6} parent=0 // pred_region
    _
  $region9: #{sr_model_forward.6} parent=0 // pred_fallthru
    _
  // Predicated region
  $region10: #{sr_model_forward.6} parent=0 // pred_check
    _
  $region11: #{sr_model_forward.6} parent=0 // pred_check_branch
    %13 = sbr.rel (0) target = $region13
  $region12: #{sr_model_forward.6} parent=0 // pred_region
    _
  $region13: #{sr_model_forward.6} parent=0 // pred_fallthru
    _
  %v15 = vld [vmem:[%s0] sm:$0xf]
  %v16 = vld [vmem:[%s0 + $0x4] sm:$0xf]
  %v17 = vld [vmem:[%s0 + $0x8] sm:$0xf]
  %v18 = vld [vmem:[%s0 + $0xc] sm:$0xf]
  %v19 = vld [vmem:[%s0 + $0x10] sm:$0xf]
  %v20 = vld [vmem:[%s0 + $0x14] sm:$0xf]
  %v21 = vld [vmem:[%s0 + $0x18] sm:$0xf]
  %v22 = vld [vmem:[%s0 + $0x1c] sm:$0xf]
  %v23 = vld [vmem:[%s0 + $0x20] sm:$0xf]
  %v24 = vld [vmem:[%s1] sm:$0xff]
  %v25 = vld [vmem:[%s1 + $0x8] sm:$0xff]
  %v26 = vld [vmem:[%s1 + $0x10] sm:$0xff]
  %v27 = vld [vmem:[%s1 + $0x18] sm:$0x33]
  %v28 = vld [vmem:[%s2] sm:$0x3]
  %v30 = vlaneseq
  %v31 = vshrl.u32 %v30, 7
  %v32 = vsub.s32 0, %v31
  %v33 = vrot.slane %v28, %v32
  %v34 = vlaneseq
  %v35 = vshrl.u32 %v34, 7
  %v36 = vsub.s32 1, %v35
  %v37 = vrot.slane %v28, %v36
  %v49 = vunpack.c.l.b16 %v15
  %v50 = vunpack.c.l.b16 %v16
  %v51 = vunpack.c.l.b16 %v17
  %v52 = vunpack.c.l.b16 %v18
  %v53 = vunpack.c.l.b16 %v19
  %v54 = vunpack.c.l.b16 %v20
  %v55 = vunpack.c.l.b16 %v21
  %v56 = vunpack.c.l.b16 %v22
  %v57 = vunpack.c.l.b16 %v23
  %v58 = vpack.c.b16 %v50, %v49
  %v59 = vpack.c.b16 %v52, %v51
  %v60 = vpack.c.b16 %v54, %v53
  %v61 = vpack.c.b16 %v56, %v55
  %v62 = vpack.c.b16 %v57, %v57
  %v67 = vunpack.c.l.b16 %v24
  %v68 = vunpack.c.h.b16 %v24
  %v69 = vunpack.c.l.b16 %v25
  %v70 = vunpack.c.h.b16 %v25
  %v71 = vunpack.c.l.b16 %v26
  %v72 = vunpack.c.h.b16 %v26
  %v73 = vunpack.c.l.b16 %v27
  %v74 = vunpack.c.h.b16 %v27
  %v75 = vpack.c.b16 %v69, %v67
  %v76 = vpack.c.b16 %v70, %v68
  %v77 = vpack.c.b16 %v73, %v71
  %v78 = vpack.c.b16 %v74, %v72
  %vm81 = vcmask 220160
  %v83 = vsel %vm81, %v58, 0
  %v86 = vsel %vm81, %v59, 0
  %v89 = vsel %vm81, %v60, 0
  %v92 = vsel %vm81, %v61, 0
  %v95 = vsel %vm81, %v62, 0
  %vm97 = vcmask 1044480
  %vm98 = vcmask 1045504
  %v99 = vsel %vm97, 4294967295, 65535
  %v100 = vsel %vm98, %v99, 0
  %v102 = vand.u32 %v77, %v100
  %v105 = vand.u32 %v78, %v100
  %107 = vmatprep.subr.bf16.mxu0 0
  %108 = vmatpush1.bf16.msra.mxu0 0
  %109 = vmatprep.subr.bf16.mxu0 0
  %110 = vmatpush1.bf16.msra.mxu0 0
  %111 = vmatprep.subr.bf16.mxu0 0
  %112 = vmatpush1.bf16.msra.mxu0 0
  %113 = vmatprep.subr.bf16.mxu0 0
  %114 = vmatpush1.bf16.msra.mxu0 0
  %115 = vmatprep.subr.bf16.mxu0 0
  %116 = vmatpush1.bf16.msra.mxu0 0
  %117 = vmatprep.subr.bf16.mxu0 0
  %118 = vmatpush1.bf16.msra.mxu0 0
  %119 = vmatprep.subr.bf16.mxu0 %v105
  %120 = vmatpush1.bf16.msra.mxu0 %v102
  %121 = vmatprep.subr.bf16.mxu0 %v76
  %122 = vmatpush1.bf16.msra.mxu0 %v75
  %123 = vmatprep.subr.bf16.mxu0 0
  %124 = vmatpush2.bf16.msra.mxu0 0
  %125 = vmatprep.subr.bf16.mxu0 0
  %126 = vmatpush2.bf16.msra.mxu0 0
  %127 = vmatprep.subr.bf16.mxu0 0
  %128 = vmatpush2.bf16.msra.mxu0 0
  %129 = vmatprep.subr.bf16.mxu0 0
  %130 = vmatpush2.bf16.msra.mxu0 0
  %131 = vmatprep.subr.bf16.mxu0 0
  %132 = vmatpush2.bf16.msra.mxu0 0
  %133 = vmatprep.subr.bf16.mxu0 0
  %134 = vmatpush2.bf16.msra.mxu0 0
  %135 = vmatprep.subr.bf16.mxu0 0
  %136 = vmatpush2.bf16.msra.mxu0 0
  %137 = vmatprep.subr.bf16.mxu0 0
  %138 = vmatpush2.bf16.msra.mxu0 0
  %139 = vmatprep.mubr.bf16.mxu0 0
  %140 = vmatmul.mubr.bf16.gmra.mxu0 %v83
  %v141 = vpop.f32.mrf.mxu0
  %v142 = vadd.f32 %v33, %v141
  %v143 = vpop.f32.mrf.mxu0
  %v144 = vadd.f32 %v37, %v143
  %v145 = vpop.f32.mrf.mxu0
  %v146 = vadd.f32 %v33, %v145
  %v147 = vpop.f32.mrf.mxu0
  %v148 = vadd.f32 %v37, %v147
  %149 = vmatprep.mubr.bf16.mxu0 0
  %150 = vmatmul.mubr.bf16.gmra.mxu0 %v86
  %v151 = vpop.f32.mrf.mxu0
  %v152 = vadd.f32 %v33, %v151
  %v153 = vpop.f32.mrf.mxu0
  %v154 = vadd.f32 %v37, %v153
  %v155 = vpop.f32.mrf.mxu0
  %v156 = vadd.f32 %v33, %v155
  %v157 = vpop.f32.mrf.mxu0
  %v158 = vadd.f32 %v37, %v157
  %159 = vmatprep.mubr.bf16.mxu0 0
  %160 = vmatmul.mubr.bf16.gmra.mxu0 %v89
  %v161 = vpop.f32.mrf.mxu0
  %v162 = vadd.f32 %v33, %v161
  %v163 = vpop.f32.mrf.mxu0
  %v164 = vadd.f32 %v37, %v163
  %v165 = vpop.f32.mrf.mxu0
  %v166 = vadd.f32 %v33, %v165
  %v167 = vpop.f32.mrf.mxu0
  %v168 = vadd.f32 %v37, %v167
  %169 = vmatprep.mubr.bf16.mxu0 0
  %170 = vmatmul.mubr.bf16.gmra.mxu0 %v92
  %v171 = vpop.f32.mrf.mxu0
  %v172 = vadd.f32 %v33, %v171
  %v173 = vpop.f32.mrf.mxu0
  %v174 = vadd.f32 %v37, %v173
  %v175 = vpop.f32.mrf.mxu0
  %v176 = vadd.f32 %v33, %v175
  %v177 = vpop.f32.mrf.mxu0
  %v178 = vadd.f32 %v37, %v177
  %179 = vmatprep.mubr.bf16.mxu0 0
  %180 = vmatmul.mubr.bf16.gmra.mxu0 %v95
  %v181 = vpop.f32.mrf.mxu0
  %v182 = vadd.f32 %v33, %v181
  %v183 = vpop.f32.mrf.mxu0
  %v184 = vadd.f32 %v37, %v183
  %v185 = vpop.f32.mrf.mxu0
  %v186 = vpop.f32.mrf.mxu0
  %187 = vdwg.mxu0
  %v188 = vmax.f32 %v142, 0.0
  %v189 = vmax.f32 %v144, 0.0
  %v190 = vmax.f32 %v146, 0.0
  %v191 = vmax.f32 %v148, 0.0
  %v192 = vmax.f32 %v152, 0.0
  %v193 = vmax.f32 %v154, 0.0
  %v194 = vmax.f32 %v156, 0.0
  %v195 = vmax.f32 %v158, 0.0
  %v196 = vmax.f32 %v162, 0.0
  %v197 = vmax.f32 %v164, 0.0
  %v198 = vmax.f32 %v166, 0.0
  %v199 = vmax.f32 %v168, 0.0
  %v200 = vmax.f32 %v172, 0.0
  %v201 = vmax.f32 %v174, 0.0
  %v202 = vmax.f32 %v176, 0.0
  %v203 = vmax.f32 %v178, 0.0
  %v204 = vmax.f32 %v182, 0.0
  %v205 = vmax.f32 %v184, 0.0
  %206 = vst [vmem:[%s3] sm:$0xff] %v188
  %207 = vst [vmem:[%s3 + $0x8] sm:$0xff] %v189
  %208 = vst [vmem:[%s3 + $0x10] sm:$0xff] %v190
  %209 = vst [vmem:[%s3 + $0x18] sm:$0xff] %v191
  %210 = vst [vmem:[%s3 + $0x20] sm:$0xff] %v192
  %211 = vst [vmem:[%s3 + $0x28] sm:$0xff] %v193
  %212 = vst [vmem:[%s3 + $0x30] sm:$0xff] %v194
  %213 = vst [vmem:[%s3 + $0x38] sm:$0xff] %v195
  %214 = vst [vmem:[%s3 + $0x40] sm:$0xff] %v196
  %215 = vst [vmem:[%s3 + $0x48] sm:$0xff] %v197
  %216 = vst [vmem:[%s3 + $0x50] sm:$0xff] %v198
  %217 = vst [vmem:[%s3 + $0x58] sm:$0xff] %v199
  %218 = vst [vmem:[%s3 + $0x60] sm:$0xff] %v200
  %219 = vst [vmem:[%s3 + $0x68] sm:$0xff] %v201
  %220 = vst [vmem:[%s3 + $0x70] sm:$0xff] %v202
  %221 = vst [vmem:[%s3 + $0x78] sm:$0xff] %v203
  %222 = vst [vmem:[%s3 + $0x80] sm:$0xff] %v204
  %223 = vst [vmem:[%s3 + $0x88] sm:$0xff] %v205
  // Predicated region
  $region14: #{sr_model_forward.6} parent=0 // pred_check
    _
  $region15: #{sr_model_forward.6} parent=0 // pred_check_branch
    %225 = sbr.rel (0) target = $region17
  $region16: #{sr_model_forward.6} parent=0 // pred_region
    _
  $region17: #{sr_model_forward.6} parent=0 // pred_fallthru
    _
  // Predicated region
  $region18: #{sr_model_forward.6} parent=0 // pred_check
    _
  $region19: #{sr_model_forward.6} parent=0 // pred_check_branch
    %227 = sbr.rel (0) target = $region21
  $region20: #{sr_model_forward.6} parent=0 // pred_region
    _
  $region21: #{sr_model_forward.6} parent=0 // pred_fallthru
    _

// kernel: sr_model_forward.7
$region0: #{sr_model_forward.7}
  #allocation0 [shape = 'u32[]', space=smem, size = 0x4, offset = 0x4, fixed_abs, tag = 'smem constant byte address 0x4 - core index']
  #allocation1 [shape = 'u32[144,128]{1,0:T(1,128)}', space=vmem, size = 0x12000, scoped, tag = 'internal scratch']
  %s0 = inlined_call_operand.vmem [shape: bf16[8,2304], index: 0, kind: input, shape index: {}]
  %s1 = inlined_call_operand.vmem [shape: bf16[2304,112], index: 1, kind: input, shape index: {}]
  %s2 = inlined_call_operand.vmem [shape: f32[1,112], index: 2, kind: input, shape index: {}]
  %s3 = inlined_call_operand.vmem [shape: f32[8,112], index: 3, kind: output, shape index: {}]
  %s4 = sld [smem:[#allocation0]]
  $region22: #{sr_model_forward.7} parent=0
    _
  %s6 = ssub.s32 1, %s4
  %s7 = scalar_select 0, %s6, %s4
  // Predicated region
  $region2: #{sr_model_forward.7} parent=0 // pred_check
    _
  $region3: #{sr_model_forward.7} parent=0 // pred_check_branch
    %9 = sbr.rel (0) target = $region5
  $region4: #{sr_model_forward.7} parent=0 // pred_region
    _
  $region5: #{sr_model_forward.7} parent=0 // pred_fallthru
    _
  // Predicated region
  $region6: #{sr_model_forward.7} parent=0 // pred_check
    _
  $region7: #{sr_model_forward.7} parent=0 // pred_check_branch
    %11 = sbr.rel (0) target = $region9
  $region8: #{sr_model_forward.7} parent=0 // pred_region
    _
  $region9: #{sr_model_forward.7} parent=0 // pred_fallthru
    _
  // Predicated region
  $region10: #{sr_model_forward.7} parent=0 // pred_check
    _
  $region11: #{sr_model_forward.7} parent=0 // pred_check_branch
    %13 = sbr.rel (0) target = $region13
  $region12: #{sr_model_forward.7} parent=0 // pred_region
    _
  $region13: #{sr_model_forward.7} parent=0 // pred_fallthru
    _
  %v15 = vld [vmem:[%s0] sm:$0xff]
  %v16 = vld [vmem:[%s0 + $0x8] sm:$0xff]
  %v17 = vld [vmem:[%s0 + $0x10] sm:$0xff]
  %v18 = vld [vmem:[%s0 + $0x18] sm:$0xff]
  %v19 = vld [vmem:[%s0 + $0x20] sm:$0xff]
  %v20 = vld [vmem:[%s0 + $0x28] sm:$0xff]
  %v21 = vld [vmem:[%s0 + $0x30] sm:$0xff]
  %v22 = vld [vmem:[%s0 + $0x38] sm:$0xff]
  %v23 = vld [vmem:[%s0 + $0x40] sm:$0xff]
  %v24 = vld [vmem:[%s1] sm:$0xf]
  %v25 = vld [vmem:[%s1 + $0x4] sm:$0xf]
  %v26 = vld [vmem:[%s1 + $0x8] sm:$0xf]
  %v27 = vld [vmem:[%s1 + $0xc] sm:$0xf]
  %v28 = vld [vmem:[%s1 + $0x10] sm:$0xf]
  %v29 = vld [vmem:[%s1 + $0x14] sm:$0xf]
  %v30 = vld [vmem:[%s1 + $0x18] sm:$0xf]
  %v31 = vld [vmem:[%s1 + $0x1c] sm:$0xf]
  %v32 = vld [vmem:[%s1 + $0x20] sm:$0xf]
  %v33 = vld [vmem:[%s1 + $0x24] sm:$0xf]
  %v34 = vld [vmem:[%s1 + $0x28] sm:$0xf]
  %v35 = vld [vmem:[%s1 + $0x2c] sm:$0xf]
  %v36 = vld [vmem:[%s1 + $0x30] sm:$0xf]
  %v37 = vld [vmem:[%s1 + $0x34] sm:$0xf]
  %v38 = vld [vmem:[%s1 + $0x38] sm:$0xf]
  %v39 = vld [vmem:[%s1 + $0x3c] sm:$0xf]
  %v40 = vld [vmem:[%s1 + $0x40] sm:$0xf]
  %v41 = vld [vmem:[%s1 + $0x44] sm:$0xf]
  %v42 = vld [vmem:[%s1 + $0x48] sm:$0xf]
  %v43 = vld [vmem:[%s1 + $0x4c] sm:$0xf]
  %v44 = vld [vmem:[%s1 + $0x50] sm:$0xf]
  %v45 = vld [vmem:[%s1 + $0x54] sm:$0xf]
  %v46 = vld [vmem:[%s1 + $0x58] sm:$0xf]
  %v47 = vld [vmem:[%s1 + $0x5c] sm:$0xf]
  %v48 = vld [vmem:[%s1 + $0x60] sm:$0xf]
  %v49 = vld [vmem:[%s1 + $0x64] sm:$0xf]
  %v50 = vld [vmem:[%s1 + $0x68] sm:$0xf]
  %v51 = vld [vmem:[%s1 + $0x6c] sm:$0xf]
  %v52 = vld [vmem:[%s1 + $0x70] sm:$0xf]
  %v53 = vld [vmem:[%s1 + $0x74] sm:$0xf]
  %v54 = vld [vmem:[%s1 + $0x78] sm:$0xf]
  %v55 = vld [vmem:[%s1 + $0x7c] sm:$0xf]
  %v56 = vld [vmem:[%s1 + $0x80] sm:$0xf]
  %v57 = vld [vmem:[%s1 + $0x84] sm:$0xf]
  %v58 = vld [vmem:[%s1 + $0x88] sm:$0xf]
  %v59 = vld [vmem:[%s1 + $0x8c] sm:$0xf]
  %v60 = vld [vmem:[%s1 + $0x90] sm:$0xf]
  %v61 = vld [vmem:[%s1 + $0x94] sm:$0xf]
  %v62 = vld [vmem:[%s1 + $0x98] sm:$0xf]
  %v63 = vld [vmem:[%s1 + $0x9c] sm:$0xf]
  %v64 = vld [vmem:[%s1 + $0xa0] sm:$0xf]
  %v65 = vld [vmem:[%s1 + $0xa4] sm:$0xf]
  %v66 = vld [vmem:[%s1 + $0xa8] sm:$0xf]
  %v67 = vld [vmem:[%s1 + $0xac] sm:$0xf]
  %v68 = vld [vmem:[%s1 + $0xb0] sm:$0xf]
  %v69 = vld [vmem:[%s1 + $0xb4] sm:$0xf]
  %v70 = vld [vmem:[%s1 + $0xb8] sm:$0xf]
  %v71 = vld [vmem:[%s1 + $0xbc] sm:$0xf]
  %v72 = vld [vmem:[%s1 + $0xc0] sm:$0xf]
  %v73 = vld [vmem:[%s1 + $0xc4] sm:$0xf]
  %v74 = vld [vmem:[%s1 + $0xc8] sm:$0xf]
  %v75 = vld [vmem:[%s1 + $0xcc] sm:$0xf]
  %v76 = vld [vmem:[%s1 + $0xd0] sm:$0xf]
  %v77 = vld [vmem:[%s1 + $0xd4] sm:$0xf]
  %v78 = vld [vmem:[%s1 + $0xd8] sm:$0xf]
  %v79 = vld [vmem:[%s1 + $0xdc] sm:$0xf]
  %v80 = vld [vmem:[%s1 + $0xe0] sm:$0xf]
  %v81 = vld [vmem:[%s1 + $0xe4] sm:$0xf]
  %v82 = vld [vmem:[%s1 + $0xe8] sm:$0xf]
  %v83 = vld [vmem:[%s1 + $0xec] sm:$0xf]
  %v84 = vld [vmem:[%s1 + $0xf0] sm:$0xf]
  %v85 = vld [vmem:[%s1 + $0xf4] sm:$0xf]
  %v86 = vld [vmem:[%s1 + $0xf8] sm:$0xf]
  %v87 = vld [vmem:[%s1 + $0xfc] sm:$0xf]
  %v88 = vld [vmem:[%s1 + $0x100] sm:$0xf]
  %v89 = vld [vmem:[%s1 + $0x104] sm:$0xf]
  %v90 = vld [vmem:[%s1 + $0x108] sm:$0xf]
  %v91 = vld [vmem:[%s1 + $0x10c] sm:$0xf]
  %v92 = vld [vmem:[%s1 + $0x110] sm:$0xf]
  %v93 = vld [vmem:[%s1 + $0x114] sm:$0xf]
  %v94 = vld [vmem:[%s1 + $0x118] sm:$0xf]
  %v95 = vld [vmem:[%s1 + $0x11c] sm:$0xf]
  %v96 = vld [vmem:[%s1 + $0x120] sm:$0xf]
  %v97 = vld [vmem:[%s1 + $0x124] sm:$0xf]
  %v98 = vld [vmem:[%s1 + $0x128] sm:$0xf]
  %v99 = vld [vmem:[%s1 + $0x12c] sm:$0xf]
  %v100 = vld [vmem:[%s1 + $0x130] sm:$0xf]
  %v101 = vld [vmem:[%s1 + $0x134] sm:$0xf]
  %v102 = vld [vmem:[%s1 + $0x138] sm:$0xf]
  %v103 = vld [vmem:[%s1 + $0x13c] sm:$0xf]
  %v104 = vld [vmem:[%s1 + $0x140] sm:$0xf]
  %v105 = vld [vmem:[%s1 + $0x144] sm:$0xf]
  %v106 = vld [vmem:[%s1 + $0x148] sm:$0xf]
  %v107 = vld [vmem:[%s1 + $0x14c] sm:$0xf]
  %v108 = vld [vmem:[%s1 + $0x150] sm:$0xf]
  %v109 = vld [vmem:[%s1 + $0x154] sm:$0xf]
  %v110 = vld [vmem:[%s1 + $0x158] sm:$0xf]
  %v111 = vld [vmem:[%s1 + $0x15c] sm:$0xf]
  %v112 = vld [vmem:[%s1 + $0x160] sm:$0xf]
  %v113 = vld [vmem:[%s1 + $0x164] sm:$0xf]
  %v114 = vld [vmem:[%s1 + $0x168] sm:$0xf]
  %v115 = vld [vmem:[%s1 + $0x16c] sm:$0xf]
  %v116 = vld [vmem:[%s1 + $0x170] sm:$0xf]
  %v117 = vld [vmem:[%s1 + $0x174] sm:$0xf]
  %v118 = vld [vmem:[%s1 + $0x178] sm:$0xf]
  %v119 = vld [vmem:[%s1 + $0x17c] sm:$0xf]
  %v120 = vld [vmem:[%s1 + $0x180] sm:$0xf]
  %v121 = vld [vmem:[%s1 + $0x184] sm:$0xf]
  %v122 = vld [vmem:[%s1 + $0x188] sm:$0xf]
  %v123 = vld [vmem:[%s1 + $0x18c] sm:$0xf]
  %v124 = vld [vmem:[%s1 + $0x190] sm:$0xf]
  %v125 = vld [vmem:[%s1 + $0x194] sm:$0xf]
  %v126 = vld [vmem:[%s1 + $0x198] sm:$0xf]
  %v127 = vld [vmem:[%s1 + $0x19c] sm:$0xf]
  %v128 = vld [vmem:[%s1 + $0x1a0] sm:$0xf]
  %v129 = vld [vmem:[%s1 + $0x1a4] sm:$0xf]
  %v130 = vld [vmem:[%s1 + $0x1a8] sm:$0xf]
  %v131 = vld [vmem:[%s1 + $0x1ac] sm:$0xf]
  %v132 = vld [vmem:[%s1 + $0x1b0] sm:$0xf]
  %v133 = vld [vmem:[%s1 + $0x1b4] sm:$0xf]
  %v134 = vld [vmem:[%s1 + $0x1b8] sm:$0xf]
  %v135 = vld [vmem:[%s1 + $0x1bc] sm:$0xf]
  %v136 = vld [vmem:[%s1 + $0x1c0] sm:$0xf]
  %v137 = vld [vmem:[%s1 + $0x1c4] sm:$0xf]
  %v138 = vld [vmem:[%s1 + $0x1c8] sm:$0xf]
  %v139 = vld [vmem:[%s1 + $0x1cc] sm:$0xf]
  %v140 = vld [vmem:[%s1 + $0x1d0] sm:$0xf]
  %v141 = vld [vmem:[%s1 + $0x1d4] sm:$0xf]
  %v142 = vld [vmem:[%s1 + $0x1d8] sm:$0xf]
  %v143 = vld [vmem:[%s1 + $0x1dc] sm:$0xf]
  %v144 = vld [vmem:[%s1 + $0x1e0] sm:$0xf]
  %v145 = vld [vmem:[%s1 + $0x1e4] sm:$0xf]
  %v146 = vld [vmem:[%s1 + $0x1e8] sm:$0xf]
  %v147 = vld [vmem:[%s1 + $0x1ec] sm:$0xf]
  %v148 = vld [vmem:[%s1 + $0x1f0] sm:$0xf]
  %v149 = vld [vmem:[%s1 + $0x1f4] sm:$0xf]
  %v150 = vld [vmem:[%s1 + $0x1f8] sm:$0xf]
  %v151 = vld [vmem:[%s1 + $0x1fc] sm:$0xf]
  %v152 = vld [vmem:[%s1 + $0x200] sm:$0xf]
  %v153 = vld [vmem:[%s1 + $0x204] sm:$0xf]
  %v154 = vld [vmem:[%s1 + $0x208] sm:$0xf]
  %v155 = vld [vmem:[%s1 + $0x20c] sm:$0xf]
  %v156 = vld [vmem:[%s1 + $0x210] sm:$0xf]
  %v157 = vld [vmem:[%s1 + $0x214] sm:$0xf]
  %v158 = vld [vmem:[%s1 + $0x218] sm:$0xf]
  %v159 = vld [vmem:[%s1 + $0x21c] sm:$0xf]
  %v160 = vld [vmem:[%s1 + $0x220] sm:$0xf]
  %v161 = vld [vmem:[%s1 + $0x224] sm:$0xf]
  %v162 = vld [vmem:[%s1 + $0x228] sm:$0xf]
  %v163 = vld [vmem:[%s1 + $0x22c] sm:$0xf]
  %v164 = vld [vmem:[%s1 + $0x230] sm:$0xf]
  %v165 = vld [vmem:[%s1 + $0x234] sm:$0xf]
  %v166 = vld [vmem:[%s1 + $0x238] sm:$0xf]
  %v167 = vld [vmem:[%s1 + $0x23c] sm:$0xf]
  %v168 = vld [vmem:[%s1 + $0x240] sm:$0xf]
  %v169 = vld [vmem:[%s1 + $0x244] sm:$0xf]
  %v170 = vld [vmem:[%s1 + $0x248] sm:$0xf]
  %v171 = vld [vmem:[%s1 + $0x24c] sm:$0xf]
  %v172 = vld [vmem:[%s1 + $0x250] sm:$0xf]
  %v173 = vld [vmem:[%s1 + $0x254] sm:$0xf]
  %v174 = vld [vmem:[%s1 + $0x258] sm:$0xf]
  %v175 = vld [vmem:[%s1 + $0x25c] sm:$0xf]
  %v176 = vld [vmem:[%s1 + $0x260] sm:$0xf]
  %v177 = vld [vmem:[%s1 + $0x264] sm:$0xf]
  %v178 = vld [vmem:[%s1 + $0x268] sm:$0xf]
  %v179 = vld [vmem:[%s1 + $0x26c] sm:$0xf]
  %v180 = vld [vmem:[%s1 + $0x270] sm:$0xf]
  %v181 = vld [vmem:[%s1 + $0x274] sm:$0xf]
  %v182 = vld [vmem:[%s1 + $0x278] sm:$0xf]
  %v183 = vld [vmem:[%s1 + $0x27c] sm:$0xf]
  %v184 = vld [vmem:[%s1 + $0x280] sm:$0xf]
  %v185 = vld [vmem:[%s1 + $0x284] sm:$0xf]
  %v186 = vld [vmem:[%s1 + $0x288] sm:$0xf]
  %v187 = vld [vmem:[%s1 + $0x28c] sm:$0xf]
  %v188 = vld [vmem:[%s1 + $0x290] sm:$0xf]
  %v189 = vld [vmem:[%s1 + $0x294] sm:$0xf]
  %v190 = vld [vmem:[%s1 + $0x298] sm:$0xf]
  %v191 = vld [vmem:[%s1 + $0x29c] sm:$0xf]
  %v192 = vld [vmem:[%s1 + $0x2a0] sm:$0xf]
  %v193 = vld [vmem:[%s1 + $0x2a4] sm:$0xf]
  %v194 = vld [vmem:[%s1 + $0x2a8] sm:$0xf]
  %v195 = vld [vmem:[%s1 + $0x2ac] sm:$0xf]
  %v196 = vld [vmem:[%s1 + $0x2b0] sm:$0xf]
  %v197 = vld [vmem:[%s1 + $0x2b4] sm:$0xf]
  %v198 = vld [vmem:[%s1 + $0x2b8] sm:$0xf]
  %v199 = vld [vmem:[%s1 + $0x2bc] sm:$0xf]
  %v200 = vld [vmem:[%s1 + $0x2c0] sm:$0xf]
  %v201 = vld [vmem:[%s1 + $0x2c4] sm:$0xf]
  %v202 = vld [vmem:[%s1 + $0x2c8] sm:$0xf]
  %v203 = vld [vmem:[%s1 + $0x2cc] sm:$0xf]
  %v204 = vld [vmem:[%s1 + $0x2d0] sm:$0xf]
  %v205 = vld [vmem:[%s1 + $0x2d4] sm:$0xf]
  %v206 = vld [vmem:[%s1 + $0x2d8] sm:$0xf]
  %v207 = vld [vmem:[%s1 + $0x2dc] sm:$0xf]
  %v208 = vld [vmem:[%s1 + $0x2e0] sm:$0xf]
  %v209 = vld [vmem:[%s1 + $0x2e4] sm:$0xf]
  %v210 = vld [vmem:[%s1 + $0x2e8] sm:$0xf]
  %v211 = vld [vmem:[%s1 + $0x2ec] sm:$0xf]
  %v212 = vld [vmem:[%s1 + $0x2f0] sm:$0xf]
  %v213 = vld [vmem:[%s1 + $0x2f4] sm:$0xf]
  %v214 = vld [vmem:[%s1 + $0x2f8] sm:$0xf]
  %v215 = vld [vmem:[%s1 + $0x2fc] sm:$0xf]
  %v216 = vld [vmem:[%s1 + $0x300] sm:$0xf]
  %v217 = vld [vmem:[%s1 + $0x304] sm:$0xf]
  %v218 = vld [vmem:[%s1 + $0x308] sm:$0xf]
  %v219 = vld [vmem:[%s1 + $0x30c] sm:$0xf]
  %v220 = vld [vmem:[%s1 + $0x310] sm:$0xf]
  %v221 = vld [vmem:[%s1 + $0x314] sm:$0xf]
  %v222 = vld [vmem:[%s1 + $0x318] sm:$0xf]
  %v223 = vld [vmem:[%s1 + $0x31c] sm:$0xf]
  %v224 = vld [vmem:[%s1 + $0x320] sm:$0xf]
  %v225 = vld [vmem:[%s1 + $0x324] sm:$0xf]
  %v226 = vld [vmem:[%s1 + $0x328] sm:$0xf]
  %v227 = vld [vmem:[%s1 + $0x32c] sm:$0xf]
  %v228 = vld [vmem:[%s1 + $0x330] sm:$0xf]
  %v229 = vld [vmem:[%s1 + $0x334] sm:$0xf]
  %v230 = vld [vmem:[%s1 + $0x338] sm:$0xf]
  %v231 = vld [vmem:[%s1 + $0x33c] sm:$0xf]
  %v232 = vld [vmem:[%s1 + $0x340] sm:$0xf]
  %v233 = vld [vmem:[%s1 + $0x344] sm:$0xf]
  %v234 = vld [vmem:[%s1 + $0x348] sm:$0xf]
  %v235 = vld [vmem:[%s1 + $0x34c] sm:$0xf]
  %v236 = vld [vmem:[%s1 + $0x350] sm:$0xf]
  %v237 = vld [vmem:[%s1 + $0x354] sm:$0xf]
  %v238 = vld [vmem:[%s1 + $0x358] sm:$0xf]
  %v239 = vld [vmem:[%s1 + $0x35c] sm:$0xf]
  %v240 = vld [vmem:[%s1 + $0x360] sm:$0xf]
  %v241 = vld [vmem:[%s1 + $0x364] sm:$0xf]
  %v242 = vld [vmem:[%s1 + $0x368] sm:$0xf]
  %v243 = vld [vmem:[%s1 + $0x36c] sm:$0xf]
  %v244 = vld [vmem:[%s1 + $0x370] sm:$0xf]
  %v245 = vld [vmem:[%s1 + $0x374] sm:$0xf]
  %v246 = vld [vmem:[%s1 + $0x378] sm:$0xf]
  %v247 = vld [vmem:[%s1 + $0x37c] sm:$0xf]
  %v248 = vld [vmem:[%s1 + $0x380] sm:$0xf]
  %v249 = vld [vmem:[%s1 + $0x384] sm:$0xf]
  %v250 = vld [vmem:[%s1 + $0x388] sm:$0xf]
  %v251 = vld [vmem:[%s1 + $0x38c] sm:$0xf]
  %v252 = vld [vmem:[%s1 + $0x390] sm:$0xf]
  %v253 = vld [vmem:[%s1 + $0x394] sm:$0xf]
  %v254 = vld [vmem:[%s1 + $0x398] sm:$0xf]
  %v255 = vld [vmem:[%s1 + $0x39c] sm:$0xf]
  %v256 = vld [vmem:[%s1 + $0x3a0] sm:$0xf]
  %v257 = vld [vmem:[%s1 + $0x3a4] sm:$0xf]
  %v258 = vld [vmem:[%s1 + $0x3a8] sm:$0xf]
  %v259 = vld [vmem:[%s1 + $0x3ac] sm:$0xf]
  %v260 = vld [vmem:[%s1 + $0x3b0] sm:$0xf]
  %v261 = vld [vmem:[%s1 + $0x3b4] sm:$0xf]
  %v262 = vld [vmem:[%s1 + $0x3b8] sm:$0xf]
  %v263 = vld [vmem:[%s1 + $0x3bc] sm:$0xf]
  %v264 = vld [vmem:[%s1 + $0x3c0] sm:$0xf]
  %v265 = vld [vmem:[%s1 + $0x3c4] sm:$0xf]
  %v266 = vld [vmem:[%s1 + $0x3c8] sm:$0xf]
  %v267 = vld [vmem:[%s1 + $0x3cc] sm:$0xf]
  %v268 = vld [vmem:[%s1 + $0x3d0] sm:$0xf]
  %v269 = vld [vmem:[%s1 + $0x3d4] sm:$0xf]
  %v270 = vld [vmem:[%s1 + $0x3d8] sm:$0xf]
  %v271 = vld [vmem:[%s1 + $0x3dc] sm:$0xf]
  %v272 = vld [vmem:[%s1 + $0x3e0] sm:$0xf]
  %v273 = vld [vmem:[%s1 + $0x3e4] sm:$0xf]
  %v274 = vld [vmem:[%s1 + $0x3e8] sm:$0xf]
  %v275 = vld [vmem:[%s1 + $0x3ec] sm:$0xf]
  %v276 = vld [vmem:[%s1 + $0x3f0] sm:$0xf]
  %v277 = vld [vmem:[%s1 + $0x3f4] sm:$0xf]
  %v278 = vld [vmem:[%s1 + $0x3f8] sm:$0xf]
  %v279 = vld [vmem:[%s1 + $0x3fc] sm:$0xf]
  %v280 = vld [vmem:[%s1 + $0x400] sm:$0xf]
  %v281 = vld [vmem:[%s1 + $0x404] sm:$0xf]
  %v282 = vld [vmem:[%s1 + $0x408] sm:$0xf]
  %v283 = vld [vmem:[%s1 + $0x40c] sm:$0xf]
  %v284 = vld [vmem:[%s1 + $0x410] sm:$0xf]
  %v285 = vld [vmem:[%s1 + $0x414] sm:$0xf]
  %v286 = vld [vmem:[%s1 + $0x418] sm:$0xf]
  %v287 = vld [vmem:[%s1 + $0x41c] sm:$0xf]
  %v288 = vld [vmem:[%s1 + $0x420] sm:$0xf]
  %v289 = vld [vmem:[%s1 + $0x424] sm:$0xf]
  %v290 = vld [vmem:[%s1 + $0x428] sm:$0xf]
  %v291 = vld [vmem:[%s1 + $0x42c] sm:$0xf]
  %v292 = vld [vmem:[%s1 + $0x430] sm:$0xf]
  %v293 = vld [vmem:[%s1 + $0x434] sm:$0xf]
  %v294 = vld [vmem:[%s1 + $0x438] sm:$0xf]
  %v295 = vld [vmem:[%s1 + $0x43c] sm:$0xf]
  %v296 = vld [vmem:[%s1 + $0x440] sm:$0xf]
  %v297 = vld [vmem:[%s1 + $0x444] sm:$0xf]
  %v298 = vld [vmem:[%s1 + $0x448] sm:$0xf]
  %v299 = vld [vmem:[%s1 + $0x44c] sm:$0xf]
  %v300 = vld [vmem:[%s1 + $0x450] sm:$0xf]
  %v301 = vld [vmem:[%s1 + $0x454] sm:$0xf]
  %v302 = vld [vmem:[%s1 + $0x458] sm:$0xf]
  %v303 = vld [vmem:[%s1 + $0x45c] sm:$0xf]
  %v304 = vld [vmem:[%s1 + $0x460] sm:$0xf]
  %v305 = vld [vmem:[%s1 + $0x464] sm:$0xf]
  %v306 = vld [vmem:[%s1 + $0x468] sm:$0xf]
  %v307 = vld [vmem:[%s1 + $0x46c] sm:$0xf]
  %v308 = vld [vmem:[%s1 + $0x470] sm:$0xf]
  %v309 = vld [vmem:[%s1 + $0x474] sm:$0xf]
  %v310 = vld [vmem:[%s1 + $0x478] sm:$0xf]
  %v311 = vld [vmem:[%s1 + $0x47c] sm:$0xf]
  %v312 = vld [vmem:[%s2] sm:$0x1]
  %v314 = vlaneseq
  %v315 = vshrl.u32 %v314, 7
  %v316 = vsub.s32 0, %v315
  %v317 = vrot.slane %v312, %v316
  %v328 = vunpack.c.l.b16 %v15
  %v329 = vunpack.c.h.b16 %v15
  %v330 = vunpack.c.l.b16 %v16
  %v331 = vunpack.c.h.b16 %v16
  %v332 = vunpack.c.l.b16 %v17
  %v333 = vunpack.c.h.b16 %v17
  %v334 = vunpack.c.l.b16 %v18
  %v335 = vunpack.c.h.b16 %v18
  %v336 = vunpack.c.l.b16 %v19
  %v337 = vunpack.c.h.b16 %v19
  %v338 = vunpack.c.l.b16 %v20
  %v339 = vunpack.c.h.b16 %v20
  %v340 = vunpack.c.l.b16 %v21
  %v341 = vunpack.c.h.b16 %v21
  %v342 = vunpack.c.l.b16 %v22
  %v343 = vunpack.c.h.b16 %v22
  %v344 = vunpack.c.l.b16 %v23
  %v345 = vunpack.c.h.b16 %v23
  %v346 = vpack.c.b16 %v328, %v328
  %v347 = vpack.c.b16 %v329, %v329
  %v348 = vpack.c.b16 %v330, %v330
  %v349 = vpack.c.b16 %v331, %v331
  %v350 = vpack.c.b16 %v332, %v332
  %v351 = vpack.c.b16 %v333, %v333
  %v352 = vpack.c.b16 %v334, %v334
  %v353 = vpack.c.b16 %v335, %v335
  %v354 = vpack.c.b16 %v336, %v336
  %v355 = vpack.c.b16 %v337, %v337
  %v356 = vpack.c.b16 %v338, %v338
  %v357 = vpack.c.b16 %v339, %v339
  %v358 = vpack.c.b16 %v340, %v340
  %v359 = vpack.c.b16 %v341, %v341
  %v360 = vpack.c.b16 %v342, %v342
  %v361 = vpack.c.b16 %v343, %v343
  %v362 = vpack.c.b16 %v344, %v344
  %v363 = vpack.c.b16 %v345, %v345
  %v670 = vunpack.c.l.b16 %v24
  %v671 = vunpack.c.l.b16 %v25
  %v672 = vunpack.c.l.b16 %v26
  %v673 = vunpack.c.l.b16 %v27
  %v674 = vunpack.c.l.b16 %v28
  %v675 = vunpack.c.l.b16 %v29
  %v676 = vunpack.c.l.b16 %v30
  %v677 = vunpack.c.l.b16 %v31
  %v678 = vunpack.c.l.b16 %v32
  %v679 = vunpack.c.l.b16 %v33
  %v680 = vunpack.c.l.b16 %v34
  %v681 = vunpack.c.l.b16 %v35
  %v682 = vunpack.c.l.b16 %v36
  %v683 = vunpack.c.l.b16 %v37
  %v684 = vunpack.c.l.b16 %v38
  %v685 = vunpack.c.l.b16 %v39
  %v686 = vunpack.c.l.b16 %v40
  %v687 = vunpack.c.l.b16 %v41
  %v688 = vunpack.c.l.b16 %v42
  %v689 = vunpack.c.l.b16 %v43
  %v690 = vunpack.c.l.b16 %v44
  %v691 = vunpack.c.l.b16 %v45
  %v692 = vunpack.c.l.b16 %v46
  %v693 = vunpack.c.l.b16 %v47
  %v694 = vunpack.c.l.b16 %v48
  %v695 = vunpack.c.l.b16 %v49
  %v696 = vunpack.c.l.b16 %v50
  %v697 = vunpack.c.l.b16 %v51
  %v698 = vunpack.c.l.b16 %v52
  %v699 = vunpack.c.l.b16 %v53
  %v700 = vunpack.c.l.b16 %v54
  %v701 = vunpack.c.l.b16 %v55
  %v702 = vunpack.c.l.b16 %v56
  %v703 = vunpack.c.l.b16 %v57
  %v704 = vunpack.c.l.b16 %v58
  %v705 = vunpack.c.l.b16 %v59
  %v706 = vunpack.c.l.b16 %v60
  %v707 = vunpack.c.l.b16 %v61
  %v708 = vunpack.c.l.b16 %v62
  %v709 = vunpack.c.l.b16 %v63
  %v710 = vunpack.c.l.b16 %v64
  %v711 = vunpack.c.l.b16 %v65
  %v712 = vunpack.c.l.b16 %v66
  %v713 = vunpack.c.l.b16 %v67
  %v714 = vunpack.c.l.b16 %v68
  %v715 = vunpack.c.l.b16 %v69
  %v716 = vunpack.c.l.b16 %v70
  %v717 = vunpack.c.l.b16 %v71
  %v718 = vunpack.c.l.b16 %v72
  %v719 = vunpack.c.l.b16 %v73
  %v720 = vunpack.c.l.b16 %v74
  %v721 = vunpack.c.l.b16 %v75
  %v722 = vunpack.c.l.b16 %v76
  %v723 = vunpack.c.l.b16 %v77
  %v724 = vunpack.c.l.b16 %v78
  %v725 = vunpack.c.l.b16 %v79
  %v726 = vunpack.c.l.b16 %v80
  %v727 = vunpack.c.l.b16 %v81
  %v728 = vunpack.c.l.b16 %v82
  %v729 = vunpack.c.l.b16 %v83
  %v730 = vunpack.c.l.b16 %v84
  %v731 = vunpack.c.l.b16 %v85
  %v732 = vunpack.c.l.b16 %v86
  %v733 = vunpack.c.l.b16 %v87
  %v734 = vunpack.c.l.b16 %v88
  %v735 = vunpack.c.l.b16 %v89
  %v736 = vunpack.c.l.b16 %v90
  %v737 = vunpack.c.l.b16 %v91
  %v738 = vunpack.c.l.b16 %v92
  %v739 = vunpack.c.l.b16 %v93
  %v740 = vunpack.c.l.b16 %v94
  %v741 = vunpack.c.l.b16 %v95
  %v742 = vunpack.c.l.b16 %v96
  %v743 = vunpack.c.l.b16 %v97
  %v744 = vunpack.c.l.b16 %v98
  %v745 = vunpack.c.l.b16 %v99
  %v746 = vunpack.c.l.b16 %v100
  %v747 = vunpack.c.l.b16 %v101
  %v748 = vunpack.c.l.b16 %v102
  %v749 = vunpack.c.l.b16 %v103
  %v750 = vunpack.c.l.b16 %v104
  %v751 = vunpack.c.l.b16 %v105
  %v752 = vunpack.c.l.b16 %v106
  %v753 = vunpack.c.l.b16 %v107
  %v754 = vunpack.c.l.b16 %v108
  %v755 = vunpack.c.l.b16 %v109
  %v756 = vunpack.c.l.b16 %v110
  %v757 = vunpack.c.l.b16 %v111
  %v758 = vunpack.c.l.b16 %v112
  %v759 = vunpack.c.l.b16 %v113
  %v760 = vunpack.c.l.b16 %v114
  %v761 = vunpack.c.l.b16 %v115
  %v762 = vunpack.c.l.b16 %v116
  %v763 = vunpack.c.l.b16 %v117
  %v764 = vunpack.c.l.b16 %v118
  %v765 = vunpack.c.l.b16 %v119
  %v766 = vunpack.c.l.b16 %v120
  %v767 = vunpack.c.l.b16 %v121
  %v768 = vunpack.c.l.b16 %v122
  %v769 = vunpack.c.l.b16 %v123
  %v770 = vunpack.c.l.b16 %v124
  %v771 = vunpack.c.l.b16 %v125
  %v772 = vunpack.c.l.b16 %v126
  %v773 = vunpack.c.l.b16 %v127
  %v774 = vunpack.c.l.b16 %v128
  %v775 = vunpack.c.l.b16 %v129
  %v776 = vunpack.c.l.b16 %v130
  %v777 = vunpack.c.l.b16 %v131
  %v778 = vunpack.c.l.b16 %v132
  %v779 = vunpack.c.l.b16 %v133
  %v780 = vunpack.c.l.b16 %v134
  %v781 = vunpack.c.l.b16 %v135
  %v782 = vunpack.c.l.b16 %v136
  %v783 = vunpack.c.l.b16 %v137
  %v784 = vunpack.c.l.b16 %v138
  %v785 = vunpack.c.l.b16 %v139
  %v786 = vunpack.c.l.b16 %v140
  %v787 = vunpack.c.l.b16 %v141
  %v788 = vunpack.c.l.b16 %v142
  %v789 = vunpack.c.l.b16 %v143
  %v790 = vunpack.c.l.b16 %v144
  %v791 = vunpack.c.l.b16 %v145
  %v792 = vunpack.c.l.b16 %v146
  %v793 = vunpack.c.l.b16 %v147
  %v794 = vunpack.c.l.b16 %v148
  %v795 = vunpack.c.l.b16 %v149
  %v796 = vunpack.c.l.b16 %v150
  %v797 = vunpack.c.l.b16 %v151
  %v798 = vunpack.c.l.b16 %v152
  %v799 = vunpack.c.l.b16 %v153
  %v800 = vunpack.c.l.b16 %v154
  %v801 = vunpack.c.l.b16 %v155
  %v802 = vunpack.c.l.b16 %v156
  %v803 = vunpack.c.l.b16 %v157
  %v804 = vunpack.c.l.b16 %v158
  %v805 = vunpack.c.l.b16 %v159
  %v806 = vunpack.c.l.b16 %v160
  %v807 = vunpack.c.l.b16 %v161
  %v808 = vunpack.c.l.b16 %v162
  %v809 = vunpack.c.l.b16 %v163
  %v810 = vunpack.c.l.b16 %v164
  %v811 = vunpack.c.l.b16 %v165
  %v812 = vunpack.c.l.b16 %v166
  %v813 = vunpack.c.l.b16 %v167
  %v814 = vunpack.c.l.b16 %v168
  %v815 = vunpack.c.l.b16 %v169
  %v816 = vunpack.c.l.b16 %v170
  %v817 = vunpack.c.l.b16 %v171
  %v818 = vunpack.c.l.b16 %v172
  %v819 = vunpack.c.l.b16 %v173
  %v820 = vunpack.c.l.b16 %v174
  %v821 = vunpack.c.l.b16 %v175
  %v822 = vunpack.c.l.b16 %v176
  %v823 = vunpack.c.l.b16 %v177
  %v824 = vunpack.c.l.b16 %v178
  %v825 = vunpack.c.l.b16 %v179
  %v826 = vunpack.c.l.b16 %v180
  %v827 = vunpack.c.l.b16 %v181
  %v828 = vunpack.c.l.b16 %v182
  %v829 = vunpack.c.l.b16 %v183
  %v830 = vunpack.c.l.b16 %v184
  %v831 = vunpack.c.l.b16 %v185
  %v832 = vunpack.c.l.b16 %v186
  %v833 = vunpack.c.l.b16 %v187
  %v834 = vunpack.c.l.b16 %v188
  %v835 = vunpack.c.l.b16 %v189
  %v836 = vunpack.c.l.b16 %v190
  %v837 = vunpack.c.l.b16 %v191
  %v838 = vunpack.c.l.b16 %v192
  %v839 = vunpack.c.l.b16 %v193
  %v840 = vunpack.c.l.b16 %v194
  %v841 = vunpack.c.l.b16 %v195
  %v842 = vunpack.c.l.b16 %v196
  %v843 = vunpack.c.l.b16 %v197
  %v844 = vunpack.c.l.b16 %v198
  %v845 = vunpack.c.l.b16 %v199
  %v846 = vunpack.c.l.b16 %v200
  %v847 = vunpack.c.l.b16 %v201
  %v848 = vunpack.c.l.b16 %v202
  %v849 = vunpack.c.l.b16 %v203
  %v850 = vunpack.c.l.b16 %v204
  %v851 = vunpack.c.l.b16 %v205
  %v852 = vunpack.c.l.b16 %v206
  %v853 = vunpack.c.l.b16 %v207
  %v854 = vunpack.c.l.b16 %v208
  %v855 = vunpack.c.l.b16 %v209
  %v856 = vunpack.c.l.b16 %v210
  %v857 = vunpack.c.l.b16 %v211
  %v858 = vunpack.c.l.b16 %v212
  %v859 = vunpack.c.l.b16 %v213
  %v860 = vunpack.c.l.b16 %v214
  %v861 = vunpack.c.l.b16 %v215
  %v862 = vunpack.c.l.b16 %v216
  %v863 = vunpack.c.l.b16 %v217
  %v864 = vunpack.c.l.b16 %v218
  %v865 = vunpack.c.l.b16 %v219
  %v866 = vunpack.c.l.b16 %v220
  %v867 = vunpack.c.l.b16 %v221
  %v868 = vunpack.c.l.b16 %v222
  %v869 = vunpack.c.l.b16 %v223
  %v870 = vunpack.c.l.b16 %v224
  %v871 = vunpack.c.l.b16 %v225
  %v872 = vunpack.c.l.b16 %v226
  %v873 = vunpack.c.l.b16 %v227
  %v874 = vunpack.c.l.b16 %v228
  %v875 = vunpack.c.l.b16 %v229
  %v876 = vunpack.c.l.b16 %v230
  %v877 = vunpack.c.l.b16 %v231
  %v878 = vunpack.c.l.b16 %v232
  %v879 = vunpack.c.l.b16 %v233
  %v880 = vunpack.c.l.b16 %v234
  %v881 = vunpack.c.l.b16 %v235
  %v882 = vunpack.c.l.b16 %v236
  %v883 = vunpack.c.l.b16 %v237
  %v884 = vunpack.c.l.b16 %v238
  %v885 = vunpack.c.l.b16 %v239
  %v886 = vunpack.c.l.b16 %v240
  %v887 = vunpack.c.l.b16 %v241
  %v888 = vunpack.c.l.b16 %v242
  %v889 = vunpack.c.l.b16 %v243
  %v890 = vunpack.c.l.b16 %v244
  %v891 = vunpack.c.l.b16 %v245
  %v892 = vunpack.c.l.b16 %v246
  %v893 = vunpack.c.l.b16 %v247
  %v894 = vunpack.c.l.b16 %v248
  %v895 = vunpack.c.l.b16 %v249
  %v896 = vunpack.c.l.b16 %v250
  %v897 = vunpack.c.l.b16 %v251
  %v898 = vunpack.c.l.b16 %v252
  %v899 = vunpack.c.l.b16 %v253
  %v900 = vunpack.c.l.b16 %v254
  %v901 = vunpack.c.l.b16 %v255
  %v902 = vunpack.c.l.b16 %v256
  %v903 = vunpack.c.l.b16 %v257
  %v904 = vunpack.c.l.b16 %v258
  %v905 = vunpack.c.l.b16 %v259
  %v906 = vunpack.c.l.b16 %v260
  %v907 = vunpack.c.l.b16 %v261
  %v908 = vunpack.c.l.b16 %v262
  %v909 = vunpack.c.l.b16 %v263
  %v910 = vunpack.c.l.b16 %v264
  %v911 = vunpack.c.l.b16 %v265
  %v912 = vunpack.c.l.b16 %v266
  %v913 = vunpack.c.l.b16 %v267
  %v914 = vunpack.c.l.b16 %v268
  %v915 = vunpack.c.l.b16 %v269
  %v916 = vunpack.c.l.b16 %v270
  %v917 = vunpack.c.l.b16 %v271
  %v918 = vunpack.c.l.b16 %v272
  %v919 = vunpack.c.l.b16 %v273
  %v920 = vunpack.c.l.b16 %v274
  %v921 = vunpack.c.l.b16 %v275
  %v922 = vunpack.c.l.b16 %v276
  %v923 = vunpack.c.l.b16 %v277
  %v924 = vunpack.c.l.b16 %v278
  %v925 = vunpack.c.l.b16 %v279
  %v926 = vunpack.c.l.b16 %v280
  %v927 = vunpack.c.l.b16 %v281
  %v928 = vunpack.c.l.b16 %v282
  %v929 = vunpack.c.l.b16 %v283
  %v930 = vunpack.c.l.b16 %v284
  %v931 = vunpack.c.l.b16 %v285
  %v932 = vunpack.c.l.b16 %v286
  %v933 = vunpack.c.l.b16 %v287
  %v934 = vunpack.c.l.b16 %v288
  %v935 = vunpack.c.l.b16 %v289
  %v936 = vunpack.c.l.b16 %v290
  %v937 = vunpack.c.l.b16 %v291
  %v938 = vunpack.c.l.b16 %v292
  %v939 = vunpack.c.l.b16 %v293
  %v940 = vunpack.c.l.b16 %v294
  %v941 = vunpack.c.l.b16 %v295
  %v942 = vunpack.c.l.b16 %v296
  %v943 = vunpack.c.l.b16 %v297
  %v944 = vunpack.c.l.b16 %v298
  %v945 = vunpack.c.l.b16 %v299
  %v946 = vunpack.c.l.b16 %v300
  %v947 = vunpack.c.l.b16 %v301
  %v948 = vunpack.c.l.b16 %v302
  %v949 = vunpack.c.l.b16 %v303
  %v950 = vunpack.c.l.b16 %v304
  %v951 = vunpack.c.l.b16 %v305
  %v952 = vunpack.c.l.b16 %v306
  %v953 = vunpack.c.l.b16 %v307
  %v954 = vunpack.c.l.b16 %v308
  %v955 = vunpack.c.l.b16 %v309
  %v956 = vunpack.c.l.b16 %v310
  %v957 = vunpack.c.l.b16 %v311
  %v958 = vpack.c.b16 %v671, %v670
  %v959 = vpack.c.b16 %v673, %v672
  %v960 = vpack.c.b16 %v675, %v674
  %v961 = vpack.c.b16 %v677, %v676
  %v962 = vpack.c.b16 %v679, %v678
  %v963 = vpack.c.b16 %v681, %v680
  %v964 = vpack.c.b16 %v683, %v682
  %v965 = vpack.c.b16 %v685, %v684
  %v966 = vpack.c.b16 %v687, %v686
  %v967 = vpack.c.b16 %v689, %v688
  %v968 = vpack.c.b16 %v691, %v690
  %v969 = vpack.c.b16 %v693, %v692
  %v970 = vpack.c.b16 %v695, %v694
  %v971 = vpack.c.b16 %v697, %v696
  %v972 = vpack.c.b16 %v699, %v698
  %v973 = vpack.c.b16 %v701, %v700
  %v974 = vpack.c.b16 %v703, %v702
  %v975 = vpack.c.b16 %v705, %v704
  %v976 = vpack.c.b16 %v707, %v706
  %v977 = vpack.c.b16 %v709, %v708
  %v978 = vpack.c.b16 %v711, %v710
  %v979 = vpack.c.b16 %v713, %v712
  %v980 = vpack.c.b16 %v715, %v714
  %v981 = vpack.c.b16 %v717, %v716
  %v982 = vpack.c.b16 %v719, %v718
  %v983 = vpack.c.b16 %v721, %v720
  %v984 = vpack.c.b16 %v723, %v722
  %v985 = vpack.c.b16 %v725, %v724
  %v986 = vpack.c.b16 %v727, %v726
  %v987 = vpack.c.b16 %v729, %v728
  %v988 = vpack.c.b16 %v731, %v730
  %v989 = vpack.c.b16 %v733, %v732
  %v990 = vpack.c.b16 %v735, %v734
  %v991 = vpack.c.b16 %v737, %v736
  %v992 = vpack.c.b16 %v739, %v738
  %v993 = vpack.c.b16 %v741, %v740
  %v994 = vpack.c.b16 %v743, %v742
  %v995 = vpack.c.b16 %v745, %v744
  %v996 = vpack.c.b16 %v747, %v746
  %v997 = vpack.c.b16 %v749, %v748
  %v998 = vpack.c.b16 %v751, %v750
  %v999 = vpack.c.b16 %v753, %v752
  %v1000 = vpack.c.b16 %v755, %v754
  %v1001 = vpack.c.b16 %v757, %v756
  %v1002 = vpack.c.b16 %v759, %v758
  %v1003 = vpack.c.b16 %v761, %v760
  %v1004 = vpack.c.b16 %v763, %v762
  %v1005 = vpack.c.b16 %v765, %v764
  %v1006 = vpack.c.b16 %v767, %v766
  %v1007 = vpack.c.b16 %v769, %v768
  %v1008 = vpack.c.b16 %v771, %v770
  %v1009 = vpack.c.b16 %v773, %v772
  %v1010 = vpack.c.b16 %v775, %v774
  %v1011 = vpack.c.b16 %v777, %v776
  %v1012 = vpack.c.b16 %v779, %v778
  %v1013 = vpack.c.b16 %v781, %v780
  %v1014 = vpack.c.b16 %v783, %v782
  %v1015 = vpack.c.b16 %v785, %v784
  %v1016 = vpack.c.b16 %v787, %v786
  %v1017 = vpack.c.b16 %v789, %v788
  %v1018 = vpack.c.b16 %v791, %v790
  %v1019 = vpack.c.b16 %v793, %v792
  %v1020 = vpack.c.b16 %v795, %v794
  %v1021 = vpack.c.b16 %v797, %v796
  %v1022 = vpack.c.b16 %v799, %v798
  %v1023 = vpack.c.b16 %v801, %v800
  %v1024 = vpack.c.b16 %v803, %v802
  %v1025 = vpack.c.b16 %v805, %v804
  %v1026 = vpack.c.b16 %v807, %v806
  %v1027 = vpack.c.b16 %v809, %v808
  %v1028 = vpack.c.b16 %v811, %v810
  %v1029 = vpack.c.b16 %v813, %v812
  %v1030 = vpack.c.b16 %v815, %v814
  %v1031 = vpack.c.b16 %v817, %v816
  %v1032 = vpack.c.b16 %v819, %v818
  %v1033 = vpack.c.b16 %v821, %v820
  %v1034 = vpack.c.b16 %v823, %v822
  %v1035 = vpack.c.b16 %v825, %v824
  %v1036 = vpack.c.b16 %v827, %v826
  %v1037 = vpack.c.b16 %v829, %v828
  %v1038 = vpack.c.b16 %v831, %v830
  %v1039 = vpack.c.b16 %v833, %v832
  %v1040 = vpack.c.b16 %v835, %v834
  %v1041 = vpack.c.b16 %v837, %v836
  %v1042 = vpack.c.b16 %v839, %v838
  %v1043 = vpack.c.b16 %v841, %v840
  %v1044 = vpack.c.b16 %v843, %v842
  %v1045 = vpack.c.b16 %v845, %v844
  %v1046 = vpack.c.b16 %v847, %v846
  %v1047 = vpack.c.b16 %v849, %v848
  %v1048 = vpack.c.b16 %v851, %v850
  %v1049 = vpack.c.b16 %v853, %v852
  %v1050 = vpack.c.b16 %v855, %v854
  %v1051 = vpack.c.b16 %v857, %v856
  %v1052 = vpack.c.b16 %v859, %v858
  %v1053 = vpack.c.b16 %v861, %v860
  %v1054 = vpack.c.b16 %v863, %v862
  %v1055 = vpack.c.b16 %v865, %v864
  %v1056 = vpack.c.b16 %v867, %v866
  %v1057 = vpack.c.b16 %v869, %v868
  %v1058 = vpack.c.b16 %v871, %v870
  %v1059 = vpack.c.b16 %v873, %v872
  %v1060 = vpack.c.b16 %v875, %v874
  %v1061 = vpack.c.b16 %v877, %v876
  %v1062 = vpack.c.b16 %v879, %v878
  %v1063 = vpack.c.b16 %v881, %v880
  %v1064 = vpack.c.b16 %v883, %v882
  %v1065 = vpack.c.b16 %v885, %v884
  %v1066 = vpack.c.b16 %v887, %v886
  %v1067 = vpack.c.b16 %v889, %v888
  %v1068 = vpack.c.b16 %v891, %v890
  %v1069 = vpack.c.b16 %v893, %v892
  %v1070 = vpack.c.b16 %v895, %v894
  %v1071 = vpack.c.b16 %v897, %v896
  %v1072 = vpack.c.b16 %v899, %v898
  %v1073 = vpack.c.b16 %v901, %v900
  %v1074 = vpack.c.b16 %v903, %v902
  %v1075 = vpack.c.b16 %v905, %v904
  %v1076 = vpack.c.b16 %v907, %v906
  %v1077 = vpack.c.b16 %v909, %v908
  %v1078 = vpack.c.b16 %v911, %v910
  %v1079 = vpack.c.b16 %v913, %v912
  %v1080 = vpack.c.b16 %v915, %v914
  %v1081 = vpack.c.b16 %v917, %v916
  %v1082 = vpack.c.b16 %v919, %v918
  %v1083 = vpack.c.b16 %v921, %v920
  %v1084 = vpack.c.b16 %v923, %v922
  %v1085 = vpack.c.b16 %v925, %v924
  %v1086 = vpack.c.b16 %v927, %v926
  %v1087 = vpack.c.b16 %v929, %v928
  %v1088 = vpack.c.b16 %v931, %v930
  %v1089 = vpack.c.b16 %v933, %v932
  %v1090 = vpack.c.b16 %v935, %v934
  %v1091 = vpack.c.b16 %v937, %v936
  %v1092 = vpack.c.b16 %v939, %v938
  %v1093 = vpack.c.b16 %v941, %v940
  %v1094 = vpack.c.b16 %v943, %v942
  %v1095 = vpack.c.b16 %v945, %v944
  %v1096 = vpack.c.b16 %v947, %v946
  %v1097 = vpack.c.b16 %v949, %v948
  %v1098 = vpack.c.b16 %v951, %v950
  %v1099 = vpack.c.b16 %v953, %v952
  %v1100 = vpack.c.b16 %v955, %v954
  %v1101 = vpack.c.b16 %v957, %v956
  %1246 = vmatprep.subr.bf16.mxu0 0
  %1247 = vmatpush1.bf16.msra.mxu0 %v965
  %1248 = vmatprep.subr.bf16.mxu0 0
  %1249 = vmatpush1.bf16.msra.mxu0 %v964
  %1250 = vmatprep.subr.bf16.mxu0 0
  %1251 = vmatpush1.bf16.msra.mxu0 %v963
  %1252 = vmatprep.subr.bf16.mxu0 0
  %1253 = vmatpush1.bf16.msra.mxu0 %v962
  %1254 = vmatprep.subr.bf16.mxu0 0
  %1255 = vmatpush1.bf16.msra.mxu0 %v961
  %1256 = vmatprep.subr.bf16.mxu0 0
  %1257 = vmatpush1.bf16.msra.mxu0 %v960
  %1258 = vmatprep.subr.bf16.mxu0 0
  %1259 = vmatpush1.bf16.msra.mxu0 %v959
  %1260 = vmatprep.subr.bf16.mxu0 0
  %1261 = vmatpush1.bf16.msra.mxu0 %v958
  %1262 = vmatprep.subr.bf16.mxu0 0
  %1263 = vmatpush2.bf16.msra.mxu0 %v973
  %1264 = vmatprep.subr.bf16.mxu0 0
  %1265 = vmatpush2.bf16.msra.mxu0 %v972
  %1266 = vmatprep.subr.bf16.mxu0 0
  %1267 = vmatpush2.bf16.msra.mxu0 %v971
  %1268 = vmatprep.subr.bf16.mxu0 0
  %1269 = vmatpush2.bf16.msra.mxu0 %v970
  %1270 = vmatprep.subr.bf16.mxu0 0
  %1271 = vmatpush2.bf16.msra.mxu0 %v969
  %1272 = vmatprep.subr.bf16.mxu0 0
  %1273 = vmatpush2.bf16.msra.mxu0 %v968
  %1274 = vmatprep.subr.bf16.mxu0 0
  %1275 = vmatpush2.bf16.msra.mxu0 %v967
  %1276 = vmatprep.subr.bf16.mxu0 0
  %1277 = vmatpush2.bf16.msra.mxu0 %v966
  %1278 = vmatprep.mubr.bf16.mxu0 %v347
  %1279 = vmatmul.mubr.bf16.gmra.mxu0 %v346
  %v1280 = vpop.f32.mrf.mxu0
  %v1281 = vadd.f32 %v317, %v1280
  %v1282 = vpop.f32.mrf.mxu0
  %v1283 = vpop.f32.mrf.mxu0
  %v1284 = vpop.f32.mrf.mxu0
  %1285 = vdwg.mxu0
  %1286 = vmatprep.subr.bf16.mxu0 0
  %1287 = vmatpush1.bf16.msra.mxu0 %v981
  %1288 = vmatprep.subr.bf16.mxu0 0
  %1289 = vmatpush1.bf16.msra.mxu0 %v980
  %1290 = vmatprep.subr.bf16.mxu0 0
  %1291 = vmatpush1.bf16.msra.mxu0 %v979
  %1292 = vmatprep.subr.bf16.mxu0 0
  %1293 = vmatpush1.bf16.msra.mxu0 %v978
  %1294 = vmatprep.subr.bf16.mxu0 0
  %1295 = vmatpush1.bf16.msra.mxu0 %v977
  %1296 = vmatprep.subr.bf16.mxu0 0
  %1297 = vmatpush1.bf16.msra.mxu0 %v976
  %1298 = vmatprep.subr.bf16.mxu0 0
  %1299 = vmatpush1.bf16.msra.mxu0 %v975
  %1300 = vmatprep.subr.bf16.mxu0 0
  %1301 = vmatpush1.bf16.msra.mxu0 %v974
  %1302 = vmatprep.subr.bf16.mxu0 0
  %1303 = vmatpush2.bf16.msra.mxu0 %v989
  %1304 = vmatprep.subr.bf16.mxu0 0
  %1305 = vmatpush2.bf16.msra.mxu0 %v988
  %1306 = vmatprep.subr.bf16.mxu0 0
  %1307 = vmatpush2.bf16.msra.mxu0 %v987
  %1308 = vmatprep.subr.bf16.mxu0 0
  %1309 = vmatpush2.bf16.msra.mxu0 %v986
  %1310 = vmatprep.subr.bf16.mxu0 0
  %1311 = vmatpush2.bf16.msra.mxu0 %v985
  %1312 = vmatprep.subr.bf16.mxu0 0
  %1313 = vmatpush2.bf16.msra.mxu0 %v984
  %1314 = vmatprep.subr.bf16.mxu0 0
  %1315 = vmatpush2.bf16.msra.mxu0 %v983
  %1316 = vmatprep.subr.bf16.mxu0 0
  %1317 = vmatpush2.bf16.msra.mxu0 %v982
  %1318 = vmatprep.mubr.bf16.mxu0 %v349
  %1319 = vmatmul.mubr.bf16.gmra.mxu0 %v348
  %v1320 = vpop.f32.mrf.mxu0
  %v1321 = vadd.f32 %v1281, %v1320
  %v1322 = vpop.f32.mrf.mxu0
  %v1323 = vpop.f32.mrf.mxu0
  %v1324 = vpop.f32.mrf.mxu0
  %1325 = vdwg.mxu0
  %1326 = vmatprep.subr.bf16.mxu0 0
  %1327 = vmatpush1.bf16.msra.mxu0 %v997
  %1328 = vmatprep.subr.bf16.mxu0 0
  %1329 = vmatpush1.bf16.msra.mxu0 %v996
  %1330 = vmatprep.subr.bf16.mxu0 0
  %1331 = vmatpush1.bf16.msra.mxu0 %v995
  %1332 = vmatprep.subr.bf16.mxu0 0
  %1333 = vmatpush1.bf16.msra.mxu0 %v994
  %1334 = vmatprep.subr.bf16.mxu0 0
  %1335 = vmatpush1.bf16.msra.mxu0 %v993
  %1336 = vmatprep.subr.bf16.mxu0 0
  %1337 = vmatpush1.bf16.msra.mxu0 %v992
  %1338 = vmatprep.subr.bf16.mxu0 0
  %1339 = vmatpush1.bf16.msra.mxu0 %v991
  %1340 = vmatprep.subr.bf16.mxu0 0
  %1341 = vmatpush1.bf16.msra.mxu0 %v990
  %1342 = vmatprep.subr.bf16.mxu0 0
  %1343 = vmatpush2.bf16.msra.mxu0 %v1005
  %1344 = vmatprep.subr.bf16.mxu0 0
  %1345 = vmatpush2.bf16.msra.mxu0 %v1004
  %1346 = vmatprep.subr.bf16.mxu0 0
  %1347 = vmatpush2.bf16.msra.mxu0 %v1003
  %1348 = vmatprep.subr.bf16.mxu0 0
  %1349 = vmatpush2.bf16.msra.mxu0 %v1002
  %1350 = vmatprep.subr.bf16.mxu0 0
  %1351 = vmatpush2.bf16.msra.mxu0 %v1001
  %1352 = vmatprep.subr.bf16.mxu0 0
  %1353 = vmatpush2.bf16.msra.mxu0 %v1000
  %1354 = vmatprep.subr.bf16.mxu0 0
  %1355 = vmatpush2.bf16.msra.mxu0 %v999
  %1356 = vmatprep.subr.bf16.mxu0 0
  %1357 = vmatpush2.bf16.msra.mxu0 %v998
  %1358 = vmatprep.mubr.bf16.mxu0 %v351
  %1359 = vmatmul.mubr.bf16.gmra.mxu0 %v350
  %v1360 = vpop.f32.mrf.mxu0
  %v1361 = vadd.f32 %v1321, %v1360
  %v1362 = vpop.f32.mrf.mxu0
  %v1363 = vpop.f32.mrf.mxu0
  %v1364 = vpop.f32.mrf.mxu0
  %1365 = vdwg.mxu0
  %1366 = vmatprep.subr.bf16.mxu0 0
  %1367 = vmatpush1.bf16.msra.mxu0 %v1013
  %1368 = vmatprep.subr.bf16.mxu0 0
  %1369 = vmatpush1.bf16.msra.mxu0 %v1012
  %1370 = vmatprep.subr.bf16.mxu0 0
  %1371 = vmatpush1.bf16.msra.mxu0 %v1011
  %1372 = vmatprep.subr.bf16.mxu0 0
  %1373 = vmatpush1.bf16.msra.mxu0 %v1010
  %1374 = vmatprep.subr.bf16.mxu0 0
  %1375 = vmatpush1.bf16.msra.mxu0 %v1009
  %1376 = vmatprep.subr.bf16.mxu0 0
  %1377 = vmatpush1.bf16.msra.mxu0 %v1008
  %1378 = vmatprep.subr.bf16.mxu0 0
  %1379 = vmatpush1.bf16.msra.mxu0 %v1007
  %1380 = vmatprep.subr.bf16.mxu0 0
  %1381 = vmatpush1.bf16.msra.mxu0 %v1006
  %1382 = vmatprep.subr.bf16.mxu0 0
  %1383 = vmatpush2.bf16.msra.mxu0 %v1021
  %1384 = vmatprep.subr.bf16.mxu0 0
  %1385 = vmatpush2.bf16.msra.mxu0 %v1020
  %1386 = vmatprep.subr.bf16.mxu0 0
  %1387 = vmatpush2.bf16.msra.mxu0 %v1019
  %1388 = vmatprep.subr.bf16.mxu0 0
  %1389 = vmatpush2.bf16.msra.mxu0 %v1018
  %1390 = vmatprep.subr.bf16.mxu0 0
  %1391 = vmatpush2.bf16.msra.mxu0 %v1017
  %1392 = vmatprep.subr.bf16.mxu0 0
  %1393 = vmatpush2.bf16.msra.mxu0 %v1016
  %1394 = vmatprep.subr.bf16.mxu0 0
  %1395 = vmatpush2.bf16.msra.mxu0 %v1015
  %1396 = vmatprep.subr.bf16.mxu0 0
  %1397 = vmatpush2.bf16.msra.mxu0 %v1014
  %1398 = vmatprep.mubr.bf16.mxu0 %v353
  %1399 = vmatmul.mubr.bf16.gmra.mxu0 %v352
  %v1400 = vpop.f32.mrf.mxu0
  %v1401 = vadd.f32 %v1361, %v1400
  %v1402 = vpop.f32.mrf.mxu0
  %v1403 = vpop.f32.mrf.mxu0
  %v1404 = vpop.f32.mrf.mxu0
  %1405 = vdwg.mxu0
  %1406 = vmatprep.subr.bf16.mxu0 0
  %1407 = vmatpush1.bf16.msra.mxu0 %v1029
  %1408 = vmatprep.subr.bf16.mxu0 0
  %1409 = vmatpush1.bf16.msra.mxu0 %v1028
  %1410 = vmatprep.subr.bf16.mxu0 0
  %1411 = vmatpush1.bf16.msra.mxu0 %v1027
  %1412 = vmatprep.subr.bf16.mxu0 0
  %1413 = vmatpush1.bf16.msra.mxu0 %v1026
  %1414 = vmatprep.subr.bf16.mxu0 0
  %1415 = vmatpush1.bf16.msra.mxu0 %v1025
  %1416 = vmatprep.subr.bf16.mxu0 0
  %1417 = vmatpush1.bf16.msra.mxu0 %v1024
  %1418 = vmatprep.subr.bf16.mxu0 0
  %1419 = vmatpush1.bf16.msra.mxu0 %v1023
  %1420 = vmatprep.subr.bf16.mxu0 0
  %1421 = vmatpush1.bf16.msra.mxu0 %v1022
  %1422 = vmatprep.subr.bf16.mxu0 0
  %1423 = vmatpush2.bf16.msra.mxu0 %v1037
  %1424 = vmatprep.subr.bf16.mxu0 0
  %1425 = vmatpush2.bf16.msra.mxu0 %v1036
  %1426 = vmatprep.subr.bf16.mxu0 0
  %1427 = vmatpush2.bf16.msra.mxu0 %v1035
  %1428 = vmatprep.subr.bf16.mxu0 0
  %1429 = vmatpush2.bf16.msra.mxu0 %v1034
  %1430 = vmatprep.subr.bf16.mxu0 0
  %1431 = vmatpush2.bf16.msra.mxu0 %v1033
  %1432 = vmatprep.subr.bf16.mxu0 0
  %1433 = vmatpush2.bf16.msra.mxu0 %v1032
  %1434 = vmatprep.subr.bf16.mxu0 0
  %1435 = vmatpush2.bf16.msra.mxu0 %v1031
  %1436 = vmatprep.subr.bf16.mxu0 0
  %1437 = vmatpush2.bf16.msra.mxu0 %v1030
  %1438 = vmatprep.mubr.bf16.mxu0 %v355
  %1439 = vmatmul.mubr.bf16.gmra.mxu0 %v354
  %v1440 = vpop.f32.mrf.mxu0
  %v1441 = vadd.f32 %v1401, %v1440
  %v1442 = vpop.f32.mrf.mxu0
  %v1443 = vpop.f32.mrf.mxu0
  %v1444 = vpop.f32.mrf.mxu0
  %1445 = vdwg.mxu0
  %1446 = vmatprep.subr.bf16.mxu0 0
  %1447 = vmatpush1.bf16.msra.mxu0 %v1045
  %1448 = vmatprep.subr.bf16.mxu0 0
  %1449 = vmatpush1.bf16.msra.mxu0 %v1044
  %1450 = vmatprep.subr.bf16.mxu0 0
  %1451 = vmatpush1.bf16.msra.mxu0 %v1043
  %1452 = vmatprep.subr.bf16.mxu0 0
  %1453 = vmatpush1.bf16.msra.mxu0 %v1042
  %1454 = vmatprep.subr.bf16.mxu0 0
  %1455 = vmatpush1.bf16.msra.mxu0 %v1041
  %1456 = vmatprep.subr.bf16.mxu0 0
  %1457 = vmatpush1.bf16.msra.mxu0 %v1040
  %1458 = vmatprep.subr.bf16.mxu0 0
  %1459 = vmatpush1.bf16.msra.mxu0 %v1039
  %1460 = vmatprep.subr.bf16.mxu0 0
  %1461 = vmatpush1.bf16.msra.mxu0 %v1038
  %1462 = vmatprep.subr.bf16.mxu0 0
  %1463 = vmatpush2.bf16.msra.mxu0 %v1053
  %1464 = vmatprep.subr.bf16.mxu0 0
  %1465 = vmatpush2.bf16.msra.mxu0 %v1052
  %1466 = vmatprep.subr.bf16.mxu0 0
  %1467 = vmatpush2.bf16.msra.mxu0 %v1051
  %1468 = vmatprep.subr.bf16.mxu0 0
  %1469 = vmatpush2.bf16.msra.mxu0 %v1050
  %1470 = vmatprep.subr.bf16.mxu0 0
  %1471 = vmatpush2.bf16.msra.mxu0 %v1049
  %1472 = vmatprep.subr.bf16.mxu0 0
  %1473 = vmatpush2.bf16.msra.mxu0 %v1048
  %1474 = vmatprep.subr.bf16.mxu0 0
  %1475 = vmatpush2.bf16.msra.mxu0 %v1047
  %1476 = vmatprep.subr.bf16.mxu0 0
  %1477 = vmatpush2.bf16.msra.mxu0 %v1046
  %1478 = vmatprep.mubr.bf16.mxu0 %v357
  %1479 = vmatmul.mubr.bf16.gmra.mxu0 %v356
  %v1480 = vpop.f32.mrf.mxu0
  %v1481 = vadd.f32 %v1441, %v1480
  %v1482 = vpop.f32.mrf.mxu0
  %v1483 = vpop.f32.mrf.mxu0
  %v1484 = vpop.f32.mrf.mxu0
  %1485 = vdwg.mxu0
  %1486 = vmatprep.subr.bf16.mxu0 0
  %1487 = vmatpush1.bf16.msra.mxu0 %v1061
  %1488 = vmatprep.subr.bf16.mxu0 0
  %1489 = vmatpush1.bf16.msra.mxu0 %v1060
  %1490 = vmatprep.subr.bf16.mxu0 0
  %1491 = vmatpush1.bf16.msra.mxu0 %v1059
  %1492 = vmatprep.subr.bf16.mxu0 0
  %1493 = vmatpush1.bf16.msra.mxu0 %v1058
  %1494 = vmatprep.subr.bf16.mxu0 0
  %1495 = vmatpush1.bf16.msra.mxu0 %v1057
  %1496 = vmatprep.subr.bf16.mxu0 0
  %1497 = vmatpush1.bf16.msra.mxu0 %v1056
  %1498 = vmatprep.subr.bf16.mxu0 0
  %1499 = vmatpush1.bf16.msra.mxu0 %v1055
  %1500 = vmatprep.subr.bf16.mxu0 0
  %1501 = vmatpush1.bf16.msra.mxu0 %v1054
  %1502 = vmatprep.subr.bf16.mxu0 0
  %1503 = vmatpush2.bf16.msra.mxu0 %v1069
  %1504 = vmatprep.subr.bf16.mxu0 0
  %1505 = vmatpush2.bf16.msra.mxu0 %v1068
  %1506 = vmatprep.subr.bf16.mxu0 0
  %1507 = vmatpush2.bf16.msra.mxu0 %v1067
  %1508 = vmatprep.subr.bf16.mxu0 0
  %1509 = vmatpush2.bf16.msra.mxu0 %v1066
  %1510 = vmatprep.subr.bf16.mxu0 0
  %1511 = vmatpush2.bf16.msra.mxu0 %v1065
  %1512 = vmatprep.subr.bf16.mxu0 0
  %1513 = vmatpush2.bf16.msra.mxu0 %v1064
  %1514 = vmatprep.subr.bf16.mxu0 0
  %1515 = vmatpush2.bf16.msra.mxu0 %v1063
  %1516 = vmatprep.subr.bf16.mxu0 0
  %1517 = vmatpush2.bf16.msra.mxu0 %v1062
  %1518 = vmatprep.mubr.bf16.mxu0 %v359
  %1519 = vmatmul.mubr.bf16.gmra.mxu0 %v358
  %v1520 = vpop.f32.mrf.mxu0
  %v1521 = vadd.f32 %v1481, %v1520
  %v1522 = vpop.f32.mrf.mxu0
  %v1523 = vpop.f32.mrf.mxu0
  %v1524 = vpop.f32.mrf.mxu0
  %1525 = vdwg.mxu0
  %1526 = vmatprep.subr.bf16.mxu0 0
  %1527 = vmatpush1.bf16.msra.mxu0 %v1077
  %1528 = vmatprep.subr.bf16.mxu0 0
  %1529 = vmatpush1.bf16.msra.mxu0 %v1076
  %1530 = vmatprep.subr.bf16.mxu0 0
  %1531 = vmatpush1.bf16.msra.mxu0 %v1075
  %1532 = vmatprep.subr.bf16.mxu0 0
  %1533 = vmatpush1.bf16.msra.mxu0 %v1074
  %1534 = vmatprep.subr.bf16.mxu0 0
  %1535 = vmatpush1.bf16.msra.mxu0 %v1073
  %1536 = vmatprep.subr.bf16.mxu0 0
  %1537 = vmatpush1.bf16.msra.mxu0 %v1072
  %1538 = vmatprep.subr.bf16.mxu0 0
  %1539 = vmatpush1.bf16.msra.mxu0 %v1071
  %1540 = vmatprep.subr.bf16.mxu0 0
  %1541 = vmatpush1.bf16.msra.mxu0 %v1070
  %1542 = vmatprep.subr.bf16.mxu0 0
  %1543 = vmatpush2.bf16.msra.mxu0 %v1085
  %1544 = vmatprep.subr.bf16.mxu0 0
  %1545 = vmatpush2.bf16.msra.mxu0 %v1084
  %1546 = vmatprep.subr.bf16.mxu0 0
  %1547 = vmatpush2.bf16.msra.mxu0 %v1083
  %1548 = vmatprep.subr.bf16.mxu0 0
  %1549 = vmatpush2.bf16.msra.mxu0 %v1082
  %1550 = vmatprep.subr.bf16.mxu0 0
  %1551 = vmatpush2.bf16.msra.mxu0 %v1081
  %1552 = vmatprep.subr.bf16.mxu0 0
  %1553 = vmatpush2.bf16.msra.mxu0 %v1080
  %1554 = vmatprep.subr.bf16.mxu0 0
  %1555 = vmatpush2.bf16.msra.mxu0 %v1079
  %1556 = vmatprep.subr.bf16.mxu0 0
  %1557 = vmatpush2.bf16.msra.mxu0 %v1078
  %1558 = vmatprep.mubr.bf16.mxu0 %v361
  %1559 = vmatmul.mubr.bf16.gmra.mxu0 %v360
  %v1560 = vpop.f32.mrf.mxu0
  %v1561 = vadd.f32 %v1521, %v1560
  %v1562 = vpop.f32.mrf.mxu0
  %v1563 = vpop.f32.mrf.mxu0
  %v1564 = vpop.f32.mrf.mxu0
  %1565 = vdwg.mxu0
  %1566 = vmatprep.subr.bf16.mxu0 0
  %1567 = vmatpush1.bf16.msra.mxu0 %v1093
  %1568 = vmatprep.subr.bf16.mxu0 0
  %1569 = vmatpush1.bf16.msra.mxu0 %v1092
  %1570 = vmatprep.subr.bf16.mxu0 0
  %1571 = vmatpush1.bf16.msra.mxu0 %v1091
  %1572 = vmatprep.subr.bf16.mxu0 0
  %1573 = vmatpush1.bf16.msra.mxu0 %v1090
  %1574 = vmatprep.subr.bf16.mxu0 0
  %1575 = vmatpush1.bf16.msra.mxu0 %v1089
  %1576 = vmatprep.subr.bf16.mxu0 0
  %1577 = vmatpush1.bf16.msra.mxu0 %v1088
  %1578 = vmatprep.subr.bf16.mxu0 0
  %1579 = vmatpush1.bf16.msra.mxu0 %v1087
  %1580 = vmatprep.subr.bf16.mxu0 0
  %1581 = vmatpush1.bf16.msra.mxu0 %v1086
  %1582 = vmatprep.subr.bf16.mxu0 0
  %1583 = vmatpush2.bf16.msra.mxu0 %v1101
  %1584 = vmatprep.subr.bf16.mxu0 0
  %1585 = vmatpush2.bf16.msra.mxu0 %v1100
  %1586 = vmatprep.subr.bf16.mxu0 0
  %1587 = vmatpush2.bf16.msra.mxu0 %v1099
  %1588 = vmatprep.subr.bf16.mxu0 0
  %1589 = vmatpush2.bf16.msra.mxu0 %v1098
  %1590 = vmatprep.subr.bf16.mxu0 0
  %1591 = vmatpush2.bf16.msra.mxu0 %v1097
  %1592 = vmatprep.subr.bf16.mxu0 0
  %1593 = vmatpush2.bf16.msra.mxu0 %v1096
  %1594 = vmatprep.subr.bf16.mxu0 0
  %1595 = vmatpush2.bf16.msra.mxu0 %v1095
  %1596 = vmatprep.subr.bf16.mxu0 0
  %1597 = vmatpush2.bf16.msra.mxu0 %v1094
  %1598 = vmatprep.mubr.bf16.mxu0 %v363
  %1599 = vmatmul.mubr.bf16.gmra.mxu0 %v362
  %v1600 = vpop.f32.mrf.mxu0
  %v1601 = vadd.f32 %v1561, %v1600
  %v1602 = vpop.f32.mrf.mxu0
  %v1603 = vpop.f32.mrf.mxu0
  %v1604 = vpop.f32.mrf.mxu0
  %1605 = vdwg.mxu0
  %vm1606 = vcmask 916480
  %1607 = vst.msk [vmem:[%s3] sm:$0xff] %vm1606, %v1601
  // Predicated region
  $region14: #{sr_model_forward.7} parent=0 // pred_check
    _
  $region15: #{sr_model_forward.7} parent=0 // pred_check_branch
    %1609 = sbr.rel (0) target = $region17
  $region16: #{sr_model_forward.7} parent=0 // pred_region
    _
  $region17: #{sr_model_forward.7} parent=0 // pred_fallthru
    _
  // Predicated region
  $region18: #{sr_model_forward.7} parent=0 // pred_check
    _
  $region19: #{sr_model_forward.7} parent=0 // pred_check_branch
    %1611 = sbr.rel (0) target = $region21
  $region20: #{sr_model_forward.7} parent=0 // pred_region
    _
  $region21: #{sr_model_forward.7} parent=0 // pred_fallthru
    _

// kernel: sr_model_forward.8
$region0: #{sr_model_forward.8}
  #allocation0 [shape = 'u32[]', space=smem, size = 0x4, offset = 0x4, fixed_abs, tag = 'smem constant byte address 0x4 - core index']
  #allocation1 [shape = 'u32[144,128]{1,0:T(1,128)}', space=vmem, size = 0x12000, scoped, tag = 'internal scratch']
  %s0 = inlined_call_operand.vmem [shape: f32[8,25,27], index: 0, kind: input, shape index: {}]
  %s1 = inlined_call_operand.vmem [shape: f32[8,4,27], index: 1, kind: input, shape index: {}]
  %s2 = inlined_call_operand.vmem [shape: f32[8,1,4], index: 2, kind: input, shape index: {}]
  %s3 = inlined_call_operand.vmem [shape: f32[8,25,4], index: 3, kind: output, shape index: {}]
  %s4 = sld [smem:[#allocation0]]
  $region22: #{sr_model_forward.8} parent=0
    _
  %s6 = ssub.s32 1, %s4
  %s7 = scalar_select 0, %s6, %s4
  // Predicated region
  $region2: #{sr_model_forward.8} parent=0 // pred_check
    _
  $region3: #{sr_model_forward.8} parent=0 // pred_check_branch
    %9 = sbr.rel (0) target = $region5
  $region4: #{sr_model_forward.8} parent=0 // pred_region
    _
  $region5: #{sr_model_forward.8} parent=0 // pred_fallthru
    _
  // Predicated region
  $region6: #{sr_model_forward.8} parent=0 // pred_check
    _
  $region7: #{sr_model_forward.8} parent=0 // pred_check_branch
    %11 = sbr.rel (0) target = $region9
  $region8: #{sr_model_forward.8} parent=0 // pred_region
    _
  $region9: #{sr_model_forward.8} parent=0 // pred_fallthru
    _
  // Predicated region
  $region10: #{sr_model_forward.8} parent=0 // pred_check
    _
  $region11: #{sr_model_forward.8} parent=0 // pred_check_branch
    %13 = sbr.rel (0) target = $region13
  $region12: #{sr_model_forward.8} parent=0 // pred_region
    _
  $region13: #{sr_model_forward.8} parent=0 // pred_fallthru
    _
  %v14 = vld [vmem:[%s0] sm:$0xff]
  %v15 = vld [vmem:[%s0 + $0x8] sm:$0xff]
  %v16 = vld [vmem:[%s0 + $0x10] sm:$0xff]
  %v17 = vld [vmem:[%s0 + $0x18] sm:$0x1]
  %v18 = vld [vmem:[%s0 + $0x20] sm:$0xff]
  %v19 = vld [vmem:[%s0 + $0x28] sm:$0xff]
  %v20 = vld [vmem:[%s0 + $0x30] sm:$0xff]
  %v21 = vld [vmem:[%s0 + $0x38] sm:$0x1]
  %v22 = vld [vmem:[%s0 + $0x40] sm:$0xff]
  %v23 = vld [vmem:[%s0 + $0x48] sm:$0xff]
  %v24 = vld [vmem:[%s0 + $0x50] sm:$0xff]
  %v25 = vld [vmem:[%s0 + $0x58] sm:$0x1]
  %v26 = vld [vmem:[%s0 + $0x60] sm:$0xff]
  %v27 = vld [vmem:[%s0 + $0x68] sm:$0xff]
  %v28 = vld [vmem:[%s0 + $0x70] sm:$0xff]
  %v29 = vld [vmem:[%s0 + $0x78] sm:$0x1]
  %v30 = vld [vmem:[%s0 + $0x80] sm:$0xff]
  %v31 = vld [vmem:[%s0 + $0x88] sm:$0xff]
  %v32 = vld [vmem:[%s0 + $0x90] sm:$0xff]
  %v33 = vld [vmem:[%s0 + $0x98] sm:$0x1]
  %v34 = vld [vmem:[%s0 + $0xa0] sm:$0xff]
  %v35 = vld [vmem:[%s0 + $0xa8] sm:$0xff]
  %v36 = vld [vmem:[%s0 + $0xb0] sm:$0xff]
  %v37 = vld [vmem:[%s0 + $0xb8] sm:$0x1]
  %v38 = vld [vmem:[%s0 + $0xc0] sm:$0xff]
  %v39 = vld [vmem:[%s0 + $0xc8] sm:$0xff]
  %v40 = vld [vmem:[%s0 + $0xd0] sm:$0xff]
  %v41 = vld [vmem:[%s0 + $0xd8] sm:$0x1]
  %v42 = vld [vmem:[%s0 + $0xe0] sm:$0xff]
  %v43 = vld [vmem:[%s0 + $0xe8] sm:$0xff]
  %v44 = vld [vmem:[%s0 + $0xf0] sm:$0xff]
  %v45 = vld [vmem:[%s0 + $0xf8] sm:$0x1]
  %v46 = vld [vmem:[%s1] sm:$0xf]
  %v47 = vld [vmem:[%s1 + $0x4] sm:$0xf]
  %v48 = vld [vmem:[%s1 + $0x8] sm:$0xf]
  %v49 = vld [vmem:[%s1 + $0xc] sm:$0xf]
  %v50 = vld [vmem:[%s1 + $0x10] sm:$0xf]
  %v51 = vld [vmem:[%s1 + $0x14] sm:$0xf]
  %v52 = vld [vmem:[%s1 + $0x18] sm:$0xf]
  %v53 = vld [vmem:[%s1 + $0x1c] sm:$0xf]
  %v54 = vld [vmem:[%s2] sm:$0x1]
  %v55 = vld [vmem:[%s2 + $0x1] sm:$0x1]
  %v56 = vld [vmem:[%s2 + $0x2] sm:$0x1]
  %v57 = vld [vmem:[%s2 + $0x3] sm:$0x1]
  %v58 = vld [vmem:[%s2 + $0x4] sm:$0x1]
  %v59 = vld [vmem:[%s2 + $0x5] sm:$0x1]
  %v60 = vld [vmem:[%s2 + $0x6] sm:$0x1]
  %v61 = vld [vmem:[%s2 + $0x7] sm:$0x1]
  %v62 = vlaneseq
  %v63 = vshrl.u32 %v62, 7
  %v64 = vsub.s32 0, %v63
  %v65 = vrot.slane %v46, %v64
  %v66 = vlaneseq
  %v67 = vshrl.u32 %v66, 7
  %v68 = vsub.s32 0, %v67
  %v69 = vrot.slane %v47, %v68
  %v70 = vlaneseq
  %v71 = vshrl.u32 %v70, 7
  %v72 = vsub.s32 0, %v71
  %v73 = vrot.slane %v48, %v72
  %v74 = vlaneseq
  %v75 = vshrl.u32 %v74, 7
  %v76 = vsub.s32 0, %v75
  %v77 = vrot.slane %v49, %v76
  %v78 = vlaneseq
  %v79 = vshrl.u32 %v78, 7
  %v80 = vsub.s32 0, %v79
  %v81 = vrot.slane %v50, %v80
  %v82 = vlaneseq
  %v83 = vshrl.u32 %v82, 7
  %v84 = vsub.s32 0, %v83
  %v85 = vrot.slane %v51, %v84
  %v86 = vlaneseq
  %v87 = vshrl.u32 %v86, 7
  %v88 = vsub.s32 0, %v87
  %v89 = vrot.slane %v52, %v88
  %v90 = vlaneseq
  %v91 = vshrl.u32 %v90, 7
  %v92 = vsub.s32 0, %v91
  %v93 = vrot.slane %v53, %v92
  %v94 = vmul.f32 %v14, %v65
  %v95 = vmul.f32 %v15, %v65
  %v96 = vmul.f32 %v16, %v65
  %v97 = vmul.f32 %v17, %v65
  %v98 = vmul.f32 %v18, %v69
  %v99 = vmul.f32 %v19, %v69
  %v100 = vmul.f32 %v20, %v69
  %v101 = vmul.f32 %v21, %v69
  %v102 = vmul.f32 %v22, %v73
  %v103 = vmul.f32 %v23, %v73
  %v104 = vmul.f32 %v24, %v73
  %v105 = vmul.f32 %v25, %v73
  %v106 = vmul.f32 %v26, %v77
  %v107 = vmul.f32 %v27, %v77
  %v108 = vmul.f32 %v28, %v77
  %v109 = vmul.f32 %v29, %v77
  %v110 = vmul.f32 %v30, %v81
  %v111 = vmul.f32 %v31, %v81
  %v112 = vmul.f32 %v32, %v81
  %v113 = vmul.f32 %v33, %v81
  %v114 = vmul.f32 %v34, %v85
  %v115 = vmul.f32 %v35, %v85
  %v116 = vmul.f32 %v36, %v85
  %v117 = vmul.f32 %v37, %v85
  %v118 = vmul.f32 %v38, %v89
  %v119 = vmul.f32 %v39, %v89
  %v120 = vmul.f32 %v40, %v89
  %v121 = vmul.f32 %v41, %v89
  %v122 = vmul.f32 %v42, %v93
  %v123 = vmul.f32 %v43, %v93
  %v124 = vmul.f32 %v44, %v93
  %v125 = vmul.f32 %v45, %v93
  %vm126 = vcmask 220160
  %v127 = vsel %vm126, %v94, 0.0
  %128 = vadd.xlane.f32.xlu0 %v127
  %v129 = vpop.xlane.xlu0 %128
  %v130 = vsel %vm126, %v95, 0.0
  %131 = vadd.xlane.f32.xlu0 %v130
  %v132 = vpop.xlane.xlu0 %131
  %v133 = vsel %vm126, %v96, 0.0
  %134 = vadd.xlane.f32.xlu0 %v133
  %v135 = vpop.xlane.xlu0 %134
  %vm136 = vcmask 212992
  %v137 = vsel %vm136, %v97, 0.0
  %138 = vadd.xlane.f32.xlu0 %v137
  %v139 = vpop.xlane.xlu0 %138
  %v140 = vsel %vm126, %v98, 0.0
  %141 = vadd.xlane.f32.xlu0 %v140
  %v142 = vpop.xlane.xlu0 %141
  %v143 = vsel %vm126, %v99, 0.0
  %144 = vadd.xlane.f32.xlu0 %v143
  %v145 = vpop.xlane.xlu0 %144
  %v146 = vsel %vm126, %v100, 0.0
  %147 = vadd.xlane.f32.xlu0 %v146
  %v148 = vpop.xlane.xlu0 %147
  %v149 = vsel %vm136, %v101, 0.0
  %150 = vadd.xlane.f32.xlu0 %v149
  %v151 = vpop.xlane.xlu0 %150
  %v152 = vsel %vm126, %v102, 0.0
  %153 = vadd.xlane.f32.xlu0 %v152
  %v154 = vpop.xlane.xlu0 %153
  %v155 = vsel %vm126, %v103, 0.0
  %156 = vadd.xlane.f32.xlu0 %v155
  %v157 = vpop.xlane.xlu0 %156
  %v158 = vsel %vm126, %v104, 0.0
  %159 = vadd.xlane.f32.xlu0 %v158
  %v160 = vpop.xlane.xlu0 %159
  %v161 = vsel %vm136, %v105, 0.0
  %162 = vadd.xlane.f32.xlu0 %v161
  %v163 = vpop.xlane.xlu0 %162
  %v164 = vsel %vm126, %v106, 0.0
  %165 = vadd.xlane.f32.xlu0 %v164
  %v166 = vpop.xlane.xlu0 %165
  %v167 = vsel %vm126, %v107, 0.0
  %168 = vadd.xlane.f32.xlu0 %v167
  %v169 = vpop.xlane.xlu0 %168
  %v170 = vsel %vm126, %v108, 0.0
  %171 = vadd.xlane.f32.xlu0 %v170
  %v172 = vpop.xlane.xlu0 %171
  %v173 = vsel %vm136, %v109, 0.0
  %174 = vadd.xlane.f32.xlu0 %v173
  %v175 = vpop.xlane.xlu0 %174
  %v176 = vsel %vm126, %v110, 0.0
  %177 = vadd.xlane.f32.xlu0 %v176
  %v178 = vpop.xlane.xlu0 %177
  %v179 = vsel %vm126, %v111, 0.0
  %180 = vadd.xlane.f32.xlu0 %v179
  %v181 = vpop.xlane.xlu0 %180
  %v182 = vsel %vm126, %v112, 0.0
  %183 = vadd.xlane.f32.xlu0 %v182
  %v184 = vpop.xlane.xlu0 %183
  %v185 = vsel %vm136, %v113, 0.0
  %186 = vadd.xlane.f32.xlu0 %v185
  %v187 = vpop.xlane.xlu0 %186
  %v188 = vsel %vm126, %v114, 0.0
  %189 = vadd.xlane.f32.xlu0 %v188
  %v190 = vpop.xlane.xlu0 %189
  %v191 = vsel %vm126, %v115, 0.0
  %192 = vadd.xlane.f32.xlu0 %v191
  %v193 = vpop.xlane.xlu0 %192
  %v194 = vsel %vm126, %v116, 0.0
  %195 = vadd.xlane.f32.xlu0 %v194
  %v196 = vpop.xlane.xlu0 %195
  %v197 = vsel %vm136, %v117, 0.0
  %198 = vadd.xlane.f32.xlu0 %v197
  %v199 = vpop.xlane.xlu0 %198
  %v200 = vsel %vm126, %v118, 0.0
  %201 = vadd.xlane.f32.xlu0 %v200
  %v202 = vpop.xlane.xlu0 %201
  %v203 = vsel %vm126, %v119, 0.0
  %204 = vadd.xlane.f32.xlu0 %v203
  %v205 = vpop.xlane.xlu0 %204
  %v206 = vsel %vm126, %v120, 0.0
  %207 = vadd.xlane.f32.xlu0 %v206
  %v208 = vpop.xlane.xlu0 %207
  %v209 = vsel %vm136, %v121, 0.0
  %210 = vadd.xlane.f32.xlu0 %v209
  %v211 = vpop.xlane.xlu0 %210
  %v212 = vsel %vm126, %v122, 0.0
  %213 = vadd.xlane.f32.xlu0 %v212
  %v214 = vpop.xlane.xlu0 %213
  %v215 = vsel %vm126, %v123, 0.0
  %216 = vadd.xlane.f32.xlu0 %v215
  %v217 = vpop.xlane.xlu0 %216
  %v218 = vsel %vm126, %v124, 0.0
  %219 = vadd.xlane.f32.xlu0 %v218
  %v220 = vpop.xlane.xlu0 %219
  %v221 = vsel %vm136, %v125, 0.0
  %222 = vadd.xlane.f32.xlu0 %v221
  %v223 = vpop.xlane.xlu0 %222
  %v232 = vlaneseq
  %v233 = vshrl.u32 %v232, 7
  %v234 = vsub.s32 0, %v233
  %v235 = vrot.slane %v54, %v234
  %v236 = vlaneseq
  %v237 = vshrl.u32 %v236, 7
  %v238 = vsub.s32 0, %v237
  %v239 = vrot.slane %v55, %v238
  %v240 = vlaneseq
  %v241 = vshrl.u32 %v240, 7
  %v242 = vsub.s32 0, %v241
  %v243 = vrot.slane %v56, %v242
  %v244 = vlaneseq
  %v245 = vshrl.u32 %v244, 7
  %v246 = vsub.s32 0, %v245
  %v247 = vrot.slane %v57, %v246
  %v248 = vlaneseq
  %v249 = vshrl.u32 %v248, 7
  %v250 = vsub.s32 0, %v249
  %v251 = vrot.slane %v58, %v250
  %v252 = vlaneseq
  %v253 = vshrl.u32 %v252, 7
  %v254 = vsub.s32 0, %v253
  %v255 = vrot.slane %v59, %v254
  %v256 = vlaneseq
  %v257 = vshrl.u32 %v256, 7
  %v258 = vsub.s32 0, %v257
  %v259 = vrot.slane %v60, %v258
  %v260 = vlaneseq
  %v261 = vshrl.u32 %v260, 7
  %v262 = vsub.s32 0, %v261
  %v263 = vrot.slane %v61, %v262
  %v272 = vadd.f32 %v129, %v235
  %v273 = vadd.f32 %v132, %v235
  %v274 = vadd.f32 %v135, %v235
  %v275 = vadd.f32 %v139, %v235
  %v276 = vadd.f32 %v142, %v239
  %v277 = vadd.f32 %v145, %v239
  %v278 = vadd.f32 %v148, %v239
  %v279 = vadd.f32 %v151, %v239
  %v280 = vadd.f32 %v154, %v243
  %v281 = vadd.f32 %v157, %v243
  %v282 = vadd.f32 %v160, %v243
  %v283 = vadd.f32 %v163, %v243
  %v284 = vadd.f32 %v166, %v247
  %v285 = vadd.f32 %v169, %v247
  %v286 = vadd.f32 %v172, %v247
  %v287 = vadd.f32 %v175, %v247
  %v288 = vadd.f32 %v178, %v251
  %v289 = vadd.f32 %v181, %v251
  %v290 = vadd.f32 %v184, %v251
  %v291 = vadd.f32 %v187, %v251
  %v292 = vadd.f32 %v190, %v255
  %v293 = vadd.f32 %v193, %v255
  %v294 = vadd.f32 %v196, %v255
  %v295 = vadd.f32 %v199, %v255
  %v296 = vadd.f32 %v202, %v259
  %v297 = vadd.f32 %v205, %v259
  %v298 = vadd.f32 %v208, %v259
  %v299 = vadd.f32 %v211, %v259
  %v300 = vadd.f32 %v214, %v263
  %v301 = vadd.f32 %v217, %v263
  %v302 = vadd.f32 %v220, %v263
  %v303 = vadd.f32 %v223, %v263
  %v304 = vlaneseq
  %v305 = vshrl.u32 %v304, 7
  %v306 = vsub.s32 1, %v305
  %v307 = vrot.slane %v46, %v306
  %v308 = vlaneseq
  %v309 = vshrl.u32 %v308, 7
  %v310 = vsub.s32 1, %v309
  %v311 = vrot.slane %v47, %v310
  %v312 = vlaneseq
  %v313 = vshrl.u32 %v312, 7
  %v314 = vsub.s32 1, %v313
  %v315 = vrot.slane %v48, %v314
  %v316 = vlaneseq
  %v317 = vshrl.u32 %v316, 7
  %v318 = vsub.s32 1, %v317
  %v319 = vrot.slane %v49, %v318
  %v320 = vlaneseq
  %v321 = vshrl.u32 %v320, 7
  %v322 = vsub.s32 1, %v321
  %v323 = vrot.slane %v50, %v322
  %v324 = vlaneseq
  %v325 = vshrl.u32 %v324, 7
  %v326 = vsub.s32 1, %v325
  %v327 = vrot.slane %v51, %v326
  %v328 = vlaneseq
  %v329 = vshrl.u32 %v328, 7
  %v330 = vsub.s32 1, %v329
  %v331 = vrot.slane %v52, %v330
  %v332 = vlaneseq
  %v333 = vshrl.u32 %v332, 7
  %v334 = vsub.s32 1, %v333
  %v335 = vrot.slane %v53, %v334
  %v336 = vmul.f32 %v14, %v307
  %v337 = vmul.f32 %v15, %v307
  %v338 = vmul.f32 %v16, %v307
  %v339 = vmul.f32 %v17, %v307
  %v340 = vmul.f32 %v18, %v311
  %v341 = vmul.f32 %v19, %v311
  %v342 = vmul.f32 %v20, %v311
  %v343 = vmul.f32 %v21, %v311
  %v344 = vmul.f32 %v22, %v315
  %v345 = vmul.f32 %v23, %v315
  %v346 = vmul.f32 %v24, %v315
  %v347 = vmul.f32 %v25, %v315
  %v348 = vmul.f32 %v26, %v319
  %v349 = vmul.f32 %v27, %v319
  %v350 = vmul.f32 %v28, %v319
  %v351 = vmul.f32 %v29, %v319
  %v352 = vmul.f32 %v30, %v323
  %v353 = vmul.f32 %v31, %v323
  %v354 = vmul.f32 %v32, %v323
  %v355 = vmul.f32 %v33, %v323
  %v356 = vmul.f32 %v34, %v327
  %v357 = vmul.f32 %v35, %v327
  %v358 = vmul.f32 %v36, %v327
  %v359 = vmul.f32 %v37, %v327
  %v360 = vmul.f32 %v38, %v331
  %v361 = vmul.f32 %v39, %v331
  %v362 = vmul.f32 %v40, %v331
  %v363 = vmul.f32 %v41, %v331
  %v364 = vmul.f32 %v42, %v335
  %v365 = vmul.f32 %v43, %v335
  %v366 = vmul.f32 %v44, %v335
  %v367 = vmul.f32 %v45, %v335
  %v368 = vsel %vm126, %v336, 0.0
  %369 = vadd.xlane.f32.xlu0 %v368
  %v370 = vpop.xlane.xlu0 %369
  %v371 = vsel %vm126, %v337, 0.0
  %372 = vadd.xlane.f32.xlu0 %v371
  %v373 = vpop.xlane.xlu0 %372
  %v374 = vsel %vm126, %v338, 0.0
  %375 = vadd.xlane.f32.xlu0 %v374
  %v376 = vpop.xlane.xlu0 %375
  %v377 = vsel %vm136, %v339, 0.0
  %378 = vadd.xlane.f32.xlu0 %v377
  %v379 = vpop.xlane.xlu0 %378
  %v380 = vsel %vm126, %v340, 0.0
  %381 = vadd.xlane.f32.xlu0 %v380
  %v382 = vpop.xlane.xlu0 %381
  %v383 = vsel %vm126, %v341, 0.0
  %384 = vadd.xlane.f32.xlu0 %v383
  %v385 = vpop.xlane.xlu0 %384
  %v386 = vsel %vm126, %v342, 0.0
  %387 = vadd.xlane.f32.xlu0 %v386
  %v388 = vpop.xlane.xlu0 %387
  %v389 = vsel %vm136, %v343, 0.0
  %390 = vadd.xlane.f32.xlu0 %v389
  %v391 = vpop.xlane.xlu0 %390
  %v392 = vsel %vm126, %v344, 0.0
  %393 = vadd.xlane.f32.xlu0 %v392
  %v394 = vpop.xlane.xlu0 %393
  %v395 = vsel %vm126, %v345, 0.0
  %396 = vadd.xlane.f32.xlu0 %v395
  %v397 = vpop.xlane.xlu0 %396
  %v398 = vsel %vm126, %v346, 0.0
  %399 = vadd.xlane.f32.xlu0 %v398
  %v400 = vpop.xlane.xlu0 %399
  %v401 = vsel %vm136, %v347, 0.0
  %402 = vadd.xlane.f32.xlu0 %v401
  %v403 = vpop.xlane.xlu0 %402
  %v404 = vsel %vm126, %v348, 0.0
  %405 = vadd.xlane.f32.xlu0 %v404
  %v406 = vpop.xlane.xlu0 %405
  %v407 = vsel %vm126, %v349, 0.0
  %408 = vadd.xlane.f32.xlu0 %v407
  %v409 = vpop.xlane.xlu0 %408
  %v410 = vsel %vm126, %v350, 0.0
  %411 = vadd.xlane.f32.xlu0 %v410
  %v412 = vpop.xlane.xlu0 %411
  %v413 = vsel %vm136, %v351, 0.0
  %414 = vadd.xlane.f32.xlu0 %v413
  %v415 = vpop.xlane.xlu0 %414
  %v416 = vsel %vm126, %v352, 0.0
  %417 = vadd.xlane.f32.xlu0 %v416
  %v418 = vpop.xlane.xlu0 %417
  %v419 = vsel %vm126, %v353, 0.0
  %420 = vadd.xlane.f32.xlu0 %v419
  %v421 = vpop.xlane.xlu0 %420
  %v422 = vsel %vm126, %v354, 0.0
  %423 = vadd.xlane.f32.xlu0 %v422
  %v424 = vpop.xlane.xlu0 %423
  %v425 = vsel %vm136, %v355, 0.0
  %426 = vadd.xlane.f32.xlu0 %v425
  %v427 = vpop.xlane.xlu0 %426
  %v428 = vsel %vm126, %v356, 0.0
  %429 = vadd.xlane.f32.xlu0 %v428
  %v430 = vpop.xlane.xlu0 %429
  %v431 = vsel %vm126, %v357, 0.0
  %432 = vadd.xlane.f32.xlu0 %v431
  %v433 = vpop.xlane.xlu0 %432
  %v434 = vsel %vm126, %v358, 0.0
  %435 = vadd.xlane.f32.xlu0 %v434
  %v436 = vpop.xlane.xlu0 %435
  %v437 = vsel %vm136, %v359, 0.0
  %438 = vadd.xlane.f32.xlu0 %v437
  %v439 = vpop.xlane.xlu0 %438
  %v440 = vsel %vm126, %v360, 0.0
  %441 = vadd.xlane.f32.xlu0 %v440
  %v442 = vpop.xlane.xlu0 %441
  %v443 = vsel %vm126, %v361, 0.0
  %444 = vadd.xlane.f32.xlu0 %v443
  %v445 = vpop.xlane.xlu0 %444
  %v446 = vsel %vm126, %v362, 0.0
  %447 = vadd.xlane.f32.xlu0 %v446
  %v448 = vpop.xlane.xlu0 %447
  %v449 = vsel %vm136, %v363, 0.0
  %450 = vadd.xlane.f32.xlu0 %v449
  %v451 = vpop.xlane.xlu0 %450
  %v452 = vsel %vm126, %v364, 0.0
  %453 = vadd.xlane.f32.xlu0 %v452
  %v454 = vpop.xlane.xlu0 %453
  %v455 = vsel %vm126, %v365, 0.0
  %456 = vadd.xlane.f32.xlu0 %v455
  %v457 = vpop.xlane.xlu0 %456
  %v458 = vsel %vm126, %v366, 0.0
  %459 = vadd.xlane.f32.xlu0 %v458
  %v460 = vpop.xlane.xlu0 %459
  %v461 = vsel %vm136, %v367, 0.0
  %462 = vadd.xlane.f32.xlu0 %v461
  %v463 = vpop.xlane.xlu0 %462
  %v464 = vadd.f32 %v370, %v235
  %v465 = vadd.f32 %v373, %v235
  %v466 = vadd.f32 %v376, %v235
  %v467 = vadd.f32 %v379, %v235
  %v468 = vadd.f32 %v382, %v239
  %v469 = vadd.f32 %v385, %v239
  %v470 = vadd.f32 %v388, %v239
  %v471 = vadd.f32 %v391, %v239
  %v472 = vadd.f32 %v394, %v243
  %v473 = vadd.f32 %v397, %v243
  %v474 = vadd.f32 %v400, %v243
  %v475 = vadd.f32 %v403, %v243
  %v476 = vadd.f32 %v406, %v247
  %v477 = vadd.f32 %v409, %v247
  %v478 = vadd.f32 %v412, %v247
  %v479 = vadd.f32 %v415, %v247
  %v480 = vadd.f32 %v418, %v251
  %v481 = vadd.f32 %v421, %v251
  %v482 = vadd.f32 %v424, %v251
  %v483 = vadd.f32 %v427, %v251
  %v484 = vadd.f32 %v430, %v255
  %v485 = vadd.f32 %v433, %v255
  %v486 = vadd.f32 %v436, %v255
  %v487 = vadd.f32 %v439, %v255
  %v488 = vadd.f32 %v442, %v259
  %v489 = vadd.f32 %v445, %v259
  %v490 = vadd.f32 %v448, %v259
  %v491 = vadd.f32 %v451, %v259
  %v492 = vadd.f32 %v454, %v263
  %v493 = vadd.f32 %v457, %v263
  %v494 = vadd.f32 %v460, %v263
  %v495 = vadd.f32 %v463, %v263
  %v496 = vlaneseq
  %v497 = vshrl.u32 %v496, 7
  %v498 = vsub.s32 2, %v497
  %v499 = vrot.slane %v46, %v498
  %v500 = vlaneseq
  %v501 = vshrl.u32 %v500, 7
  %v502 = vsub.s32 2, %v501
  %v503 = vrot.slane %v47, %v502
  %v504 = vlaneseq
  %v505 = vshrl.u32 %v504, 7
  %v506 = vsub.s32 2, %v505
  %v507 = vrot.slane %v48, %v506
  %v508 = vlaneseq
  %v509 = vshrl.u32 %v508, 7
  %v510 = vsub.s32 2, %v509
  %v511 = vrot.slane %v49, %v510
  %v512 = vlaneseq
  %v513 = vshrl.u32 %v512, 7
  %v514 = vsub.s32 2, %v513
  %v515 = vrot.slane %v50, %v514
  %v516 = vlaneseq
  %v517 = vshrl.u32 %v516, 7
  %v518 = vsub.s32 2, %v517
  %v519 = vrot.slane %v51, %v518
  %v520 = vlaneseq
  %v521 = vshrl.u32 %v520, 7
  %v522 = vsub.s32 2, %v521
  %v523 = vrot.slane %v52, %v522
  %v524 = vlaneseq
  %v525 = vshrl.u32 %v524, 7
  %v526 = vsub.s32 2, %v525
  %v527 = vrot.slane %v53, %v526
  %v528 = vmul.f32 %v14, %v499
  %v529 = vmul.f32 %v15, %v499
  %v530 = vmul.f32 %v16, %v499
  %v531 = vmul.f32 %v17, %v499
  %v532 = vmul.f32 %v18, %v503
  %v533 = vmul.f32 %v19, %v503
  %v534 = vmul.f32 %v20, %v503
  %v535 = vmul.f32 %v21, %v503
  %v536 = vmul.f32 %v22, %v507
  %v537 = vmul.f32 %v23, %v507
  %v538 = vmul.f32 %v24, %v507
  %v539 = vmul.f32 %v25, %v507
  %v540 = vmul.f32 %v26, %v511
  %v541 = vmul.f32 %v27, %v511
  %v542 = vmul.f32 %v28, %v511
  %v543 = vmul.f32 %v29, %v511
  %v544 = vmul.f32 %v30, %v515
  %v545 = vmul.f32 %v31, %v515
  %v546 = vmul.f32 %v32, %v515
  %v547 = vmul.f32 %v33, %v515
  %v548 = vmul.f32 %v34, %v519
  %v549 = vmul.f32 %v35, %v519
  %v550 = vmul.f32 %v36, %v519
  %v551 = vmul.f32 %v37, %v519
  %v552 = vmul.f32 %v38, %v523
  %v553 = vmul.f32 %v39, %v523
  %v554 = vmul.f32 %v40, %v523
  %v555 = vmul.f32 %v41, %v523
  %v556 = vmul.f32 %v42, %v527
  %v557 = vmul.f32 %v43, %v527
  %v558 = vmul.f32 %v44, %v527
  %v559 = vmul.f32 %v45, %v527
  %v560 = vsel %vm126, %v528, 0.0
  %561 = vadd.xlane.f32.xlu0 %v560
  %v562 = vpop.xlane.xlu0 %561
  %v563 = vsel %vm126, %v529, 0.0
  %564 = vadd.xlane.f32.xlu0 %v563
  %v565 = vpop.xlane.xlu0 %564
  %v566 = vsel %vm126, %v530, 0.0
  %567 = vadd.xlane.f32.xlu0 %v566
  %v568 = vpop.xlane.xlu0 %567
  %v569 = vsel %vm136, %v531, 0.0
  %570 = vadd.xlane.f32.xlu0 %v569
  %v571 = vpop.xlane.xlu0 %570
  %v572 = vsel %vm126, %v532, 0.0
  %573 = vadd.xlane.f32.xlu0 %v572
  %v574 = vpop.xlane.xlu0 %573
  %v575 = vsel %vm126, %v533, 0.0
  %576 = vadd.xlane.f32.xlu0 %v575
  %v577 = vpop.xlane.xlu0 %576
  %v578 = vsel %vm126, %v534, 0.0
  %579 = vadd.xlane.f32.xlu0 %v578
  %v580 = vpop.xlane.xlu0 %579
  %v581 = vsel %vm136, %v535, 0.0
  %582 = vadd.xlane.f32.xlu0 %v581
  %v583 = vpop.xlane.xlu0 %582
  %v584 = vsel %vm126, %v536, 0.0
  %585 = vadd.xlane.f32.xlu0 %v584
  %v586 = vpop.xlane.xlu0 %585
  %v587 = vsel %vm126, %v537, 0.0
  %588 = vadd.xlane.f32.xlu0 %v587
  %v589 = vpop.xlane.xlu0 %588
  %v590 = vsel %vm126, %v538, 0.0
  %591 = vadd.xlane.f32.xlu0 %v590
  %v592 = vpop.xlane.xlu0 %591
  %v593 = vsel %vm136, %v539, 0.0
  %594 = vadd.xlane.f32.xlu0 %v593
  %v595 = vpop.xlane.xlu0 %594
  %v596 = vsel %vm126, %v540, 0.0
  %597 = vadd.xlane.f32.xlu0 %v596
  %v598 = vpop.xlane.xlu0 %597
  %v599 = vsel %vm126, %v541, 0.0
  %600 = vadd.xlane.f32.xlu0 %v599
  %v601 = vpop.xlane.xlu0 %600
  %v602 = vsel %vm126, %v542, 0.0
  %603 = vadd.xlane.f32.xlu0 %v602
  %v604 = vpop.xlane.xlu0 %603
  %v605 = vsel %vm136, %v543, 0.0
  %606 = vadd.xlane.f32.xlu0 %v605
  %v607 = vpop.xlane.xlu0 %606
  %v608 = vsel %vm126, %v544, 0.0
  %609 = vadd.xlane.f32.xlu0 %v608
  %v610 = vpop.xlane.xlu0 %609
  %v611 = vsel %vm126, %v545, 0.0
  %612 = vadd.xlane.f32.xlu0 %v611
  %v613 = vpop.xlane.xlu0 %612
  %v614 = vsel %vm126, %v546, 0.0
  %615 = vadd.xlane.f32.xlu0 %v614
  %v616 = vpop.xlane.xlu0 %615
  %v617 = vsel %vm136, %v547, 0.0
  %618 = vadd.xlane.f32.xlu0 %v617
  %v619 = vpop.xlane.xlu0 %618
  %v620 = vsel %vm126, %v548, 0.0
  %621 = vadd.xlane.f32.xlu0 %v620
  %v622 = vpop.xlane.xlu0 %621
  %v623 = vsel %vm126, %v549, 0.0
  %624 = vadd.xlane.f32.xlu0 %v623
  %v625 = vpop.xlane.xlu0 %624
  %v626 = vsel %vm126, %v550, 0.0
  %627 = vadd.xlane.f32.xlu0 %v626
  %v628 = vpop.xlane.xlu0 %627
  %v629 = vsel %vm136, %v551, 0.0
  %630 = vadd.xlane.f32.xlu0 %v629
  %v631 = vpop.xlane.xlu0 %630
  %v632 = vsel %vm126, %v552, 0.0
  %633 = vadd.xlane.f32.xlu0 %v632
  %v634 = vpop.xlane.xlu0 %633
  %v635 = vsel %vm126, %v553, 0.0
  %636 = vadd.xlane.f32.xlu0 %v635
  %v637 = vpop.xlane.xlu0 %636
  %v638 = vsel %vm126, %v554, 0.0
  %639 = vadd.xlane.f32.xlu0 %v638
  %v640 = vpop.xlane.xlu0 %639
  %v641 = vsel %vm136, %v555, 0.0
  %642 = vadd.xlane.f32.xlu0 %v641
  %v643 = vpop.xlane.xlu0 %642
  %v644 = vsel %vm126, %v556, 0.0
  %645 = vadd.xlane.f32.xlu0 %v644
  %v646 = vpop.xlane.xlu0 %645
  %v647 = vsel %vm126, %v557, 0.0
  %648 = vadd.xlane.f32.xlu0 %v647
  %v649 = vpop.xlane.xlu0 %648
  %v650 = vsel %vm126, %v558, 0.0
  %651 = vadd.xlane.f32.xlu0 %v650
  %v652 = vpop.xlane.xlu0 %651
  %v653 = vsel %vm136, %v559, 0.0
  %654 = vadd.xlane.f32.xlu0 %v653
  %v655 = vpop.xlane.xlu0 %654
  %v656 = vadd.f32 %v562, %v235
  %v657 = vadd.f32 %v565, %v235
  %v658 = vadd.f32 %v568, %v235
  %v659 = vadd.f32 %v571, %v235
  %v660 = vadd.f32 %v574, %v239
  %v661 = vadd.f32 %v577, %v239
  %v662 = vadd.f32 %v580, %v239
  %v663 = vadd.f32 %v583, %v239
  %v664 = vadd.f32 %v586, %v243
  %v665 = vadd.f32 %v589, %v243
  %v666 = vadd.f32 %v592, %v243
  %v667 = vadd.f32 %v595, %v243
  %v668 = vadd.f32 %v598, %v247
  %v669 = vadd.f32 %v601, %v247
  %v670 = vadd.f32 %v604, %v247
  %v671 = vadd.f32 %v607, %v247
  %v672 = vadd.f32 %v610, %v251
  %v673 = vadd.f32 %v613, %v251
  %v674 = vadd.f32 %v616, %v251
  %v675 = vadd.f32 %v619, %v251
  %v676 = vadd.f32 %v622, %v255
  %v677 = vadd.f32 %v625, %v255
  %v678 = vadd.f32 %v628, %v255
  %v679 = vadd.f32 %v631, %v255
  %v680 = vadd.f32 %v634, %v259
  %v681 = vadd.f32 %v637, %v259
  %v682 = vadd.f32 %v640, %v259
  %v683 = vadd.f32 %v643, %v259
  %v684 = vadd.f32 %v646, %v263
  %v685 = vadd.f32 %v649, %v263
  %v686 = vadd.f32 %v652, %v263
  %v687 = vadd.f32 %v655, %v263
  %v688 = vlaneseq
  %v689 = vshrl.u32 %v688, 7
  %v690 = vsub.s32 3, %v689
  %v691 = vrot.slane %v46, %v690
  %v692 = vlaneseq
  %v693 = vshrl.u32 %v692, 7
  %v694 = vsub.s32 3, %v693
  %v695 = vrot.slane %v47, %v694
  %v696 = vlaneseq
  %v697 = vshrl.u32 %v696, 7
  %v698 = vsub.s32 3, %v697
  %v699 = vrot.slane %v48, %v698
  %v700 = vlaneseq
  %v701 = vshrl.u32 %v700, 7
  %v702 = vsub.s32 3, %v701
  %v703 = vrot.slane %v49, %v702
  %v704 = vlaneseq
  %v705 = vshrl.u32 %v704, 7
  %v706 = vsub.s32 3, %v705
  %v707 = vrot.slane %v50, %v706
  %v708 = vlaneseq
  %v709 = vshrl.u32 %v708, 7
  %v710 = vsub.s32 3, %v709
  %v711 = vrot.slane %v51, %v710
  %v712 = vlaneseq
  %v713 = vshrl.u32 %v712, 7
  %v714 = vsub.s32 3, %v713
  %v715 = vrot.slane %v52, %v714
  %v716 = vlaneseq
  %v717 = vshrl.u32 %v716, 7
  %v718 = vsub.s32 3, %v717
  %v719 = vrot.slane %v53, %v718
  %v720 = vmul.f32 %v14, %v691
  %v721 = vmul.f32 %v15, %v691
  %v722 = vmul.f32 %v16, %v691
  %v723 = vmul.f32 %v17, %v691
  %v724 = vmul.f32 %v18, %v695
  %v725 = vmul.f32 %v19, %v695
  %v726 = vmul.f32 %v20, %v695
  %v727 = vmul.f32 %v21, %v695
  %v728 = vmul.f32 %v22, %v699
  %v729 = vmul.f32 %v23, %v699
  %v730 = vmul.f32 %v24, %v699
  %v731 = vmul.f32 %v25, %v699
  %v732 = vmul.f32 %v26, %v703
  %v733 = vmul.f32 %v27, %v703
  %v734 = vmul.f32 %v28, %v703
  %v735 = vmul.f32 %v29, %v703
  %v736 = vmul.f32 %v30, %v707
  %v737 = vmul.f32 %v31, %v707
  %v738 = vmul.f32 %v32, %v707
  %v739 = vmul.f32 %v33, %v707
  %v740 = vmul.f32 %v34, %v711
  %v741 = vmul.f32 %v35, %v711
  %v742 = vmul.f32 %v36, %v711
  %v743 = vmul.f32 %v37, %v711
  %v744 = vmul.f32 %v38, %v715
  %v745 = vmul.f32 %v39, %v715
  %v746 = vmul.f32 %v40, %v715
  %v747 = vmul.f32 %v41, %v715
  %v748 = vmul.f32 %v42, %v719
  %v749 = vmul.f32 %v43, %v719
  %v750 = vmul.f32 %v44, %v719
  %v751 = vmul.f32 %v45, %v719
  %v752 = vsel %vm126, %v720, 0.0
  %753 = vadd.xlane.f32.xlu0 %v752
  %v754 = vpop.xlane.xlu0 %753
  %v755 = vsel %vm126, %v721, 0.0
  %756 = vadd.xlane.f32.xlu0 %v755
  %v757 = vpop.xlane.xlu0 %756
  %v758 = vsel %vm126, %v722, 0.0
  %759 = vadd.xlane.f32.xlu0 %v758
  %v760 = vpop.xlane.xlu0 %759
  %v761 = vsel %vm136, %v723, 0.0
  %762 = vadd.xlane.f32.xlu0 %v761
  %v763 = vpop.xlane.xlu0 %762
  %v764 = vsel %vm126, %v724, 0.0
  %765 = vadd.xlane.f32.xlu0 %v764
  %v766 = vpop.xlane.xlu0 %765
  %v767 = vsel %vm126, %v725, 0.0
  %768 = vadd.xlane.f32.xlu0 %v767
  %v769 = vpop.xlane.xlu0 %768
  %v770 = vsel %vm126, %v726, 0.0
  %771 = vadd.xlane.f32.xlu0 %v770
  %v772 = vpop.xlane.xlu0 %771
  %v773 = vsel %vm136, %v727, 0.0
  %774 = vadd.xlane.f32.xlu0 %v773
  %v775 = vpop.xlane.xlu0 %774
  %v776 = vsel %vm126, %v728, 0.0
  %777 = vadd.xlane.f32.xlu0 %v776
  %v778 = vpop.xlane.xlu0 %777
  %v779 = vsel %vm126, %v729, 0.0
  %780 = vadd.xlane.f32.xlu0 %v779
  %v781 = vpop.xlane.xlu0 %780
  %v782 = vsel %vm126, %v730, 0.0
  %783 = vadd.xlane.f32.xlu0 %v782
  %v784 = vpop.xlane.xlu0 %783
  %v785 = vsel %vm136, %v731, 0.0
  %786 = vadd.xlane.f32.xlu0 %v785
  %v787 = vpop.xlane.xlu0 %786
  %v788 = vsel %vm126, %v732, 0.0
  %789 = vadd.xlane.f32.xlu0 %v788
  %v790 = vpop.xlane.xlu0 %789
  %v791 = vsel %vm126, %v733, 0.0
  %792 = vadd.xlane.f32.xlu0 %v791
  %v793 = vpop.xlane.xlu0 %792
  %v794 = vsel %vm126, %v734, 0.0
  %795 = vadd.xlane.f32.xlu0 %v794
  %v796 = vpop.xlane.xlu0 %795
  %v797 = vsel %vm136, %v735, 0.0
  %798 = vadd.xlane.f32.xlu0 %v797
  %v799 = vpop.xlane.xlu0 %798
  %v800 = vsel %vm126, %v736, 0.0
  %801 = vadd.xlane.f32.xlu0 %v800
  %v802 = vpop.xlane.xlu0 %801
  %v803 = vsel %vm126, %v737, 0.0
  %804 = vadd.xlane.f32.xlu0 %v803
  %v805 = vpop.xlane.xlu0 %804
  %v806 = vsel %vm126, %v738, 0.0
  %807 = vadd.xlane.f32.xlu0 %v806
  %v808 = vpop.xlane.xlu0 %807
  %v809 = vsel %vm136, %v739, 0.0
  %810 = vadd.xlane.f32.xlu0 %v809
  %v811 = vpop.xlane.xlu0 %810
  %v812 = vsel %vm126, %v740, 0.0
  %813 = vadd.xlane.f32.xlu0 %v812
  %v814 = vpop.xlane.xlu0 %813
  %v815 = vsel %vm126, %v741, 0.0
  %816 = vadd.xlane.f32.xlu0 %v815
  %v817 = vpop.xlane.xlu0 %816
  %v818 = vsel %vm126, %v742, 0.0
  %819 = vadd.xlane.f32.xlu0 %v818
  %v820 = vpop.xlane.xlu0 %819
  %v821 = vsel %vm136, %v743, 0.0
  %822 = vadd.xlane.f32.xlu0 %v821
  %v823 = vpop.xlane.xlu0 %822
  %v824 = vsel %vm126, %v744, 0.0
  %825 = vadd.xlane.f32.xlu0 %v824
  %v826 = vpop.xlane.xlu0 %825
  %v827 = vsel %vm126, %v745, 0.0
  %828 = vadd.xlane.f32.xlu0 %v827
  %v829 = vpop.xlane.xlu0 %828
  %v830 = vsel %vm126, %v746, 0.0
  %831 = vadd.xlane.f32.xlu0 %v830
  %v832 = vpop.xlane.xlu0 %831
  %v833 = vsel %vm136, %v747, 0.0
  %834 = vadd.xlane.f32.xlu0 %v833
  %v835 = vpop.xlane.xlu0 %834
  %v836 = vsel %vm126, %v748, 0.0
  %837 = vadd.xlane.f32.xlu0 %v836
  %v838 = vpop.xlane.xlu0 %837
  %v839 = vsel %vm126, %v749, 0.0
  %840 = vadd.xlane.f32.xlu0 %v839
  %v841 = vpop.xlane.xlu0 %840
  %v842 = vsel %vm126, %v750, 0.0
  %843 = vadd.xlane.f32.xlu0 %v842
  %v844 = vpop.xlane.xlu0 %843
  %v845 = vsel %vm136, %v751, 0.0
  %846 = vadd.xlane.f32.xlu0 %v845
  %v847 = vpop.xlane.xlu0 %846
  %v848 = vadd.f32 %v754, %v235
  %v849 = vadd.f32 %v757, %v235
  %v850 = vadd.f32 %v760, %v235
  %v851 = vadd.f32 %v763, %v235
  %v852 = vadd.f32 %v766, %v239
  %v853 = vadd.f32 %v769, %v239
  %v854 = vadd.f32 %v772, %v239
  %v855 = vadd.f32 %v775, %v239
  %v856 = vadd.f32 %v778, %v243
  %v857 = vadd.f32 %v781, %v243
  %v858 = vadd.f32 %v784, %v243
  %v859 = vadd.f32 %v787, %v243
  %v860 = vadd.f32 %v790, %v247
  %v861 = vadd.f32 %v793, %v247
  %v862 = vadd.f32 %v796, %v247
  %v863 = vadd.f32 %v799, %v247
  %v864 = vadd.f32 %v802, %v251
  %v865 = vadd.f32 %v805, %v251
  %v866 = vadd.f32 %v808, %v251
  %v867 = vadd.f32 %v811, %v251
  %v868 = vadd.f32 %v814, %v255
  %v869 = vadd.f32 %v817, %v255
  %v870 = vadd.f32 %v820, %v255
  %v871 = vadd.f32 %v823, %v255
  %v872 = vadd.f32 %v826, %v259
  %v873 = vadd.f32 %v829, %v259
  %v874 = vadd.f32 %v832, %v259
  %v875 = vadd.f32 %v835, %v259
  %v876 = vadd.f32 %v838, %v263
  %v877 = vadd.f32 %v841, %v263
  %v878 = vadd.f32 %v844, %v263
  %v879 = vadd.f32 %v847, %v263
  %vm880 = vcmask 7168
  %v881 = vsel %vm880, %v272, %v464
  %v882 = vsel %vm880, %v273, %v465
  %v883 = vsel %vm880, %v274, %v466
  %v884 = vsel %vm880, %v275, %v467
  %v885 = vsel %vm880, %v276, %v468
  %v886 = vsel %vm880, %v277, %v469
  %v887 = vsel %vm880, %v278, %v470
  %v888 = vsel %vm880, %v279, %v471
  %v889 = vsel %vm880, %v280, %v472
  %v890 = vsel %vm880, %v281, %v473
  %v891 = vsel %vm880, %v282, %v474
  %v892 = vsel %vm880, %v283, %v475
  %v893 = vsel %vm880, %v284, %v476
  %v894 = vsel %vm880, %v285, %v477
  %v895 = vsel %vm880, %v286, %v478
  %v896 = vsel %vm880, %v287, %v479
  %v897 = vsel %vm880, %v288, %v480
  %v898 = vsel %vm880, %v289, %v481
  %v899 = vsel %vm880, %v290, %v482
  %v900 = vsel %vm880, %v291, %v483
  %v901 = vsel %vm880, %v292, %v484
  %v902 = vsel %vm880, %v293, %v485
  %v903 = vsel %vm880, %v294, %v486
  %v904 = vsel %vm880, %v295, %v487
  %v905 = vsel %vm880, %v296, %v488
  %v906 = vsel %vm880, %v297, %v489
  %v907 = vsel %vm880, %v298, %v490
  %v908 = vsel %vm880, %v299, %v491
  %v909 = vsel %vm880, %v300, %v492
  %v910 = vsel %vm880, %v301, %v493
  %v911 = vsel %vm880, %v302, %v494
  %v912 = vsel %vm880, %v303, %v495
  %vm913 = vcmask 15360
  %v914 = vsel %vm913, %v881, %v656
  %v915 = vsel %vm913, %v882, %v657
  %v916 = vsel %vm913, %v883, %v658
  %v917 = vsel %vm913, %v884, %v659
  %v918 = vsel %vm913, %v885, %v660
  %v919 = vsel %vm913, %v886, %v661
  %v920 = vsel %vm913, %v887, %v662
  %v921 = vsel %vm913, %v888, %v663
  %v922 = vsel %vm913, %v889, %v664
  %v923 = vsel %vm913, %v890, %v665
  %v924 = vsel %vm913, %v891, %v666
  %v925 = vsel %vm913, %v892, %v667
  %v926 = vsel %vm913, %v893, %v668
  %v927 = vsel %vm913, %v894, %v669
  %v928 = vsel %vm913, %v895, %v670
  %v929 = vsel %vm913, %v896, %v671
  %v930 = vsel %vm913, %v897, %v672
  %v931 = vsel %vm913, %v898, %v673
  %v932 = vsel %vm913, %v899, %v674
  %v933 = vsel %vm913, %v900, %v675
  %v934 = vsel %vm913, %v901, %v676
  %v935 = vsel %vm913, %v902, %v677
  %v936 = vsel %vm913, %v903, %v678
  %v937 = vsel %vm913, %v904, %v679
  %v938 = vsel %vm913, %v905, %v680
  %v939 = vsel %vm913, %v906, %v681
  %v940 = vsel %vm913, %v907, %v682
  %v941 = vsel %vm913, %v908, %v683
  %v942 = vsel %vm913, %v909, %v684
  %v943 = vsel %vm913, %v910, %v685
  %v944 = vsel %vm913, %v911, %v686
  %v945 = vsel %vm913, %v912, %v687
  %vm946 = vcmask 23552
  %v947 = vsel %vm946, %v914, %v848
  %v948 = vsel %vm946, %v915, %v849
  %v949 = vsel %vm946, %v916, %v850
  %v950 = vsel %vm946, %v917, %v851
  %v951 = vsel %vm946, %v918, %v852
  %v952 = vsel %vm946, %v919, %v853
  %v953 = vsel %vm946, %v920, %v854
  %v954 = vsel %vm946, %v921, %v855
  %v955 = vsel %vm946, %v922, %v856
  %v956 = vsel %vm946, %v923, %v857
  %v957 = vsel %vm946, %v924, %v858
  %v958 = vsel %vm946, %v925, %v859
  %v959 = vsel %vm946, %v926, %v860
  %v960 = vsel %vm946, %v927, %v861
  %v961 = vsel %vm946, %v928, %v862
  %v962 = vsel %vm946, %v929, %v863
  %v963 = vsel %vm946, %v930, %v864
  %v964 = vsel %vm946, %v931, %v865
  %v965 = vsel %vm946, %v932, %v866
  %v966 = vsel %vm946, %v933, %v867
  %v967 = vsel %vm946, %v934, %v868
  %v968 = vsel %vm946, %v935, %v869
  %v969 = vsel %vm946, %v936, %v870
  %v970 = vsel %vm946, %v937, %v871
  %v971 = vsel %vm946, %v938, %v872
  %v972 = vsel %vm946, %v939, %v873
  %v973 = vsel %vm946, %v940, %v874
  %v974 = vsel %vm946, %v941, %v875
  %v975 = vsel %vm946, %v942, %v876
  %v976 = vsel %vm946, %v943, %v877
  %v977 = vsel %vm946, %v944, %v878
  %v978 = vsel %vm946, %v945, %v879
  %v979 = vmax.f32 %v947, 0.0
  %v980 = vmax.f32 %v948, 0.0
  %v981 = vmax.f32 %v949, 0.0
  %v982 = vmax.f32 %v950, 0.0
  %v983 = vmax.f32 %v951, 0.0
  %v984 = vmax.f32 %v952, 0.0
  %v985 = vmax.f32 %v953, 0.0
  %v986 = vmax.f32 %v954, 0.0
  %v987 = vmax.f32 %v955, 0.0
  %v988 = vmax.f32 %v956, 0.0
  %v989 = vmax.f32 %v957, 0.0
  %v990 = vmax.f32 %v958, 0.0
  %v991 = vmax.f32 %v959, 0.0
  %v992 = vmax.f32 %v960, 0.0
  %v993 = vmax.f32 %v961, 0.0
  %v994 = vmax.f32 %v962, 0.0
  %v995 = vmax.f32 %v963, 0.0
  %v996 = vmax.f32 %v964, 0.0
  %v997 = vmax.f32 %v965, 0.0
  %v998 = vmax.f32 %v966, 0.0
  %v999 = vmax.f32 %v967, 0.0
  %v1000 = vmax.f32 %v968, 0.0
  %v1001 = vmax.f32 %v969, 0.0
  %v1002 = vmax.f32 %v970, 0.0
  %v1003 = vmax.f32 %v971, 0.0
  %v1004 = vmax.f32 %v972, 0.0
  %v1005 = vmax.f32 %v973, 0.0
  %v1006 = vmax.f32 %v974, 0.0
  %v1007 = vmax.f32 %v975, 0.0
  %v1008 = vmax.f32 %v976, 0.0
  %v1009 = vmax.f32 %v977, 0.0
  %v1010 = vmax.f32 %v978, 0.0
  %vm1011 = vcmask 31744
  %1012 = vst.msk [vmem:[%s3] sm:$0xff] %vm1011, %v979
  %1013 = vst.msk [vmem:[%s3 + $0x8] sm:$0xff] %vm1011, %v980
  %1014 = vst.msk [vmem:[%s3 + $0x10] sm:$0xff] %vm1011, %v981
  %vm1015 = vcmask 24576
  %1016 = vst.msk [vmem:[%s3 + $0x18] sm:$0x1] %vm1015, %v982
  %1017 = vst.msk [vmem:[%s3 + $0x20] sm:$0xff] %vm1011, %v983
  %1018 = vst.msk [vmem:[%s3 + $0x28] sm:$0xff] %vm1011, %v984
  %1019 = vst.msk [vmem:[%s3 + $0x30] sm:$0xff] %vm1011, %v985
  %1020 = vst.msk [vmem:[%s3 + $0x38] sm:$0x1] %vm1015, %v986
  %1021 = vst.msk [vmem:[%s3 + $0x40] sm:$0xff] %vm1011, %v987
  %1022 = vst.msk [vmem:[%s3 + $0x48] sm:$0xff] %vm1011, %v988
  %1023 = vst.msk [vmem:[%s3 + $0x50] sm:$0xff] %vm1011, %v989
  %1024 = vst.msk [vmem:[%s3 + $0x58] sm:$0x1] %vm1015, %v990
  %1025 = vst.msk [vmem:[%s3 + $0x60] sm:$0xff] %vm1011, %v991
  %1026 = vst.msk [vmem:[%s3 + $0x68] sm:$0xff] %vm1011, %v992
  %1027 = vst.msk [vmem:[%s3 + $0x70] sm:$0xff] %vm1011, %v993
  %1028 = vst.msk [vmem:[%s3 + $0x78] sm:$0x1] %vm1015, %v994
  %1029 = vst.msk [vmem:[%s3 + $0x80] sm:$0xff] %vm1011, %v995
  %1030 = vst.msk [vmem:[%s3 + $0x88] sm:$0xff] %vm1011, %v996
  %1031 = vst.msk [vmem:[%s3 + $0x90] sm:$0xff] %vm1011, %v997
  %1032 = vst.msk [vmem:[%s3 + $0x98] sm:$0x1] %vm1015, %v998
  %1033 = vst.msk [vmem:[%s3 + $0xa0] sm:$0xff] %vm1011, %v999
  %1034 = vst.msk [vmem:[%s3 + $0xa8] sm:$0xff] %vm1011, %v1000
  %1035 = vst.msk [vmem:[%s3 + $0xb0] sm:$0xff] %vm1011, %v1001
  %1036 = vst.msk [vmem:[%s3 + $0xb8] sm:$0x1] %vm1015, %v1002
  %1037 = vst.msk [vmem:[%s3 + $0xc0] sm:$0xff] %vm1011, %v1003
  %1038 = vst.msk [vmem:[%s3 + $0xc8] sm:$0xff] %vm1011, %v1004
  %1039 = vst.msk [vmem:[%s3 + $0xd0] sm:$0xff] %vm1011, %v1005
  %1040 = vst.msk [vmem:[%s3 + $0xd8] sm:$0x1] %vm1015, %v1006
  %1041 = vst.msk [vmem:[%s3 + $0xe0] sm:$0xff] %vm1011, %v1007
  %1042 = vst.msk [vmem:[%s3 + $0xe8] sm:$0xff] %vm1011, %v1008
  %1043 = vst.msk [vmem:[%s3 + $0xf0] sm:$0xff] %vm1011, %v1009
  %1044 = vst.msk [vmem:[%s3 + $0xf8] sm:$0x1] %vm1015, %v1010
  // Predicated region
  $region14: #{sr_model_forward.8} parent=0 // pred_check
    _
  $region15: #{sr_model_forward.8} parent=0 // pred_check_branch
    %1046 = sbr.rel (0) target = $region17
  $region16: #{sr_model_forward.8} parent=0 // pred_region
    _
  $region17: #{sr_model_forward.8} parent=0 // pred_fallthru
    _
  // Predicated region
  $region18: #{sr_model_forward.8} parent=0 // pred_check
    _
  $region19: #{sr_model_forward.8} parent=0 // pred_check_branch
    %1048 = sbr.rel (0) target = $region21
  $region20: #{sr_model_forward.8} parent=0 // pred_region
    _
  $region21: #{sr_model_forward.8} parent=0 // pred_fallthru
    _

// kernel: sr_model_forward.9
$region0: #{sr_model_forward.9}
  #allocation0 [shape = 'u32[]', space=smem, size = 0x4, offset = 0x4, fixed_abs, tag = 'smem constant byte address 0x4 - core index']
  #allocation1 [shape = 'u32[144,128]{1,0:T(1,128)}', space=vmem, size = 0x12000, scoped, tag = 'internal scratch']
  %s0 = inlined_call_operand.vmem [shape: bf16[200,100], index: 0, kind: input, shape index: {}]
  %s1 = inlined_call_operand.vmem [shape: bf16[100,128], index: 1, kind: input, shape index: {}]
  %s2 = inlined_call_operand.vmem [shape: f32[1,128], index: 2, kind: input, shape index: {}]
  %s3 = inlined_call_operand.vmem [shape: f32[200,128], index: 3, kind: output, shape index: {}]
  %s4 = sld [smem:[#allocation0]]
  $region22: #{sr_model_forward.9} parent=0
    _
  %s6 = ssub.s32 1, %s4
  %s7 = scalar_select 0, %s6, %s4
  // Predicated region
  $region2: #{sr_model_forward.9} parent=0 // pred_check
    _
  $region3: #{sr_model_forward.9} parent=0 // pred_check_branch
    %9 = sbr.rel (0) target = $region5
  $region4: #{sr_model_forward.9} parent=0 // pred_region
    _
  $region5: #{sr_model_forward.9} parent=0 // pred_fallthru
    _
  // Predicated region
  $region6: #{sr_model_forward.9} parent=0 // pred_check
    _
  $region7: #{sr_model_forward.9} parent=0 // pred_check_branch
    %11 = sbr.rel (0) target = $region9
  $region8: #{sr_model_forward.9} parent=0 // pred_region
    _
  $region9: #{sr_model_forward.9} parent=0 // pred_fallthru
    _
  // Predicated region
  $region10: #{sr_model_forward.9} parent=0 // pred_check
    _
  $region11: #{sr_model_forward.9} parent=0 // pred_check_branch
    %13 = sbr.rel (0) target = $region13
  $region12: #{sr_model_forward.9} parent=0 // pred_region
    _
  $region13: #{sr_model_forward.9} parent=0 // pred_fallthru
    _
  %v15 = vld [vmem:[%s0] sm:$0xf]
  %v16 = vld [vmem:[%s0 + $0x4] sm:$0xf]
  %v17 = vld [vmem:[%s0 + $0x8] sm:$0xf]
  %v18 = vld [vmem:[%s0 + $0xc] sm:$0xf]
  %v19 = vld [vmem:[%s0 + $0x10] sm:$0xf]
  %v20 = vld [vmem:[%s0 + $0x14] sm:$0xf]
  %v21 = vld [vmem:[%s0 + $0x18] sm:$0xf]
  %v22 = vld [vmem:[%s0 + $0x1c] sm:$0xf]
  %v23 = vld [vmem:[%s0 + $0x20] sm:$0xf]
  %v24 = vld [vmem:[%s0 + $0x24] sm:$0xf]
  %v25 = vld [vmem:[%s0 + $0x28] sm:$0xf]
  %v26 = vld [vmem:[%s0 + $0x2c] sm:$0xf]
  %v27 = vld [vmem:[%s0 + $0x30] sm:$0xf]
  %v28 = vld [vmem:[%s0 + $0x34] sm:$0xf]
  %v29 = vld [vmem:[%s0 + $0x38] sm:$0xf]
  %v30 = vld [vmem:[%s0 + $0x3c] sm:$0xf]
  %v31 = vld [vmem:[%s0 + $0x40] sm:$0xf]
  %v32 = vld [vmem:[%s0 + $0x44] sm:$0xf]
  %v33 = vld [vmem:[%s0 + $0x48] sm:$0xf]
  %v34 = vld [vmem:[%s0 + $0x4c] sm:$0xf]
  %v35 = vld [vmem:[%s0 + $0x50] sm:$0xf]
  %v36 = vld [vmem:[%s0 + $0x54] sm:$0xf]
  %v37 = vld [vmem:[%s0 + $0x58] sm:$0xf]
  %v38 = vld [vmem:[%s0 + $0x5c] sm:$0xf]
  %v39 = vld [vmem:[%s0 + $0x60] sm:$0xf]
  %v40 = vld [vmem:[%s1] sm:$0xf]
  %v41 = vld [vmem:[%s1 + $0x4] sm:$0xf]
  %v42 = vld [vmem:[%s1 + $0x8] sm:$0xf]
  %v43 = vld [vmem:[%s1 + $0xc] sm:$0xf]
  %v44 = vld [vmem:[%s1 + $0x10] sm:$0xf]
  %v45 = vld [vmem:[%s1 + $0x14] sm:$0xf]
  %v46 = vld [vmem:[%s1 + $0x18] sm:$0xf]
  %v47 = vld [vmem:[%s1 + $0x1c] sm:$0xf]
  %v48 = vld [vmem:[%s1 + $0x20] sm:$0xf]
  %v49 = vld [vmem:[%s1 + $0x24] sm:$0xf]
  %v50 = vld [vmem:[%s1 + $0x28] sm:$0xf]
  %v51 = vld [vmem:[%s1 + $0x2c] sm:$0xf]
  %v52 = vld [vmem:[%s1 + $0x30] sm:$0x3]
  %v53 = vld [vmem:[%s2] sm:$0x1]
  %v55 = vlaneseq
  %v56 = vshrl.u32 %v55, 7
  %v57 = vsub.s32 0, %v56
  %v58 = vrot.slane %v53, %v57
  %v85 = vunpack.c.l.b16 %v15
  %v86 = vunpack.c.l.b16 %v16
  %v87 = vunpack.c.l.b16 %v17
  %v88 = vunpack.c.l.b16 %v18
  %v89 = vunpack.c.l.b16 %v19
  %v90 = vunpack.c.l.b16 %v20
  %v91 = vunpack.c.l.b16 %v21
  %v92 = vunpack.c.l.b16 %v22
  %v93 = vunpack.c.l.b16 %v23
  %v94 = vunpack.c.l.b16 %v24
  %v95 = vunpack.c.l.b16 %v25
  %v96 = vunpack.c.l.b16 %v26
  %v97 = vunpack.c.l.b16 %v27
  %v98 = vunpack.c.l.b16 %v28
  %v99 = vunpack.c.l.b16 %v29
  %v100 = vunpack.c.l.b16 %v30
  %v101 = vunpack.c.l.b16 %v31
  %v102 = vunpack.c.l.b16 %v32
  %v103 = vunpack.c.l.b16 %v33
  %v104 = vunpack.c.l.b16 %v34
  %v105 = vunpack.c.l.b16 %v35
  %v106 = vunpack.c.l.b16 %v36
  %v107 = vunpack.c.l.b16 %v37
  %v108 = vunpack.c.l.b16 %v38
  %v109 = vunpack.c.l.b16 %v39
  %v110 = vpack.c.b16 %v86, %v85
  %v111 = vpack.c.b16 %v88, %v87
  %v112 = vpack.c.b16 %v90, %v89
  %v113 = vpack.c.b16 %v92, %v91
  %v114 = vpack.c.b16 %v94, %v93
  %v115 = vpack.c.b16 %v96, %v95
  %v116 = vpack.c.b16 %v98, %v97
  %v117 = vpack.c.b16 %v100, %v99
  %v118 = vpack.c.b16 %v102, %v101
  %v119 = vpack.c.b16 %v104, %v103
  %v120 = vpack.c.b16 %v106, %v105
  %v121 = vpack.c.b16 %v108, %v107
  %v122 = vpack.c.b16 %v109, %v109
  %v136 = vunpack.c.l.b16 %v40
  %v137 = vunpack.c.l.b16 %v41
  %v138 = vunpack.c.l.b16 %v42
  %v139 = vunpack.c.l.b16 %v43
  %v140 = vunpack.c.l.b16 %v44
  %v141 = vunpack.c.l.b16 %v45
  %v142 = vunpack.c.l.b16 %v46
  %v143 = vunpack.c.l.b16 %v47
  %v144 = vunpack.c.l.b16 %v48
  %v145 = vunpack.c.l.b16 %v49
  %v146 = vunpack.c.l.b16 %v50
  %v147 = vunpack.c.l.b16 %v51
  %v148 = vunpack.c.l.b16 %v52
  %v149 = vpack.c.b16 %v137, %v136
  %v150 = vpack.c.b16 %v139, %v138
  %v151 = vpack.c.b16 %v141, %v140
  %v152 = vpack.c.b16 %v143, %v142
  %v153 = vpack.c.b16 %v145, %v144
  %v154 = vpack.c.b16 %v147, %v146
  %v155 = vpack.c.b16 %v148, %v148
  %vm162 = vcmask 818176
  %v164 = vsel %vm162, %v110, 0
  %v167 = vsel %vm162, %v111, 0
  %v170 = vsel %vm162, %v112, 0
  %v173 = vsel %vm162, %v113, 0
  %v176 = vsel %vm162, %v114, 0
  %v179 = vsel %vm162, %v115, 0
  %v182 = vsel %vm162, %v116, 0
  %v185 = vsel %vm162, %v117, 0
  %v188 = vsel %vm162, %v118, 0
  %v191 = vsel %vm162, %v119, 0
  %v194 = vsel %vm162, %v120, 0
  %v197 = vsel %vm162, %v121, 0
  %v200 = vsel %vm162, %v122, 0
  %vm202 = vcmask 1041408
  %v204 = vsel %vm202, %v155, 0
  %206 = vmatprep.subr.bf16.mxu0 0
  %207 = vmatpush1.bf16.msra.mxu0 0
  %208 = vmatprep.subr.bf16.mxu0 0
  %209 = vmatpush1.bf16.msra.mxu0 %v204
  %210 = vmatprep.subr.bf16.mxu0 0
  %211 = vmatpush1.bf16.msra.mxu0 %v154
  %212 = vmatprep.subr.bf16.mxu0 0
  %213 = vmatpush1.bf16.msra.mxu0 %v153
  %214 = vmatprep.subr.bf16.mxu0 0
  %215 = vmatpush1.bf16.msra.mxu0 %v152
  %216 = vmatprep.subr.bf16.mxu0 0
  %217 = vmatpush1.bf16.msra.mxu0 %v151
  %218 = vmatprep.subr.bf16.mxu0 0
  %219 = vmatpush1.bf16.msra.mxu0 %v150
  %220 = vmatprep.subr.bf16.mxu0 0
  %221 = vmatpush1.bf16.msra.mxu0 %v149
  %222 = vmatprep.subr.bf16.mxu0 0
  %223 = vmatpush2.bf16.msra.mxu0 0
  %224 = vmatprep.subr.bf16.mxu0 0
  %225 = vmatpush2.bf16.msra.mxu0 0
  %226 = vmatprep.subr.bf16.mxu0 0
  %227 = vmatpush2.bf16.msra.mxu0 0
  %228 = vmatprep.subr.bf16.mxu0 0
  %229 = vmatpush2.bf16.msra.mxu0 0
  %230 = vmatprep.subr.bf16.mxu0 0
  %231 = vmatpush2.bf16.msra.mxu0 0
  %232 = vmatprep.subr.bf16.mxu0 0
  %233 = vmatpush2.bf16.msra.mxu0 0
  %234 = vmatprep.subr.bf16.mxu0 0
  %235 = vmatpush2.bf16.msra.mxu0 0
  %236 = vmatprep.subr.bf16.mxu0 0
  %237 = vmatpush2.bf16.msra.mxu0 0
  %238 = vmatprep.mubr.bf16.mxu0 0
  %239 = vmatmul.mubr.bf16.gmra.mxu0 %v164
  %v240 = vpop.f32.mrf.mxu0
  %v241 = vadd.f32 %v58, %v240
  %v242 = vpop.f32.mrf.mxu0
  %v243 = vpop.f32.mrf.mxu0
  %v244 = vadd.f32 %v58, %v243
  %v245 = vpop.f32.mrf.mxu0
  %246 = vmatprep.mubr.bf16.mxu0 0
  %247 = vmatmul.mubr.bf16.gmra.mxu0 %v167
  %v248 = vpop.f32.mrf.mxu0
  %v249 = vadd.f32 %v58, %v248
  %v250 = vpop.f32.mrf.mxu0
  %v251 = vpop.f32.mrf.mxu0
  %v252 = vadd.f32 %v58, %v251
  %v253 = vpop.f32.mrf.mxu0
  %254 = vmatprep.mubr.bf16.mxu0 0
  %255 = vmatmul.mubr.bf16.gmra.mxu0 %v170
  %v256 = vpop.f32.mrf.mxu0
  %v257 = vadd.f32 %v58, %v256
  %v258 = vpop.f32.mrf.mxu0
  %v259 = vpop.f32.mrf.mxu0
  %v260 = vadd.f32 %v58, %v259
  %v261 = vpop.f32.mrf.mxu0
  %262 = vmatprep.mubr.bf16.mxu0 0
  %263 = vmatmul.mubr.bf16.gmra.mxu0 %v173
  %v264 = vpop.f32.mrf.mxu0
  %v265 = vadd.f32 %v58, %v264
  %v266 = vpop.f32.mrf.mxu0
  %v267 = vpop.f32.mrf.mxu0
  %v268 = vadd.f32 %v58, %v267
  %v269 = vpop.f32.mrf.mxu0
  %270 = vmatprep.mubr.bf16.mxu0 0
  %271 = vmatmul.mubr.bf16.gmra.mxu0 %v176
  %v272 = vpop.f32.mrf.mxu0
  %v273 = vadd.f32 %v58, %v272
  %v274 = vpop.f32.mrf.mxu0
  %v275 = vpop.f32.mrf.mxu0
  %v276 = vadd.f32 %v58, %v275
  %v277 = vpop.f32.mrf.mxu0
  %278 = vmatprep.mubr.bf16.mxu0 0
  %279 = vmatmul.mubr.bf16.gmra.mxu0 %v179
  %v280 = vpop.f32.mrf.mxu0
  %v281 = vadd.f32 %v58, %v280
  %v282 = vpop.f32.mrf.mxu0
  %v283 = vpop.f32.mrf.mxu0
  %v284 = vadd.f32 %v58, %v283
  %v285 = vpop.f32.mrf.mxu0
  %286 = vmatprep.mubr.bf16.mxu0 0
  %287 = vmatmul.mubr.bf16.gmra.mxu0 %v182
  %v288 = vpop.f32.mrf.mxu0
  %v289 = vadd.f32 %v58, %v288
  %v290 = vpop.f32.mrf.mxu0
  %v291 = vpop.f32.mrf.mxu0
  %v292 = vadd.f32 %v58, %v291
  %v293 = vpop.f32.mrf.mxu0
  %294 = vmatprep.mubr.bf16.mxu0 0
  %295 = vmatmul.mubr.bf16.gmra.mxu0 %v185
  %v296 = vpop.f32.mrf.mxu0
  %v297 = vadd.f32 %v58, %v296
  %v298 = vpop.f32.mrf.mxu0
  %v299 = vpop.f32.mrf.mxu0
  %v300 = vadd.f32 %v58, %v299
  %v301 = vpop.f32.mrf.mxu0
  %302 = vmatprep.mubr.bf16.mxu0 0
  %303 = vmatmul.mubr.bf16.gmra.mxu0 %v188
  %v304 = vpop.f32.mrf.mxu0
  %v305 = vadd.f32 %v58, %v304
  %v306 = vpop.f32.mrf.mxu0
  %v307 = vpop.f32.mrf.mxu0
  %v308 = vadd.f32 %v58, %v307
  %v309 = vpop.f32.mrf.mxu0
  %310 = vmatprep.mubr.bf16.mxu0 0
  %311 = vmatmul.mubr.bf16.gmra.mxu0 %v191
  %v312 = vpop.f32.mrf.mxu0
  %v313 = vadd.f32 %v58, %v312
  %v314 = vpop.f32.mrf.mxu0
  %v315 = vpop.f32.mrf.mxu0
  %v316 = vadd.f32 %v58, %v315
  %v317 = vpop.f32.mrf.mxu0
  %318 = vmatprep.mubr.bf16.mxu0 0
  %319 = vmatmul.mubr.bf16.gmra.mxu0 %v194
  %v320 = vpop.f32.mrf.mxu0
  %v321 = vadd.f32 %v58, %v320
  %v322 = vpop.f32.mrf.mxu0
  %v323 = vpop.f32.mrf.mxu0
  %v324 = vadd.f32 %v58, %v323
  %v325 = vpop.f32.mrf.mxu0
  %326 = vmatprep.mubr.bf16.mxu0 0
  %327 = vmatmul.mubr.bf16.gmra.mxu0 %v197
  %v328 = vpop.f32.mrf.mxu0
  %v329 = vadd.f32 %v58, %v328
  %v330 = vpop.f32.mrf.mxu0
  %v331 = vpop.f32.mrf.mxu0
  %v332 = vadd.f32 %v58, %v331
  %v333 = vpop.f32.mrf.mxu0
  %334 = vmatprep.mubr.bf16.mxu0 0
  %335 = vmatmul.mubr.bf16.gmra.mxu0 %v200
  %v336 = vpop.f32.mrf.mxu0
  %v337 = vadd.f32 %v58, %v336
  %v338 = vpop.f32.mrf.mxu0
  %v339 = vpop.f32.mrf.mxu0
  %v340 = vpop.f32.mrf.mxu0
  %341 = vdwg.mxu0
  %v342 = vmax.f32 %v241, 0.0
  %v343 = vmax.f32 %v244, 0.0
  %v344 = vmax.f32 %v249, 0.0
  %v345 = vmax.f32 %v252, 0.0
  %v346 = vmax.f32 %v257, 0.0
  %v347 = vmax.f32 %v260, 0.0
  %v348 = vmax.f32 %v265, 0.0
  %v349 = vmax.f32 %v268, 0.0
  %v350 = vmax.f32 %v273, 0.0
  %v351 = vmax.f32 %v276, 0.0
  %v352 = vmax.f32 %v281, 0.0
  %v353 = vmax.f32 %v284, 0.0
  %v354 = vmax.f32 %v289, 0.0
  %v355 = vmax.f32 %v292, 0.0
  %v356 = vmax.f32 %v297, 0.0
  %v357 = vmax.f32 %v300, 0.0
  %v358 = vmax.f32 %v305, 0.0
  %v359 = vmax.f32 %v308, 0.0
  %v360 = vmax.f32 %v313, 0.0
  %v361 = vmax.f32 %v316, 0.0
  %v362 = vmax.f32 %v321, 0.0
  %v363 = vmax.f32 %v324, 0.0
  %v364 = vmax.f32 %v329, 0.0
  %v365 = vmax.f32 %v332, 0.0
  %v366 = vmax.f32 %v337, 0.0
  %367 = vst [vmem:[%s3] sm:$0xff] %v342
  %368 = vst [vmem:[%s3 + $0x8] sm:$0xff] %v343
  %369 = vst [vmem:[%s3 + $0x10] sm:$0xff] %v344
  %370 = vst [vmem:[%s3 + $0x18] sm:$0xff] %v345
  %371 = vst [vmem:[%s3 + $0x20] sm:$0xff] %v346
  %372 = vst [vmem:[%s3 + $0x28] sm:$0xff] %v347
  %373 = vst [vmem:[%s3 + $0x30] sm:$0xff] %v348
  %374 = vst [vmem:[%s3 + $0x38] sm:$0xff] %v349
  %375 = vst [vmem:[%s3 + $0x40] sm:$0xff] %v350
  %376 = vst [vmem:[%s3 + $0x48] sm:$0xff] %v351
  %377 = vst [vmem:[%s3 + $0x50] sm:$0xff] %v352
  %378 = vst [vmem:[%s3 + $0x58] sm:$0xff] %v353
  %379 = vst [vmem:[%s3 + $0x60] sm:$0xff] %v354
  %380 = vst [vmem:[%s3 + $0x68] sm:$0xff] %v355
  %381 = vst [vmem:[%s3 + $0x70] sm:$0xff] %v356
  %382 = vst [vmem:[%s3 + $0x78] sm:$0xff] %v357
  %383 = vst [vmem:[%s3 + $0x80] sm:$0xff] %v358
  %384 = vst [vmem:[%s3 + $0x88] sm:$0xff] %v359
  %385 = vst [vmem:[%s3 + $0x90] sm:$0xff] %v360
  %386 = vst [vmem:[%s3 + $0x98] sm:$0xff] %v361
  %387 = vst [vmem:[%s3 + $0xa0] sm:$0xff] %v362
  %388 = vst [vmem:[%s3 + $0xa8] sm:$0xff] %v363
  %389 = vst [vmem:[%s3 + $0xb0] sm:$0xff] %v364
  %390 = vst [vmem:[%s3 + $0xb8] sm:$0xff] %v365
  %391 = vst [vmem:[%s3 + $0xc0] sm:$0xff] %v366
  // Predicated region
  $region14: #{sr_model_forward.9} parent=0 // pred_check
    _
  $region15: #{sr_model_forward.9} parent=0 // pred_check_branch
    %393 = sbr.rel (0) target = $region17
  $region16: #{sr_model_forward.9} parent=0 // pred_region
    _
  $region17: #{sr_model_forward.9} parent=0 // pred_fallthru
    _
  // Predicated region
  $region18: #{sr_model_forward.9} parent=0 // pred_check
    _
  $region19: #{sr_model_forward.9} parent=0 // pred_check_branch
    %395 = sbr.rel (0) target = $region21
  $region20: #{sr_model_forward.9} parent=0 // pred_region
    _
  $region21: #{sr_model_forward.9} parent=0 // pred_fallthru
    _

// kernel: sr_model_forward.10
$region0: #{sr_model_forward.10}
  #allocation0 [shape = 'u32[]', space=smem, size = 0x4, offset = 0x4, fixed_abs, tag = 'smem constant byte address 0x4 - core index']
  #allocation1 [shape = 'u32[144,128]{1,0:T(1,128)}', space=vmem, size = 0x12000, scoped, tag = 'internal scratch']
  %s0 = inlined_call_operand.vmem [shape: bf16[200,1152], index: 0, kind: input, shape index: {}]
  %s1 = inlined_call_operand.vmem [shape: bf16[1152,32], index: 1, kind: input, shape index: {}]
  %s2 = inlined_call_operand.vmem [shape: f32[1,32], index: 2, kind: input, shape index: {}]
  %s3 = inlined_call_operand.vmem [shape: f32[200,32], index: 3, kind: output, shape index: {}]
  %s4 = sld [smem:[#allocation0]]
  $region22: #{sr_model_forward.10} parent=0
    _
  %s6 = ssub.s32 1, %s4
  %s7 = scalar_select 0, %s6, %s4
  // Predicated region
  $region2: #{sr_model_forward.10} parent=0 // pred_check
    _
  $region3: #{sr_model_forward.10} parent=0 // pred_check_branch
    %9 = sbr.rel (0) target = $region5
  $region4: #{sr_model_forward.10} parent=0 // pred_region
    _
  $region5: #{sr_model_forward.10} parent=0 // pred_fallthru
    _
  // Predicated region
  $region6: #{sr_model_forward.10} parent=0 // pred_check
    _
  $region7: #{sr_model_forward.10} parent=0 // pred_check_branch
    %11 = sbr.rel (0) target = $region9
  $region8: #{sr_model_forward.10} parent=0 // pred_region
    _
  $region9: #{sr_model_forward.10} parent=0 // pred_fallthru
    _
  // Predicated region
  $region10: #{sr_model_forward.10} parent=0 // pred_check
    _
  $region11: #{sr_model_forward.10} parent=0 // pred_check_branch
    %13 = sbr.rel (0) target = $region13
  $region12: #{sr_model_forward.10} parent=0 // pred_region
    _
  $region13: #{sr_model_forward.10} parent=0 // pred_fallthru
    _
  %v15 = vld [vmem:[%s0] sm:$0xff]
  %v16 = vld [vmem:[%s0 + $0x8] sm:$0xff]
  %v17 = vld [vmem:[%s0 + $0x10] sm:$0xff]
  %v18 = vld [vmem:[%s0 + $0x18] sm:$0xff]
  %v19 = vld [vmem:[%s0 + $0x20] sm:$0xf]
  %v20 = vld [vmem:[%s0 + $0x24] sm:$0xff]
  %v21 = vld [vmem:[%s0 + $0x2c] sm:$0xff]
  %v22 = vld [vmem:[%s0 + $0x34] sm:$0xff]
  %v23 = vld [vmem:[%s0 + $0x3c] sm:$0xff]
  %v24 = vld [vmem:[%s0 + $0x44] sm:$0xf]
  %v25 = vld [vmem:[%s0 + $0x48] sm:$0xff]
  %v26 = vld [vmem:[%s0 + $0x50] sm:$0xff]
  %v27 = vld [vmem:[%s0 + $0x58] sm:$0xff]
  %v28 = vld [vmem:[%s0 + $0x60] sm:$0xff]
  %v29 = vld [vmem:[%s0 + $0x68] sm:$0xf]
  %v30 = vld [vmem:[%s0 + $0x6c] sm:$0xff]
  %v31 = vld [vmem:[%s0 + $0x74] sm:$0xff]
  %v32 = vld [vmem:[%s0 + $0x7c] sm:$0xff]
  %v33 = vld [vmem:[%s0 + $0x84] sm:$0xff]
  %v34 = vld [vmem:[%s0 + $0x8c] sm:$0xf]
  %v35 = vld [vmem:[%s0 + $0x90] sm:$0xff]
  %v36 = vld [vmem:[%s0 + $0x98] sm:$0xff]
  %v37 = vld [vmem:[%s0 + $0xa0] sm:$0xff]
  %v38 = vld [vmem:[%s0 + $0xa8] sm:$0xff]
  %v39 = vld [vmem:[%s0 + $0xb0] sm:$0xf]
  %v40 = vld [vmem:[%s0 + $0xb4] sm:$0xff]
  %v41 = vld [vmem:[%s0 + $0xbc] sm:$0xff]
  %v42 = vld [vmem:[%s0 + $0xc4] sm:$0xff]
  %v43 = vld [vmem:[%s0 + $0xcc] sm:$0xff]
  %v44 = vld [vmem:[%s0 + $0xd4] sm:$0xf]
  %v45 = vld [vmem:[%s0 + $0xd8] sm:$0xff]
  %v46 = vld [vmem:[%s0 + $0xe0] sm:$0xff]
  %v47 = vld [vmem:[%s0 + $0xe8] sm:$0xff]
  %v48 = vld [vmem:[%s0 + $0xf0] sm:$0xff]
  %v49 = vld [vmem:[%s0 + $0xf8] sm:$0xf]
  %v50 = vld [vmem:[%s0 + $0xfc] sm:$0xff]
  %v51 = vld [vmem:[%s0 + $0x104] sm:$0xff]
  %v52 = vld [vmem:[%s0 + $0x10c] sm:$0xff]
  %v53 = vld [vmem:[%s0 + $0x114] sm:$0xff]
  %v54 = vld [vmem:[%s0 + $0x11c] sm:$0xf]
  %v55 = vld [vmem:[%s0 + $0x120] sm:$0xff]
  %v56 = vld [vmem:[%s0 + $0x128] sm:$0xff]
  %v57 = vld [vmem:[%s0 + $0x130] sm:$0xff]
  %v58 = vld [vmem:[%s0 + $0x138] sm:$0xff]
  %v59 = vld [vmem:[%s0 + $0x140] sm:$0xf]
  %v60 = vld [vmem:[%s0 + $0x144] sm:$0xff]
  %v61 = vld [vmem:[%s0 + $0x14c] sm:$0xff]
  %v62 = vld [vmem:[%s0 + $0x154] sm:$0xff]
  %v63 = vld [vmem:[%s0 + $0x15c] sm:$0xff]
  %v64 = vld [vmem:[%s0 + $0x164] sm:$0xf]
  %v65 = vld [vmem:[%s0 + $0x168] sm:$0xff]
  %v66 = vld [vmem:[%s0 + $0x170] sm:$0xff]
  %v67 = vld [vmem:[%s0 + $0x178] sm:$0xff]
  %v68 = vld [vmem:[%s0 + $0x180] sm:$0xff]
  %v69 = vld [vmem:[%s0 + $0x188] sm:$0xf]
  %v70 = vld [vmem:[%s0 + $0x18c] sm:$0xff]
  %v71 = vld [vmem:[%s0 + $0x194] sm:$0xff]
  %v72 = vld [vmem:[%s0 + $0x19c] sm:$0xff]
  %v73 = vld [vmem:[%s0 + $0x1a4] sm:$0xff]
  %v74 = vld [vmem:[%s0 + $0x1ac] sm:$0xf]
  %v75 = vld [vmem:[%s0 + $0x1b0] sm:$0xff]
  %v76 = vld [vmem:[%s0 + $0x1b8] sm:$0xff]
  %v77 = vld [vmem:[%s0 + $0x1c0] sm:$0xff]
  %v78 = vld [vmem:[%s0 + $0x1c8] sm:$0xff]
  %v79 = vld [vmem:[%s0 + $0x1d0] sm:$0xf]
  %v80 = vld [vmem:[%s0 + $0x1d4] sm:$0xff]
  %v81 = vld [vmem:[%s0 + $0x1dc] sm:$0xff]
  %v82 = vld [vmem:[%s0 + $0x1e4] sm:$0xff]
  %v83 = vld [vmem:[%s0 + $0x1ec] sm:$0xff]
  %v84 = vld [vmem:[%s0 + $0x1f4] sm:$0xf]
  %v85 = vld [vmem:[%s0 + $0x1f8] sm:$0xff]
  %v86 = vld [vmem:[%s0 + $0x200] sm:$0xff]
  %v87 = vld [vmem:[%s0 + $0x208] sm:$0xff]
  %v88 = vld [vmem:[%s0 + $0x210] sm:$0xff]
  %v89 = vld [vmem:[%s0 + $0x218] sm:$0xf]
  %v90 = vld [vmem:[%s0 + $0x21c] sm:$0xff]
  %v91 = vld [vmem:[%s0 + $0x224] sm:$0xff]
  %v92 = vld [vmem:[%s0 + $0x22c] sm:$0xff]
  %v93 = vld [vmem:[%s0 + $0x234] sm:$0xff]
  %v94 = vld [vmem:[%s0 + $0x23c] sm:$0xf]
  %v95 = vld [vmem:[%s0 + $0x240] sm:$0xff]
  %v96 = vld [vmem:[%s0 + $0x248] sm:$0xff]
  %v97 = vld [vmem:[%s0 + $0x250] sm:$0xff]
  %v98 = vld [vmem:[%s0 + $0x258] sm:$0xff]
  %v99 = vld [vmem:[%s0 + $0x260] sm:$0xf]
  %v100 = vld [vmem:[%s0 + $0x264] sm:$0xff]
  %v101 = vld [vmem:[%s0 + $0x26c] sm:$0xff]
  %v102 = vld [vmem:[%s0 + $0x274] sm:$0xff]
  %v103 = vld [vmem:[%s0 + $0x27c] sm:$0xff]
  %v104 = vld [vmem:[%s0 + $0x284] sm:$0xf]
  %v105 = vld [vmem:[%s0 + $0x288] sm:$0xff]
  %v106 = vld [vmem:[%s0 + $0x290] sm:$0xff]
  %v107 = vld [vmem:[%s0 + $0x298] sm:$0xff]
  %v108 = vld [vmem:[%s0 + $0x2a0] sm:$0xff]
  %v109 = vld [vmem:[%s0 + $0x2a8] sm:$0xf]
  %v110 = vld [vmem:[%s0 + $0x2ac] sm:$0xff]
  %v111 = vld [vmem:[%s0 + $0x2b4] sm:$0xff]
  %v112 = vld [vmem:[%s0 + $0x2bc] sm:$0xff]
  %v113 = vld [vmem:[%s0 + $0x2c4] sm:$0xff]
  %v114 = vld [vmem:[%s0 + $0x2cc] sm:$0xf]
  %v115 = vld [vmem:[%s0 + $0x2d0] sm:$0xff]
  %v116 = vld [vmem:[%s0 + $0x2d8] sm:$0xff]
  %v117 = vld [vmem:[%s0 + $0x2e0] sm:$0xff]
  %v118 = vld [vmem:[%s0 + $0x2e8] sm:$0xff]
  %v119 = vld [vmem:[%s0 + $0x2f0] sm:$0xf]
  %v120 = vld [vmem:[%s0 + $0x2f4] sm:$0xff]
  %v121 = vld [vmem:[%s0 + $0x2fc] sm:$0xff]
  %v122 = vld [vmem:[%s0 + $0x304] sm:$0xff]
  %v123 = vld [vmem:[%s0 + $0x30c] sm:$0xff]
  %v124 = vld [vmem:[%s0 + $0x314] sm:$0xf]
  %v125 = vld [vmem:[%s0 + $0x318] sm:$0xff]
  %v126 = vld [vmem:[%s0 + $0x320] sm:$0xff]
  %v127 = vld [vmem:[%s0 + $0x328] sm:$0xff]
  %v128 = vld [vmem:[%s0 + $0x330] sm:$0xff]
  %v129 = vld [vmem:[%s0 + $0x338] sm:$0xf]
  %v130 = vld [vmem:[%s0 + $0x33c] sm:$0xff]
  %v131 = vld [vmem:[%s0 + $0x344] sm:$0xff]
  %v132 = vld [vmem:[%s0 + $0x34c] sm:$0xff]
  %v133 = vld [vmem:[%s0 + $0x354] sm:$0xff]
  %v134 = vld [vmem:[%s0 + $0x35c] sm:$0xf]
  %v135 = vld [vmem:[%s0 + $0x360] sm:$0xff]
  %v136 = vld [vmem:[%s0 + $0x368] sm:$0xff]
  %v137 = vld [vmem:[%s0 + $0x370] sm:$0xff]
  %v138 = vld [vmem:[%s0 + $0x378] sm:$0xff]
  %v139 = vld [vmem:[%s0 + $0x380] sm:$0xf]
  %v140 = vld [vmem:[%s1] sm:$0xf]
  %v141 = vld [vmem:[%s1 + $0x4] sm:$0xf]
  %v142 = vld [vmem:[%s1 + $0x8] sm:$0xf]
  %v143 = vld [vmem:[%s1 + $0xc] sm:$0xf]
  %v144 = vld [vmem:[%s1 + $0x10] sm:$0xf]
  %v145 = vld [vmem:[%s1 + $0x14] sm:$0xf]
  %v146 = vld [vmem:[%s1 + $0x18] sm:$0xf]
  %v147 = vld [vmem:[%s1 + $0x1c] sm:$0xf]
  %v148 = vld [vmem:[%s1 + $0x20] sm:$0xf]
  %v149 = vld [vmem:[%s1 + $0x24] sm:$0xf]
  %v150 = vld [vmem:[%s1 + $0x28] sm:$0xf]
  %v151 = vld [vmem:[%s1 + $0x2c] sm:$0xf]
  %v152 = vld [vmem:[%s1 + $0x30] sm:$0xf]
  %v153 = vld [vmem:[%s1 + $0x34] sm:$0xf]
  %v154 = vld [vmem:[%s1 + $0x38] sm:$0xf]
  %v155 = vld [vmem:[%s1 + $0x3c] sm:$0xf]
  %v156 = vld [vmem:[%s1 + $0x40] sm:$0xf]
  %v157 = vld [vmem:[%s1 + $0x44] sm:$0xf]
  %v158 = vld [vmem:[%s1 + $0x48] sm:$0xf]
  %v159 = vld [vmem:[%s1 + $0x4c] sm:$0xf]
  %v160 = vld [vmem:[%s1 + $0x50] sm:$0xf]
  %v161 = vld [vmem:[%s1 + $0x54] sm:$0xf]
  %v162 = vld [vmem:[%s1 + $0x58] sm:$0xf]
  %v163 = vld [vmem:[%s1 + $0x5c] sm:$0xf]
  %v164 = vld [vmem:[%s1 + $0x60] sm:$0xf]
  %v165 = vld [vmem:[%s1 + $0x64] sm:$0xf]
  %v166 = vld [vmem:[%s1 + $0x68] sm:$0xf]
  %v167 = vld [vmem:[%s1 + $0x6c] sm:$0xf]
  %v168 = vld [vmem:[%s1 + $0x70] sm:$0xf]
  %v169 = vld [vmem:[%s1 + $0x74] sm:$0xf]
  %v170 = vld [vmem:[%s1 + $0x78] sm:$0xf]
  %v171 = vld [vmem:[%s1 + $0x7c] sm:$0xf]
  %v172 = vld [vmem:[%s1 + $0x80] sm:$0xf]
  %v173 = vld [vmem:[%s1 + $0x84] sm:$0xf]
  %v174 = vld [vmem:[%s1 + $0x88] sm:$0xf]
  %v175 = vld [vmem:[%s1 + $0x8c] sm:$0xf]
  %v176 = vld [vmem:[%s1 + $0x90] sm:$0xf]
  %v177 = vld [vmem:[%s1 + $0x94] sm:$0xf]
  %v178 = vld [vmem:[%s1 + $0x98] sm:$0xf]
  %v179 = vld [vmem:[%s1 + $0x9c] sm:$0xf]
  %v180 = vld [vmem:[%s1 + $0xa0] sm:$0xf]
  %v181 = vld [vmem:[%s1 + $0xa4] sm:$0xf]
  %v182 = vld [vmem:[%s1 + $0xa8] sm:$0xf]
  %v183 = vld [vmem:[%s1 + $0xac] sm:$0xf]
  %v184 = vld [vmem:[%s1 + $0xb0] sm:$0xf]
  %v185 = vld [vmem:[%s1 + $0xb4] sm:$0xf]
  %v186 = vld [vmem:[%s1 + $0xb8] sm:$0xf]
  %v187 = vld [vmem:[%s1 + $0xbc] sm:$0xf]
  %v188 = vld [vmem:[%s1 + $0xc0] sm:$0xf]
  %v189 = vld [vmem:[%s1 + $0xc4] sm:$0xf]
  %v190 = vld [vmem:[%s1 + $0xc8] sm:$0xf]
  %v191 = vld [vmem:[%s1 + $0xcc] sm:$0xf]
  %v192 = vld [vmem:[%s1 + $0xd0] sm:$0xf]
  %v193 = vld [vmem:[%s1 + $0xd4] sm:$0xf]
  %v194 = vld [vmem:[%s1 + $0xd8] sm:$0xf]
  %v195 = vld [vmem:[%s1 + $0xdc] sm:$0xf]
  %v196 = vld [vmem:[%s1 + $0xe0] sm:$0xf]
  %v197 = vld [vmem:[%s1 + $0xe4] sm:$0xf]
  %v198 = vld [vmem:[%s1 + $0xe8] sm:$0xf]
  %v199 = vld [vmem:[%s1 + $0xec] sm:$0xf]
  %v200 = vld [vmem:[%s1 + $0xf0] sm:$0xf]
  %v201 = vld [vmem:[%s1 + $0xf4] sm:$0xf]
  %v202 = vld [vmem:[%s1 + $0xf8] sm:$0xf]
  %v203 = vld [vmem:[%s1 + $0xfc] sm:$0xf]
  %v204 = vld [vmem:[%s1 + $0x100] sm:$0xf]
  %v205 = vld [vmem:[%s1 + $0x104] sm:$0xf]
  %v206 = vld [vmem:[%s1 + $0x108] sm:$0xf]
  %v207 = vld [vmem:[%s1 + $0x10c] sm:$0xf]
  %v208 = vld [vmem:[%s1 + $0x110] sm:$0xf]
  %v209 = vld [vmem:[%s1 + $0x114] sm:$0xf]
  %v210 = vld [vmem:[%s1 + $0x118] sm:$0xf]
  %v211 = vld [vmem:[%s1 + $0x11c] sm:$0xf]
  %v212 = vld [vmem:[%s1 + $0x120] sm:$0xf]
  %v213 = vld [vmem:[%s1 + $0x124] sm:$0xf]
  %v214 = vld [vmem:[%s1 + $0x128] sm:$0xf]
  %v215 = vld [vmem:[%s1 + $0x12c] sm:$0xf]
  %v216 = vld [vmem:[%s1 + $0x130] sm:$0xf]
  %v217 = vld [vmem:[%s1 + $0x134] sm:$0xf]
  %v218 = vld [vmem:[%s1 + $0x138] sm:$0xf]
  %v219 = vld [vmem:[%s1 + $0x13c] sm:$0xf]
  %v220 = vld [vmem:[%s1 + $0x140] sm:$0xf]
  %v221 = vld [vmem:[%s1 + $0x144] sm:$0xf]
  %v222 = vld [vmem:[%s1 + $0x148] sm:$0xf]
  %v223 = vld [vmem:[%s1 + $0x14c] sm:$0xf]
  %v224 = vld [vmem:[%s1 + $0x150] sm:$0xf]
  %v225 = vld [vmem:[%s1 + $0x154] sm:$0xf]
  %v226 = vld [vmem:[%s1 + $0x158] sm:$0xf]
  %v227 = vld [vmem:[%s1 + $0x15c] sm:$0xf]
  %v228 = vld [vmem:[%s1 + $0x160] sm:$0xf]
  %v229 = vld [vmem:[%s1 + $0x164] sm:$0xf]
  %v230 = vld [vmem:[%s1 + $0x168] sm:$0xf]
  %v231 = vld [vmem:[%s1 + $0x16c] sm:$0xf]
  %v232 = vld [vmem:[%s1 + $0x170] sm:$0xf]
  %v233 = vld [vmem:[%s1 + $0x174] sm:$0xf]
  %v234 = vld [vmem:[%s1 + $0x178] sm:$0xf]
  %v235 = vld [vmem:[%s1 + $0x17c] sm:$0xf]
  %v236 = vld [vmem:[%s1 + $0x180] sm:$0xf]
  %v237 = vld [vmem:[%s1 + $0x184] sm:$0xf]
  %v238 = vld [vmem:[%s1 + $0x188] sm:$0xf]
  %v239 = vld [vmem:[%s1 + $0x18c] sm:$0xf]
  %v240 = vld [vmem:[%s1 + $0x190] sm:$0xf]
  %v241 = vld [vmem:[%s1 + $0x194] sm:$0xf]
  %v242 = vld [vmem:[%s1 + $0x198] sm:$0xf]
  %v243 = vld [vmem:[%s1 + $0x19c] sm:$0xf]
  %v244 = vld [vmem:[%s1 + $0x1a0] sm:$0xf]
  %v245 = vld [vmem:[%s1 + $0x1a4] sm:$0xf]
  %v246 = vld [vmem:[%s1 + $0x1a8] sm:$0xf]
  %v247 = vld [vmem:[%s1 + $0x1ac] sm:$0xf]
  %v248 = vld [vmem:[%s1 + $0x1b0] sm:$0xf]
  %v249 = vld [vmem:[%s1 + $0x1b4] sm:$0xf]
  %v250 = vld [vmem:[%s1 + $0x1b8] sm:$0xf]
  %v251 = vld [vmem:[%s1 + $0x1bc] sm:$0xf]
  %v252 = vld [vmem:[%s1 + $0x1c0] sm:$0xf]
  %v253 = vld [vmem:[%s1 + $0x1c4] sm:$0xf]
  %v254 = vld [vmem:[%s1 + $0x1c8] sm:$0xf]
  %v255 = vld [vmem:[%s1 + $0x1cc] sm:$0xf]
  %v256 = vld [vmem:[%s1 + $0x1d0] sm:$0xf]
  %v257 = vld [vmem:[%s1 + $0x1d4] sm:$0xf]
  %v258 = vld [vmem:[%s1 + $0x1d8] sm:$0xf]
  %v259 = vld [vmem:[%s1 + $0x1dc] sm:$0xf]
  %v260 = vld [vmem:[%s1 + $0x1e0] sm:$0xf]
  %v261 = vld [vmem:[%s1 + $0x1e4] sm:$0xf]
  %v262 = vld [vmem:[%s1 + $0x1e8] sm:$0xf]
  %v263 = vld [vmem:[%s1 + $0x1ec] sm:$0xf]
  %v264 = vld [vmem:[%s1 + $0x1f0] sm:$0xf]
  %v265 = vld [vmem:[%s1 + $0x1f4] sm:$0xf]
  %v266 = vld [vmem:[%s1 + $0x1f8] sm:$0xf]
  %v267 = vld [vmem:[%s1 + $0x1fc] sm:$0xf]
  %v268 = vld [vmem:[%s1 + $0x200] sm:$0xf]
  %v269 = vld [vmem:[%s1 + $0x204] sm:$0xf]
  %v270 = vld [vmem:[%s1 + $0x208] sm:$0xf]
  %v271 = vld [vmem:[%s1 + $0x20c] sm:$0xf]
  %v272 = vld [vmem:[%s1 + $0x210] sm:$0xf]
  %v273 = vld [vmem:[%s1 + $0x214] sm:$0xf]
  %v274 = vld [vmem:[%s1 + $0x218] sm:$0xf]
  %v275 = vld [vmem:[%s1 + $0x21c] sm:$0xf]
  %v276 = vld [vmem:[%s1 + $0x220] sm:$0xf]
  %v277 = vld [vmem:[%s1 + $0x224] sm:$0xf]
  %v278 = vld [vmem:[%s1 + $0x228] sm:$0xf]
  %v279 = vld [vmem:[%s1 + $0x22c] sm:$0xf]
  %v280 = vld [vmem:[%s1 + $0x230] sm:$0xf]
  %v281 = vld [vmem:[%s1 + $0x234] sm:$0xf]
  %v282 = vld [vmem:[%s1 + $0x238] sm:$0xf]
  %v283 = vld [vmem:[%s1 + $0x23c] sm:$0xf]
  %v284 = vld [vmem:[%s2] sm:$0x1]
  %v286 = vlaneseq
  %v287 = vshrl.u32 %v286, 7
  %v288 = vsub.s32 0, %v287
  %v289 = vrot.slane %v284, %v288
  %v416 = vunpack.c.l.b16 %v15
  %v417 = vunpack.c.h.b16 %v15
  %v418 = vunpack.c.l.b16 %v16
  %v419 = vunpack.c.h.b16 %v16
  %v420 = vunpack.c.l.b16 %v17
  %v421 = vunpack.c.h.b16 %v17
  %v422 = vunpack.c.l.b16 %v18
  %v423 = vunpack.c.h.b16 %v18
  %v424 = vunpack.c.l.b16 %v19
  %v425 = vunpack.c.l.b16 %v20
  %v426 = vunpack.c.h.b16 %v20
  %v427 = vunpack.c.l.b16 %v21
  %v428 = vunpack.c.h.b16 %v21
  %v429 = vunpack.c.l.b16 %v22
  %v430 = vunpack.c.h.b16 %v22
  %v431 = vunpack.c.l.b16 %v23
  %v432 = vunpack.c.h.b16 %v23
  %v433 = vunpack.c.l.b16 %v24
  %v434 = vunpack.c.l.b16 %v25
  %v435 = vunpack.c.h.b16 %v25
  %v436 = vunpack.c.l.b16 %v26
  %v437 = vunpack.c.h.b16 %v26
  %v438 = vunpack.c.l.b16 %v27
  %v439 = vunpack.c.h.b16 %v27
  %v440 = vunpack.c.l.b16 %v28
  %v441 = vunpack.c.h.b16 %v28
  %v442 = vunpack.c.l.b16 %v29
  %v443 = vunpack.c.l.b16 %v30
  %v444 = vunpack.c.h.b16 %v30
  %v445 = vunpack.c.l.b16 %v31
  %v446 = vunpack.c.h.b16 %v31
  %v447 = vunpack.c.l.b16 %v32
  %v448 = vunpack.c.h.b16 %v32
  %v449 = vunpack.c.l.b16 %v33
  %v450 = vunpack.c.h.b16 %v33
  %v451 = vunpack.c.l.b16 %v34
  %v452 = vunpack.c.l.b16 %v35
  %v453 = vunpack.c.h.b16 %v35
  %v454 = vunpack.c.l.b16 %v36
  %v455 = vunpack.c.h.b16 %v36
  %v456 = vunpack.c.l.b16 %v37
  %v457 = vunpack.c.h.b16 %v37
  %v458 = vunpack.c.l.b16 %v38
  %v459 = vunpack.c.h.b16 %v38
  %v460 = vunpack.c.l.b16 %v39
  %v461 = vunpack.c.l.b16 %v40
  %v462 = vunpack.c.h.b16 %v40
  %v463 = vunpack.c.l.b16 %v41
  %v464 = vunpack.c.h.b16 %v41
  %v465 = vunpack.c.l.b16 %v42
  %v466 = vunpack.c.h.b16 %v42
  %v467 = vunpack.c.l.b16 %v43
  %v468 = vunpack.c.h.b16 %v43
  %v469 = vunpack.c.l.b16 %v44
  %v470 = vunpack.c.l.b16 %v45
  %v471 = vunpack.c.h.b16 %v45
  %v472 = vunpack.c.l.b16 %v46
  %v473 = vunpack.c.h.b16 %v46
  %v474 = vunpack.c.l.b16 %v47
  %v475 = vunpack.c.h.b16 %v47
  %v476 = vunpack.c.l.b16 %v48
  %v477 = vunpack.c.h.b16 %v48
  %v478 = vunpack.c.l.b16 %v49
  %v479 = vunpack.c.l.b16 %v50
  %v480 = vunpack.c.h.b16 %v50
  %v481 = vunpack.c.l.b16 %v51
  %v482 = vunpack.c.h.b16 %v51
  %v483 = vunpack.c.l.b16 %v52
  %v484 = vunpack.c.h.b16 %v52
  %v485 = vunpack.c.l.b16 %v53
  %v486 = vunpack.c.h.b16 %v53
  %v487 = vunpack.c.l.b16 %v54
  %v488 = vunpack.c.l.b16 %v55
  %v489 = vunpack.c.h.b16 %v55
  %v490 = vunpack.c.l.b16 %v56
  %v491 = vunpack.c.h.b16 %v56
  %v492 = vunpack.c.l.b16 %v57
  %v493 = vunpack.c.h.b16 %v57
  %v494 = vunpack.c.l.b16 %v58
  %v495 = vunpack.c.h.b16 %v58
  %v496 = vunpack.c.l.b16 %v59
  %v497 = vunpack.c.l.b16 %v60
  %v498 = vunpack.c.h.b16 %v60
  %v499 = vunpack.c.l.b16 %v61
  %v500 = vunpack.c.h.b16 %v61
  %v501 = vunpack.c.l.b16 %v62
  %v502 = vunpack.c.h.b16 %v62
  %v503 = vunpack.c.l.b16 %v63
  %v504 = vunpack.c.h.b16 %v63
  %v505 = vunpack.c.l.b16 %v64
  %v506 = vunpack.c.l.b16 %v65
  %v507 = vunpack.c.h.b16 %v65
  %v508 = vunpack.c.l.b16 %v66
  %v509 = vunpack.c.h.b16 %v66
  %v510 = vunpack.c.l.b16 %v67
  %v511 = vunpack.c.h.b16 %v67
  %v512 = vunpack.c.l.b16 %v68
  %v513 = vunpack.c.h.b16 %v68
  %v514 = vunpack.c.l.b16 %v69
  %v515 = vunpack.c.l.b16 %v70
  %v516 = vunpack.c.h.b16 %v70
  %v517 = vunpack.c.l.b16 %v71
  %v518 = vunpack.c.h.b16 %v71
  %v519 = vunpack.c.l.b16 %v72
  %v520 = vunpack.c.h.b16 %v72
  %v521 = vunpack.c.l.b16 %v73
  %v522 = vunpack.c.h.b16 %v73
  %v523 = vunpack.c.l.b16 %v74
  %v524 = vunpack.c.l.b16 %v75
  %v525 = vunpack.c.h.b16 %v75
  %v526 = vunpack.c.l.b16 %v76
  %v527 = vunpack.c.h.b16 %v76
  %v528 = vunpack.c.l.b16 %v77
  %v529 = vunpack.c.h.b16 %v77
  %v530 = vunpack.c.l.b16 %v78
  %v531 = vunpack.c.h.b16 %v78
  %v532 = vunpack.c.l.b16 %v79
  %v533 = vunpack.c.l.b16 %v80
  %v534 = vunpack.c.h.b16 %v80
  %v535 = vunpack.c.l.b16 %v81
  %v536 = vunpack.c.h.b16 %v81
  %v537 = vunpack.c.l.b16 %v82
  %v538 = vunpack.c.h.b16 %v82
  %v539 = vunpack.c.l.b16 %v83
  %v540 = vunpack.c.h.b16 %v83
  %v541 = vunpack.c.l.b16 %v84
  %v542 = vunpack.c.l.b16 %v85
  %v543 = vunpack.c.h.b16 %v85
  %v544 = vunpack.c.l.b16 %v86
  %v545 = vunpack.c.h.b16 %v86
  %v546 = vunpack.c.l.b16 %v87
  %v547 = vunpack.c.h.b16 %v87
  %v548 = vunpack.c.l.b16 %v88
  %v549 = vunpack.c.h.b16 %v88
  %v550 = vunpack.c.l.b16 %v89
  %v551 = vunpack.c.l.b16 %v90
  %v552 = vunpack.c.h.b16 %v90
  %v553 = vunpack.c.l.b16 %v91
  %v554 = vunpack.c.h.b16 %v91
  %v555 = vunpack.c.l.b16 %v92
  %v556 = vunpack.c.h.b16 %v92
  %v557 = vunpack.c.l.b16 %v93
  %v558 = vunpack.c.h.b16 %v93
  %v559 = vunpack.c.l.b16 %v94
  %v560 = vunpack.c.l.b16 %v95
  %v561 = vunpack.c.h.b16 %v95
  %v562 = vunpack.c.l.b16 %v96
  %v563 = vunpack.c.h.b16 %v96
  %v564 = vunpack.c.l.b16 %v97
  %v565 = vunpack.c.h.b16 %v97
  %v566 = vunpack.c.l.b16 %v98
  %v567 = vunpack.c.h.b16 %v98
  %v568 = vunpack.c.l.b16 %v99
  %v569 = vunpack.c.l.b16 %v100
  %v570 = vunpack.c.h.b16 %v100
  %v571 = vunpack.c.l.b16 %v101
  %v572 = vunpack.c.h.b16 %v101
  %v573 = vunpack.c.l.b16 %v102
  %v574 = vunpack.c.h.b16 %v102
  %v575 = vunpack.c.l.b16 %v103
  %v576 = vunpack.c.h.b16 %v103
  %v577 = vunpack.c.l.b16 %v104
  %v578 = vunpack.c.l.b16 %v105
  %v579 = vunpack.c.h.b16 %v105
  %v580 = vunpack.c.l.b16 %v106
  %v581 = vunpack.c.h.b16 %v106
  %v582 = vunpack.c.l.b16 %v107
  %v583 = vunpack.c.h.b16 %v107
  %v584 = vunpack.c.l.b16 %v108
  %v585 = vunpack.c.h.b16 %v108
  %v586 = vunpack.c.l.b16 %v109
  %v587 = vunpack.c.l.b16 %v110
  %v588 = vunpack.c.h.b16 %v110
  %v589 = vunpack.c.l.b16 %v111
  %v590 = vunpack.c.h.b16 %v111
  %v591 = vunpack.c.l.b16 %v112
  %v592 = vunpack.c.h.b16 %v112
  %v593 = vunpack.c.l.b16 %v113
  %v594 = vunpack.c.h.b16 %v113
  %v595 = vunpack.c.l.b16 %v114
  %v596 = vunpack.c.l.b16 %v115
  %v597 = vunpack.c.h.b16 %v115
  %v598 = vunpack.c.l.b16 %v116
  %v599 = vunpack.c.h.b16 %v116
  %v600 = vunpack.c.l.b16 %v117
  %v601 = vunpack.c.h.b16 %v117
  %v602 = vunpack.c.l.b16 %v118
  %v603 = vunpack.c.h.b16 %v118
  %v604 = vunpack.c.l.b16 %v119
  %v605 = vunpack.c.l.b16 %v120
  %v606 = vunpack.c.h.b16 %v120
  %v607 = vunpack.c.l.b16 %v121
  %v608 = vunpack.c.h.b16 %v121
  %v609 = vunpack.c.l.b16 %v122
  %v610 = vunpack.c.h.b16 %v122
  %v611 = vunpack.c.l.b16 %v123
  %v612 = vunpack.c.h.b16 %v123
  %v613 = vunpack.c.l.b16 %v124
  %v614 = vunpack.c.l.b16 %v125
  %v615 = vunpack.c.h.b16 %v125
  %v616 = vunpack.c.l.b16 %v126
  %v617 = vunpack.c.h.b16 %v126
  %v618 = vunpack.c.l.b16 %v127
  %v619 = vunpack.c.h.b16 %v127
  %v620 = vunpack.c.l.b16 %v128
  %v621 = vunpack.c.h.b16 %v128
  %v622 = vunpack.c.l.b16 %v129
  %v623 = vunpack.c.l.b16 %v130
  %v624 = vunpack.c.h.b16 %v130
  %v625 = vunpack.c.l.b16 %v131
  %v626 = vunpack.c.h.b16 %v131
  %v627 = vunpack.c.l.b16 %v132
  %v628 = vunpack.c.h.b16 %v132
  %v629 = vunpack.c.l.b16 %v133
  %v630 = vunpack.c.h.b16 %v133
  %v631 = vunpack.c.l.b16 %v134
  %v632 = vunpack.c.l.b16 %v135
  %v633 = vunpack.c.h.b16 %v135
  %v634 = vunpack.c.l.b16 %v136
  %v635 = vunpack.c.h.b16 %v136
  %v636 = vunpack.c.l.b16 %v137
  %v637 = vunpack.c.h.b16 %v137
  %v638 = vunpack.c.l.b16 %v138
  %v639 = vunpack.c.h.b16 %v138
  %v640 = vunpack.c.l.b16 %v139
  %v641 = vpack.c.b16 %v425, %v416
  %v642 = vpack.c.b16 %v426, %v417
  %v643 = vpack.c.b16 %v427, %v418
  %v644 = vpack.c.b16 %v428, %v419
  %v645 = vpack.c.b16 %v429, %v420
  %v646 = vpack.c.b16 %v430, %v421
  %v647 = vpack.c.b16 %v431, %v422
  %v648 = vpack.c.b16 %v432, %v423
  %v649 = vpack.c.b16 %v433, %v424
  %v650 = vpack.c.b16 %v443, %v434
  %v651 = vpack.c.b16 %v444, %v435
  %v652 = vpack.c.b16 %v445, %v436
  %v653 = vpack.c.b16 %v446, %v437
  %v654 = vpack.c.b16 %v447, %v438
  %v655 = vpack.c.b16 %v448, %v439
  %v656 = vpack.c.b16 %v449, %v440
  %v657 = vpack.c.b16 %v450, %v441
  %v658 = vpack.c.b16 %v451, %v442
  %v659 = vpack.c.b16 %v461, %v452
  %v660 = vpack.c.b16 %v462, %v453
  %v661 = vpack.c.b16 %v463, %v454
  %v662 = vpack.c.b16 %v464, %v455
  %v663 = vpack.c.b16 %v465, %v456
  %v664 = vpack.c.b16 %v466, %v457
  %v665 = vpack.c.b16 %v467, %v458
  %v666 = vpack.c.b16 %v468, %v459
  %v667 = vpack.c.b16 %v469, %v460
  %v668 = vpack.c.b16 %v479, %v470
  %v669 = vpack.c.b16 %v480, %v471
  %v670 = vpack.c.b16 %v481, %v472
  %v671 = vpack.c.b16 %v482, %v473
  %v672 = vpack.c.b16 %v483, %v474
  %v673 = vpack.c.b16 %v484, %v475
  %v674 = vpack.c.b16 %v485, %v476
  %v675 = vpack.c.b16 %v486, %v477
  %v676 = vpack.c.b16 %v487, %v478
  %v677 = vpack.c.b16 %v497, %v488
  %v678 = vpack.c.b16 %v498, %v489
  %v679 = vpack.c.b16 %v499, %v490
  %v680 = vpack.c.b16 %v500, %v491
  %v681 = vpack.c.b16 %v501, %v492
  %v682 = vpack.c.b16 %v502, %v493
  %v683 = vpack.c.b16 %v503, %v494
  %v684 = vpack.c.b16 %v504, %v495
  %v685 = vpack.c.b16 %v505, %v496
  %v686 = vpack.c.b16 %v515, %v506
  %v687 = vpack.c.b16 %v516, %v507
  %v688 = vpack.c.b16 %v517, %v508
  %v689 = vpack.c.b16 %v518, %v509
  %v690 = vpack.c.b16 %v519, %v510
  %v691 = vpack.c.b16 %v520, %v511
  %v692 = vpack.c.b16 %v521, %v512
  %v693 = vpack.c.b16 %v522, %v513
  %v694 = vpack.c.b16 %v523, %v514
  %v695 = vpack.c.b16 %v533, %v524
  %v696 = vpack.c.b16 %v534, %v525
  %v697 = vpack.c.b16 %v535, %v526
  %v698 = vpack.c.b16 %v536, %v527
  %v699 = vpack.c.b16 %v537, %v528
  %v700 = vpack.c.b16 %v538, %v529
  %v701 = vpack.c.b16 %v539, %v530
  %v702 = vpack.c.b16 %v540, %v531
  %v703 = vpack.c.b16 %v541, %v532
  %v704 = vpack.c.b16 %v551, %v542
  %v705 = vpack.c.b16 %v552, %v543
  %v706 = vpack.c.b16 %v553, %v544
  %v707 = vpack.c.b16 %v554, %v545
  %v708 = vpack.c.b16 %v555, %v546
  %v709 = vpack.c.b16 %v556, %v547
  %v710 = vpack.c.b16 %v557, %v548
  %v711 = vpack.c.b16 %v558, %v549
  %v712 = vpack.c.b16 %v559, %v550
  %v713 = vpack.c.b16 %v569, %v560
  %v714 = vpack.c.b16 %v570, %v561
  %v715 = vpack.c.b16 %v571, %v562
  %v716 = vpack.c.b16 %v572, %v563
  %v717 = vpack.c.b16 %v573, %v564
  %v718 = vpack.c.b16 %v574, %v565
  %v719 = vpack.c.b16 %v575, %v566
  %v720 = vpack.c.b16 %v576, %v567
  %v721 = vpack.c.b16 %v577, %v568
  %v722 = vpack.c.b16 %v587, %v578
  %v723 = vpack.c.b16 %v588, %v579
  %v724 = vpack.c.b16 %v589, %v580
  %v725 = vpack.c.b16 %v590, %v581
  %v726 = vpack.c.b16 %v591, %v582
  %v727 = vpack.c.b16 %v592, %v583
  %v728 = vpack.c.b16 %v593, %v584
  %v729 = vpack.c.b16 %v594, %v585
  %v730 = vpack.c.b16 %v595, %v586
  %v731 = vpack.c.b16 %v605, %v596
  %v732 = vpack.c.b16 %v606, %v597
  %v733 = vpack.c.b16 %v607, %v598
  %v734 = vpack.c.b16 %v608, %v599
  %v735 = vpack.c.b16 %v609, %v600
  %v736 = vpack.c.b16 %v610, %v601
  %v737 = vpack.c.b16 %v611, %v602
  %v738 = vpack.c.b16 %v612, %v603
  %v739 = vpack.c.b16 %v613, %v604
  %v740 = vpack.c.b16 %v623, %v614
  %v741 = vpack.c.b16 %v624, %v615
  %v742 = vpack.c.b16 %v625, %v616
  %v743 = vpack.c.b16 %v626, %v617
  %v744 = vpack.c.b16 %v627, %v618
  %v745 = vpack.c.b16 %v628, %v619
  %v746 = vpack.c.b16 %v629, %v620
  %v747 = vpack.c.b16 %v630, %v621
  %v748 = vpack.c.b16 %v631, %v622
  %v749 = vpack.c.b16 %v632, %v632
  %v750 = vpack.c.b16 %v633, %v633
  %v751 = vpack.c.b16 %v634, %v634
  %v752 = vpack.c.b16 %v635, %v635
  %v753 = vpack.c.b16 %v636, %v636
  %v754 = vpack.c.b16 %v637, %v637
  %v755 = vpack.c.b16 %v638, %v638
  %v756 = vpack.c.b16 %v639, %v639
  %v757 = vpack.c.b16 %v640, %v640
  %v1019 = vunpack.c.l.b16 %v140
  %v1020 = vunpack.c.l.b16 %v141
  %v1021 = vunpack.c.l.b16 %v142
  %v1022 = vunpack.c.l.b16 %v143
  %v1023 = vunpack.c.l.b16 %v144
  %v1024 = vunpack.c.l.b16 %v145
  %v1025 = vunpack.c.l.b16 %v146
  %v1026 = vunpack.c.l.b16 %v147
  %v1027 = vunpack.c.l.b16 %v148
  %v1028 = vunpack.c.l.b16 %v149
  %v1029 = vunpack.c.l.b16 %v150
  %v1030 = vunpack.c.l.b16 %v151
  %v1031 = vunpack.c.l.b16 %v152
  %v1032 = vunpack.c.l.b16 %v153
  %v1033 = vunpack.c.l.b16 %v154
  %v1034 = vunpack.c.l.b16 %v155
  %v1035 = vunpack.c.l.b16 %v156
  %v1036 = vunpack.c.l.b16 %v157
  %v1037 = vunpack.c.l.b16 %v158
  %v1038 = vunpack.c.l.b16 %v159
  %v1039 = vunpack.c.l.b16 %v160
  %v1040 = vunpack.c.l.b16 %v161
  %v1041 = vunpack.c.l.b16 %v162
  %v1042 = vunpack.c.l.b16 %v163
  %v1043 = vunpack.c.l.b16 %v164
  %v1044 = vunpack.c.l.b16 %v165
  %v1045 = vunpack.c.l.b16 %v166
  %v1046 = vunpack.c.l.b16 %v167
  %v1047 = vunpack.c.l.b16 %v168
  %v1048 = vunpack.c.l.b16 %v169
  %v1049 = vunpack.c.l.b16 %v170
  %v1050 = vunpack.c.l.b16 %v171
  %v1051 = vunpack.c.l.b16 %v172
  %v1052 = vunpack.c.l.b16 %v173
  %v1053 = vunpack.c.l.b16 %v174
  %v1054 = vunpack.c.l.b16 %v175
  %v1055 = vunpack.c.l.b16 %v176
  %v1056 = vunpack.c.l.b16 %v177
  %v1057 = vunpack.c.l.b16 %v178
  %v1058 = vunpack.c.l.b16 %v179
  %v1059 = vunpack.c.l.b16 %v180
  %v1060 = vunpack.c.l.b16 %v181
  %v1061 = vunpack.c.l.b16 %v182
  %v1062 = vunpack.c.l.b16 %v183
  %v1063 = vunpack.c.l.b16 %v184
  %v1064 = vunpack.c.l.b16 %v185
  %v1065 = vunpack.c.l.b16 %v186
  %v1066 = vunpack.c.l.b16 %v187
  %v1067 = vunpack.c.l.b16 %v188
  %v1068 = vunpack.c.l.b16 %v189
  %v1069 = vunpack.c.l.b16 %v190
  %v1070 = vunpack.c.l.b16 %v191
  %v1071 = vunpack.c.l.b16 %v192
  %v1072 = vunpack.c.l.b16 %v193
  %v1073 = vunpack.c.l.b16 %v194
  %v1074 = vunpack.c.l.b16 %v195
  %v1075 = vunpack.c.l.b16 %v196
  %v1076 = vunpack.c.l.b16 %v197
  %v1077 = vunpack.c.l.b16 %v198
  %v1078 = vunpack.c.l.b16 %v199
  %v1079 = vunpack.c.l.b16 %v200
  %v1080 = vunpack.c.l.b16 %v201
  %v1081 = vunpack.c.l.b16 %v202
  %v1082 = vunpack.c.l.b16 %v203
  %v1083 = vunpack.c.l.b16 %v204
  %v1084 = vunpack.c.l.b16 %v205
  %v1085 = vunpack.c.l.b16 %v206
  %v1086 = vunpack.c.l.b16 %v207
  %v1087 = vunpack.c.l.b16 %v208
  %v1088 = vunpack.c.l.b16 %v209
  %v1089 = vunpack.c.l.b16 %v210
  %v1090 = vunpack.c.l.b16 %v211
  %v1091 = vunpack.c.l.b16 %v212
  %v1092 = vunpack.c.l.b16 %v213
  %v1093 = vunpack.c.l.b16 %v214
  %v1094 = vunpack.c.l.b16 %v215
  %v1095 = vunpack.c.l.b16 %v216
  %v1096 = vunpack.c.l.b16 %v217
  %v1097 = vunpack.c.l.b16 %v218
  %v1098 = vunpack.c.l.b16 %v219
  %v1099 = vunpack.c.l.b16 %v220
  %v1100 = vunpack.c.l.b16 %v221
  %v1101 = vunpack.c.l.b16 %v222
  %v1102 = vunpack.c.l.b16 %v223
  %v1103 = vunpack.c.l.b16 %v224
  %v1104 = vunpack.c.l.b16 %v225
  %v1105 = vunpack.c.l.b16 %v226
  %v1106 = vunpack.c.l.b16 %v227
  %v1107 = vunpack.c.l.b16 %v228
  %v1108 = vunpack.c.l.b16 %v229
  %v1109 = vunpack.c.l.b16 %v230
  %v1110 = vunpack.c.l.b16 %v231
  %v1111 = vunpack.c.l.b16 %v232
  %v1112 = vunpack.c.l.b16 %v233
  %v1113 = vunpack.c.l.b16 %v234
  %v1114 = vunpack.c.l.b16 %v235
  %v1115 = vunpack.c.l.b16 %v236
  %v1116 = vunpack.c.l.b16 %v237
  %v1117 = vunpack.c.l.b16 %v238
  %v1118 = vunpack.c.l.b16 %v239
  %v1119 = vunpack.c.l.b16 %v240
  %v1120 = vunpack.c.l.b16 %v241
  %v1121 = vunpack.c.l.b16 %v242
  %v1122 = vunpack.c.l.b16 %v243
  %v1123 = vunpack.c.l.b16 %v244
  %v1124 = vunpack.c.l.b16 %v245
  %v1125 = vunpack.c.l.b16 %v246
  %v1126 = vunpack.c.l.b16 %v247
  %v1127 = vunpack.c.l.b16 %v248
  %v1128 = vunpack.c.l.b16 %v249
  %v1129 = vunpack.c.l.b16 %v250
  %v1130 = vunpack.c.l.b16 %v251
  %v1131 = vunpack.c.l.b16 %v252
  %v1132 = vunpack.c.l.b16 %v253
  %v1133 = vunpack.c.l.b16 %v254
  %v1134 = vunpack.c.l.b16 %v255
  %v1135 = vunpack.c.l.b16 %v256
  %v1136 = vunpack.c.l.b16 %v257
  %v1137 = vunpack.c.l.b16 %v258
  %v1138 = vunpack.c.l.b16 %v259
  %v1139 = vunpack.c.l.b16 %v260
  %v1140 = vunpack.c.l.b16 %v261
  %v1141 = vunpack.c.l.b16 %v262
  %v1142 = vunpack.c.l.b16 %v263
  %v1143 = vunpack.c.l.b16 %v264
  %v1144 = vunpack.c.l.b16 %v265
  %v1145 = vunpack.c.l.b16 %v266
  %v1146 = vunpack.c.l.b16 %v267
  %v1147 = vunpack.c.l.b16 %v268
  %v1148 = vunpack.c.l.b16 %v269
  %v1149 = vunpack.c.l.b16 %v270
  %v1150 = vunpack.c.l.b16 %v271
  %v1151 = vunpack.c.l.b16 %v272
  %v1152 = vunpack.c.l.b16 %v273
  %v1153 = vunpack.c.l.b16 %v274
  %v1154 = vunpack.c.l.b16 %v275
  %v1155 = vunpack.c.l.b16 %v276
  %v1156 = vunpack.c.l.b16 %v277
  %v1157 = vunpack.c.l.b16 %v278
  %v1158 = vunpack.c.l.b16 %v279
  %v1159 = vunpack.c.l.b16 %v280
  %v1160 = vunpack.c.l.b16 %v281
  %v1161 = vunpack.c.l.b16 %v282
  %v1162 = vunpack.c.l.b16 %v283
  %v1163 = vpack.c.b16 %v1020, %v1019
  %v1164 = vpack.c.b16 %v1022, %v1021
  %v1165 = vpack.c.b16 %v1024, %v1023
  %v1166 = vpack.c.b16 %v1026, %v1025
  %v1167 = vpack.c.b16 %v1028, %v1027
  %v1168 = vpack.c.b16 %v1030, %v1029
  %v1169 = vpack.c.b16 %v1032, %v1031
  %v1170 = vpack.c.b16 %v1034, %v1033
  %v1171 = vpack.c.b16 %v1036, %v1035
  %v1172 = vpack.c.b16 %v1038, %v1037
  %v1173 = vpack.c.b16 %v1040, %v1039
  %v1174 = vpack.c.b16 %v1042, %v1041
  %v1175 = vpack.c.b16 %v1044, %v1043
  %v1176 = vpack.c.b16 %v1046, %v1045
  %v1177 = vpack.c.b16 %v1048, %v1047
  %v1178 = vpack.c.b16 %v1050, %v1049
  %v1179 = vpack.c.b16 %v1052, %v1051
  %v1180 = vpack.c.b16 %v1054, %v1053
  %v1181 = vpack.c.b16 %v1056, %v1055
  %v1182 = vpack.c.b16 %v1058, %v1057
  %v1183 = vpack.c.b16 %v1060, %v1059
  %v1184 = vpack.c.b16 %v1062, %v1061
  %v1185 = vpack.c.b16 %v1064, %v1063
  %v1186 = vpack.c.b16 %v1066, %v1065
  %v1187 = vpack.c.b16 %v1068, %v1067
  %v1188 = vpack.c.b16 %v1070, %v1069
  %v1189 = vpack.c.b16 %v1072, %v1071
  %v1190 = vpack.c.b16 %v1074, %v1073
  %v1191 = vpack.c.b16 %v1076, %v1075
  %v1192 = vpack.c.b16 %v1078, %v1077
  %v1193 = vpack.c.b16 %v1080, %v1079
  %v1194 = vpack.c.b16 %v1082, %v1081
  %v1195 = vpack.c.b16 %v1084, %v1083
  %v1196 = vpack.c.b16 %v1086, %v1085
  %v1197 = vpack.c.b16 %v1088, %v1087
  %v1198 = vpack.c.b16 %v1090, %v1089
  %v1199 = vpack.c.b16 %v1092, %v1091
  %v1200 = vpack.c.b16 %v1094, %v1093
  %v1201 = vpack.c.b16 %v1096, %v1095
  %v1202 = vpack.c.b16 %v1098, %v1097
  %v1203 = vpack.c.b16 %v1100, %v1099
  %v1204 = vpack.c.b16 %v1102, %v1101
  %v1205 = vpack.c.b16 %v1104, %v1103
  %v1206 = vpack.c.b16 %v1106, %v1105
  %v1207 = vpack.c.b16 %v1108, %v1107
  %v1208 = vpack.c.b16 %v1110, %v1109
  %v1209 = vpack.c.b16 %v1112, %v1111
  %v1210 = vpack.c.b16 %v1114, %v1113
  %v1211 = vpack.c.b16 %v1116, %v1115
  %v1212 = vpack.c.b16 %v1118, %v1117
  %v1213 = vpack.c.b16 %v1120, %v1119
  %v1214 = vpack.c.b16 %v1122, %v1121
  %v1215 = vpack.c.b16 %v1124, %v1123
  %v1216 = vpack.c.b16 %v1126, %v1125
  %v1217 = vpack.c.b16 %v1128, %v1127
  %v1218 = vpack.c.b16 %v1130, %v1129
  %v1219 = vpack.c.b16 %v1132, %v1131
  %v1220 = vpack.c.b16 %v1134, %v1133
  %v1221 = vpack.c.b16 %v1136, %v1135
  %v1222 = vpack.c.b16 %v1138, %v1137
  %v1223 = vpack.c.b16 %v1140, %v1139
  %v1224 = vpack.c.b16 %v1142, %v1141
  %v1225 = vpack.c.b16 %v1144, %v1143
  %v1226 = vpack.c.b16 %v1146, %v1145
  %v1227 = vpack.c.b16 %v1148, %v1147
  %v1228 = vpack.c.b16 %v1150, %v1149
  %v1229 = vpack.c.b16 %v1152, %v1151
  %v1230 = vpack.c.b16 %v1154, %v1153
  %v1231 = vpack.c.b16 %v1156, %v1155
  %v1232 = vpack.c.b16 %v1158, %v1157
  %v1233 = vpack.c.b16 %v1160, %v1159
  %v1234 = vpack.c.b16 %v1162, %v1161
  %1307 = vmatprep.subr.bf16.mxu0 0
  %1308 = vmatpush1.bf16.msra.mxu0 %v1170
  %1309 = vmatprep.subr.bf16.mxu0 0
  %1310 = vmatpush1.bf16.msra.mxu0 %v1169
  %1311 = vmatprep.subr.bf16.mxu0 0
  %1312 = vmatpush1.bf16.msra.mxu0 %v1168
  %1313 = vmatprep.subr.bf16.mxu0 0
  %1314 = vmatpush1.bf16.msra.mxu0 %v1167
  %1315 = vmatprep.subr.bf16.mxu0 0
  %1316 = vmatpush1.bf16.msra.mxu0 %v1166
  %1317 = vmatprep.subr.bf16.mxu0 0
  %1318 = vmatpush1.bf16.msra.mxu0 %v1165
  %1319 = vmatprep.subr.bf16.mxu0 0
  %1320 = vmatpush1.bf16.msra.mxu0 %v1164
  %1321 = vmatprep.subr.bf16.mxu0 0
  %1322 = vmatpush1.bf16.msra.mxu0 %v1163
  %1323 = vmatprep.subr.bf16.mxu0 0
  %1324 = vmatpush2.bf16.msra.mxu0 %v1178
  %1325 = vmatprep.subr.bf16.mxu0 0
  %1326 = vmatpush2.bf16.msra.mxu0 %v1177
  %1327 = vmatprep.subr.bf16.mxu0 0
  %1328 = vmatpush2.bf16.msra.mxu0 %v1176
  %1329 = vmatprep.subr.bf16.mxu0 0
  %1330 = vmatpush2.bf16.msra.mxu0 %v1175
  %1331 = vmatprep.subr.bf16.mxu0 0
  %1332 = vmatpush2.bf16.msra.mxu0 %v1174
  %1333 = vmatprep.subr.bf16.mxu0 0
  %1334 = vmatpush2.bf16.msra.mxu0 %v1173
  %1335 = vmatprep.subr.bf16.mxu0 0
  %1336 = vmatpush2.bf16.msra.mxu0 %v1172
  %1337 = vmatprep.subr.bf16.mxu0 0
  %1338 = vmatpush2.bf16.msra.mxu0 %v1171
  %1339 = vmatprep.mubr.bf16.mxu0 %v642
  %1340 = vmatmul.mubr.bf16.gmra.mxu0 %v641
  %v1341 = vpop.f32.mrf.mxu0
  %v1342 = vadd.f32 %v289, %v1341
  %v1343 = vpop.f32.mrf.mxu0
  %v1344 = vpop.f32.mrf.mxu0
  %v1345 = vadd.f32 %v289, %v1344
  %v1346 = vpop.f32.mrf.mxu0
  %1347 = vmatprep.mubr.bf16.mxu0 %v651
  %1348 = vmatmul.mubr.bf16.gmra.mxu0 %v650
  %v1349 = vpop.f32.mrf.mxu0
  %v1350 = vadd.f32 %v289, %v1349
  %v1351 = vpop.f32.mrf.mxu0
  %v1352 = vpop.f32.mrf.mxu0
  %v1353 = vadd.f32 %v289, %v1352
  %v1354 = vpop.f32.mrf.mxu0
  %1355 = vmatprep.mubr.bf16.mxu0 %v660
  %1356 = vmatmul.mubr.bf16.gmra.mxu0 %v659
  %v1357 = vpop.f32.mrf.mxu0
  %v1358 = vadd.f32 %v289, %v1357
  %v1359 = vpop.f32.mrf.mxu0
  %v1360 = vpop.f32.mrf.mxu0
  %v1361 = vadd.f32 %v289, %v1360
  %v1362 = vpop.f32.mrf.mxu0
  %1363 = vmatprep.mubr.bf16.mxu0 %v669
  %1364 = vmatmul.mubr.bf16.gmra.mxu0 %v668
  %v1365 = vpop.f32.mrf.mxu0
  %v1366 = vadd.f32 %v289, %v1365
  %v1367 = vpop.f32.mrf.mxu0
  %v1368 = vpop.f32.mrf.mxu0
  %v1369 = vadd.f32 %v289, %v1368
  %v1370 = vpop.f32.mrf.mxu0
  %1371 = vmatprep.mubr.bf16.mxu0 %v678
  %1372 = vmatmul.mubr.bf16.gmra.mxu0 %v677
  %v1373 = vpop.f32.mrf.mxu0
  %v1374 = vadd.f32 %v289, %v1373
  %v1375 = vpop.f32.mrf.mxu0
  %v1376 = vpop.f32.mrf.mxu0
  %v1377 = vadd.f32 %v289, %v1376
  %v1378 = vpop.f32.mrf.mxu0
  %1379 = vmatprep.mubr.bf16.mxu0 %v687
  %1380 = vmatmul.mubr.bf16.gmra.mxu0 %v686
  %v1381 = vpop.f32.mrf.mxu0
  %v1382 = vadd.f32 %v289, %v1381
  %v1383 = vpop.f32.mrf.mxu0
  %v1384 = vpop.f32.mrf.mxu0
  %v1385 = vadd.f32 %v289, %v1384
  %v1386 = vpop.f32.mrf.mxu0
  %1387 = vmatprep.mubr.bf16.mxu0 %v696
  %1388 = vmatmul.mubr.bf16.gmra.mxu0 %v695
  %v1389 = vpop.f32.mrf.mxu0
  %v1390 = vadd.f32 %v289, %v1389
  %v1391 = vpop.f32.mrf.mxu0
  %v1392 = vpop.f32.mrf.mxu0
  %v1393 = vadd.f32 %v289, %v1392
  %v1394 = vpop.f32.mrf.mxu0
  %1395 = vmatprep.mubr.bf16.mxu0 %v705
  %1396 = vmatmul.mubr.bf16.gmra.mxu0 %v704
  %v1397 = vpop.f32.mrf.mxu0
  %v1398 = vadd.f32 %v289, %v1397
  %v1399 = vpop.f32.mrf.mxu0
  %v1400 = vpop.f32.mrf.mxu0
  %v1401 = vadd.f32 %v289, %v1400
  %v1402 = vpop.f32.mrf.mxu0
  %1403 = vmatprep.mubr.bf16.mxu0 %v714
  %1404 = vmatmul.mubr.bf16.gmra.mxu0 %v713
  %v1405 = vpop.f32.mrf.mxu0
  %v1406 = vadd.f32 %v289, %v1405
  %v1407 = vpop.f32.mrf.mxu0
  %v1408 = vpop.f32.mrf.mxu0
  %v1409 = vadd.f32 %v289, %v1408
  %v1410 = vpop.f32.mrf.mxu0
  %1411 = vmatprep.mubr.bf16.mxu0 %v723
  %1412 = vmatmul.mubr.bf16.gmra.mxu0 %v722
  %v1413 = vpop.f32.mrf.mxu0
  %v1414 = vadd.f32 %v289, %v1413
  %v1415 = vpop.f32.mrf.mxu0
  %v1416 = vpop.f32.mrf.mxu0
  %v1417 = vadd.f32 %v289, %v1416
  %v1418 = vpop.f32.mrf.mxu0
  %1419 = vmatprep.mubr.bf16.mxu0 %v732
  %1420 = vmatmul.mubr.bf16.gmra.mxu0 %v731
  %v1421 = vpop.f32.mrf.mxu0
  %v1422 = vadd.f32 %v289, %v1421
  %v1423 = vpop.f32.mrf.mxu0
  %v1424 = vpop.f32.mrf.mxu0
  %v1425 = vadd.f32 %v289, %v1424
  %v1426 = vpop.f32.mrf.mxu0
  %1427 = vmatprep.mubr.bf16.mxu0 %v741
  %1428 = vmatmul.mubr.bf16.gmra.mxu0 %v740
  %v1429 = vpop.f32.mrf.mxu0
  %v1430 = vadd.f32 %v289, %v1429
  %v1431 = vpop.f32.mrf.mxu0
  %v1432 = vpop.f32.mrf.mxu0
  %v1433 = vadd.f32 %v289, %v1432
  %v1434 = vpop.f32.mrf.mxu0
  %1435 = vmatprep.mubr.bf16.mxu0 %v750
  %1436 = vmatmul.mubr.bf16.gmra.mxu0 %v749
  %v1437 = vpop.f32.mrf.mxu0
  %v1438 = vadd.f32 %v289, %v1437
  %v1439 = vpop.f32.mrf.mxu0
  %v1440 = vpop.f32.mrf.mxu0
  %v1441 = vpop.f32.mrf.mxu0
  %1442 = vdwg.mxu0
  %1443 = vmatprep.subr.bf16.mxu0 0
  %1444 = vmatpush1.bf16.msra.mxu0 %v1186
  %1445 = vmatprep.subr.bf16.mxu0 0
  %1446 = vmatpush1.bf16.msra.mxu0 %v1185
  %1447 = vmatprep.subr.bf16.mxu0 0
  %1448 = vmatpush1.bf16.msra.mxu0 %v1184
  %1449 = vmatprep.subr.bf16.mxu0 0
  %1450 = vmatpush1.bf16.msra.mxu0 %v1183
  %1451 = vmatprep.subr.bf16.mxu0 0
  %1452 = vmatpush1.bf16.msra.mxu0 %v1182
  %1453 = vmatprep.subr.bf16.mxu0 0
  %1454 = vmatpush1.bf16.msra.mxu0 %v1181
  %1455 = vmatprep.subr.bf16.mxu0 0
  %1456 = vmatpush1.bf16.msra.mxu0 %v1180
  %1457 = vmatprep.subr.bf16.mxu0 0
  %1458 = vmatpush1.bf16.msra.mxu0 %v1179
  %1459 = vmatprep.subr.bf16.mxu0 0
  %1460 = vmatpush2.bf16.msra.mxu0 %v1194
  %1461 = vmatprep.subr.bf16.mxu0 0
  %1462 = vmatpush2.bf16.msra.mxu0 %v1193
  %1463 = vmatprep.subr.bf16.mxu0 0
  %1464 = vmatpush2.bf16.msra.mxu0 %v1192
  %1465 = vmatprep.subr.bf16.mxu0 0
  %1466 = vmatpush2.bf16.msra.mxu0 %v1191
  %1467 = vmatprep.subr.bf16.mxu0 0
  %1468 = vmatpush2.bf16.msra.mxu0 %v1190
  %1469 = vmatprep.subr.bf16.mxu0 0
  %1470 = vmatpush2.bf16.msra.mxu0 %v1189
  %1471 = vmatprep.subr.bf16.mxu0 0
  %1472 = vmatpush2.bf16.msra.mxu0 %v1188
  %1473 = vmatprep.subr.bf16.mxu0 0
  %1474 = vmatpush2.bf16.msra.mxu0 %v1187
  %1475 = vmatprep.mubr.bf16.mxu0 %v644
  %1476 = vmatmul.mubr.bf16.gmra.mxu0 %v643
  %v1477 = vpop.f32.mrf.mxu0
  %v1478 = vadd.f32 %v1342, %v1477
  %v1479 = vpop.f32.mrf.mxu0
  %v1480 = vpop.f32.mrf.mxu0
  %v1481 = vadd.f32 %v1345, %v1480
  %v1482 = vpop.f32.mrf.mxu0
  %1483 = vmatprep.mubr.bf16.mxu0 %v653
  %1484 = vmatmul.mubr.bf16.gmra.mxu0 %v652
  %v1485 = vpop.f32.mrf.mxu0
  %v1486 = vadd.f32 %v1350, %v1485
  %v1487 = vpop.f32.mrf.mxu0
  %v1488 = vpop.f32.mrf.mxu0
  %v1489 = vadd.f32 %v1353, %v1488
  %v1490 = vpop.f32.mrf.mxu0
  %1491 = vmatprep.mubr.bf16.mxu0 %v662
  %1492 = vmatmul.mubr.bf16.gmra.mxu0 %v661
  %v1493 = vpop.f32.mrf.mxu0
  %v1494 = vadd.f32 %v1358, %v1493
  %v1495 = vpop.f32.mrf.mxu0
  %v1496 = vpop.f32.mrf.mxu0
  %v1497 = vadd.f32 %v1361, %v1496
  %v1498 = vpop.f32.mrf.mxu0
  %1499 = vmatprep.mubr.bf16.mxu0 %v671
  %1500 = vmatmul.mubr.bf16.gmra.mxu0 %v670
  %v1501 = vpop.f32.mrf.mxu0
  %v1502 = vadd.f32 %v1366, %v1501
  %v1503 = vpop.f32.mrf.mxu0
  %v1504 = vpop.f32.mrf.mxu0
  %v1505 = vadd.f32 %v1369, %v1504
  %v1506 = vpop.f32.mrf.mxu0
  %1507 = vmatprep.mubr.bf16.mxu0 %v680
  %1508 = vmatmul.mubr.bf16.gmra.mxu0 %v679
  %v1509 = vpop.f32.mrf.mxu0
  %v1510 = vadd.f32 %v1374, %v1509
  %v1511 = vpop.f32.mrf.mxu0
  %v1512 = vpop.f32.mrf.mxu0
  %v1513 = vadd.f32 %v1377, %v1512
  %v1514 = vpop.f32.mrf.mxu0
  %1515 = vmatprep.mubr.bf16.mxu0 %v689
  %1516 = vmatmul.mubr.bf16.gmra.mxu0 %v688
  %v1517 = vpop.f32.mrf.mxu0
  %v1518 = vadd.f32 %v1382, %v1517
  %v1519 = vpop.f32.mrf.mxu0
  %v1520 = vpop.f32.mrf.mxu0
  %v1521 = vadd.f32 %v1385, %v1520
  %v1522 = vpop.f32.mrf.mxu0
  %1523 = vmatprep.mubr.bf16.mxu0 %v698
  %1524 = vmatmul.mubr.bf16.gmra.mxu0 %v697
  %v1525 = vpop.f32.mrf.mxu0
  %v1526 = vadd.f32 %v1390, %v1525
  %v1527 = vpop.f32.mrf.mxu0
  %v1528 = vpop.f32.mrf.mxu0
  %v1529 = vadd.f32 %v1393, %v1528
  %v1530 = vpop.f32.mrf.mxu0
  %1531 = vmatprep.mubr.bf16.mxu0 %v707
  %1532 = vmatmul.mubr.bf16.gmra.mxu0 %v706
  %v1533 = vpop.f32.mrf.mxu0
  %v1534 = vadd.f32 %v1398, %v1533
  %v1535 = vpop.f32.mrf.mxu0
  %v1536 = vpop.f32.mrf.mxu0
  %v1537 = vadd.f32 %v1401, %v1536
  %v1538 = vpop.f32.mrf.mxu0
  %1539 = vmatprep.mubr.bf16.mxu0 %v716
  %1540 = vmatmul.mubr.bf16.gmra.mxu0 %v715
  %v1541 = vpop.f32.mrf.mxu0
  %v1542 = vadd.f32 %v1406, %v1541
  %v1543 = vpop.f32.mrf.mxu0
  %v1544 = vpop.f32.mrf.mxu0
  %v1545 = vadd.f32 %v1409, %v1544
  %v1546 = vpop.f32.mrf.mxu0
  %1547 = vmatprep.mubr.bf16.mxu0 %v725
  %1548 = vmatmul.mubr.bf16.gmra.mxu0 %v724
  %v1549 = vpop.f32.mrf.mxu0
  %v1550 = vadd.f32 %v1414, %v1549
  %v1551 = vpop.f32.mrf.mxu0
  %v1552 = vpop.f32.mrf.mxu0
  %v1553 = vadd.f32 %v1417, %v1552
  %v1554 = vpop.f32.mrf.mxu0
  %1555 = vmatprep.mubr.bf16.mxu0 %v734
  %1556 = vmatmul.mubr.bf16.gmra.mxu0 %v733
  %v1557 = vpop.f32.mrf.mxu0
  %v1558 = vadd.f32 %v1422, %v1557
  %v1559 = vpop.f32.mrf.mxu0
  %v1560 = vpop.f32.mrf.mxu0
  %v1561 = vadd.f32 %v1425, %v1560
  %v1562 = vpop.f32.mrf.mxu0
  %1563 = vmatprep.mubr.bf16.mxu0 %v743
  %1564 = vmatmul.mubr.bf16.gmra.mxu0 %v742
  %v1565 = vpop.f32.mrf.mxu0
  %v1566 = vadd.f32 %v1430, %v1565
  %v1567 = vpop.f32.mrf.mxu0
  %v1568 = vpop.f32.mrf.mxu0
  %v1569 = vadd.f32 %v1433, %v1568
  %v1570 = vpop.f32.mrf.mxu0
  %1571 = vmatprep.mubr.bf16.mxu0 %v752
  %1572 = vmatmul.mubr.bf16.gmra.mxu0 %v751
  %v1573 = vpop.f32.mrf.mxu0
  %v1574 = vadd.f32 %v1438, %v1573
  %v1575 = vpop.f32.mrf.mxu0
  %v1576 = vpop.f32.mrf.mxu0
  %v1577 = vpop.f32.mrf.mxu0
  %1578 = vdwg.mxu0
  %1579 = vmatprep.subr.bf16.mxu0 0
  %1580 = vmatpush1.bf16.msra.mxu0 %v1202
  %1581 = vmatprep.subr.bf16.mxu0 0
  %1582 = vmatpush1.bf16.msra.mxu0 %v1201
  %1583 = vmatprep.subr.bf16.mxu0 0
  %1584 = vmatpush1.bf16.msra.mxu0 %v1200
  %1585 = vmatprep.subr.bf16.mxu0 0
  %1586 = vmatpush1.bf16.msra.mxu0 %v1199
  %1587 = vmatprep.subr.bf16.mxu0 0
  %1588 = vmatpush1.bf16.msra.mxu0 %v1198
  %1589 = vmatprep.subr.bf16.mxu0 0
  %1590 = vmatpush1.bf16.msra.mxu0 %v1197
  %1591 = vmatprep.subr.bf16.mxu0 0
  %1592 = vmatpush1.bf16.msra.mxu0 %v1196
  %1593 = vmatprep.subr.bf16.mxu0 0
  %1594 = vmatpush1.bf16.msra.mxu0 %v1195
  %1595 = vmatprep.subr.bf16.mxu0 0
  %1596 = vmatpush2.bf16.msra.mxu0 %v1210
  %1597 = vmatprep.subr.bf16.mxu0 0
  %1598 = vmatpush2.bf16.msra.mxu0 %v1209
  %1599 = vmatprep.subr.bf16.mxu0 0
  %1600 = vmatpush2.bf16.msra.mxu0 %v1208
  %1601 = vmatprep.subr.bf16.mxu0 0
  %1602 = vmatpush2.bf16.msra.mxu0 %v1207
  %1603 = vmatprep.subr.bf16.mxu0 0
  %1604 = vmatpush2.bf16.msra.mxu0 %v1206
  %1605 = vmatprep.subr.bf16.mxu0 0
  %1606 = vmatpush2.bf16.msra.mxu0 %v1205
  %1607 = vmatprep.subr.bf16.mxu0 0
  %1608 = vmatpush2.bf16.msra.mxu0 %v1204
  %1609 = vmatprep.subr.bf16.mxu0 0
  %1610 = vmatpush2.bf16.msra.mxu0 %v1203
  %1611 = vmatprep.mubr.bf16.mxu0 %v646
  %1612 = vmatmul.mubr.bf16.gmra.mxu0 %v645
  %v1613 = vpop.f32.mrf.mxu0
  %v1614 = vadd.f32 %v1478, %v1613
  %v1615 = vpop.f32.mrf.mxu0
  %v1616 = vpop.f32.mrf.mxu0
  %v1617 = vadd.f32 %v1481, %v1616
  %v1618 = vpop.f32.mrf.mxu0
  %1619 = vmatprep.mubr.bf16.mxu0 %v655
  %1620 = vmatmul.mubr.bf16.gmra.mxu0 %v654
  %v1621 = vpop.f32.mrf.mxu0
  %v1622 = vadd.f32 %v1486, %v1621
  %v1623 = vpop.f32.mrf.mxu0
  %v1624 = vpop.f32.mrf.mxu0
  %v1625 = vadd.f32 %v1489, %v1624
  %v1626 = vpop.f32.mrf.mxu0
  %1627 = vmatprep.mubr.bf16.mxu0 %v664
  %1628 = vmatmul.mubr.bf16.gmra.mxu0 %v663
  %v1629 = vpop.f32.mrf.mxu0
  %v1630 = vadd.f32 %v1494, %v1629
  %v1631 = vpop.f32.mrf.mxu0
  %v1632 = vpop.f32.mrf.mxu0
  %v1633 = vadd.f32 %v1497, %v1632
  %v1634 = vpop.f32.mrf.mxu0
  %1635 = vmatprep.mubr.bf16.mxu0 %v673
  %1636 = vmatmul.mubr.bf16.gmra.mxu0 %v672
  %v1637 = vpop.f32.mrf.mxu0
  %v1638 = vadd.f32 %v1502, %v1637
  %v1639 = vpop.f32.mrf.mxu0
  %v1640 = vpop.f32.mrf.mxu0
  %v1641 = vadd.f32 %v1505, %v1640
  %v1642 = vpop.f32.mrf.mxu0
  %1643 = vmatprep.mubr.bf16.mxu0 %v682
  %1644 = vmatmul.mubr.bf16.gmra.mxu0 %v681
  %v1645 = vpop.f32.mrf.mxu0
  %v1646 = vadd.f32 %v1510, %v1645
  %v1647 = vpop.f32.mrf.mxu0
  %v1648 = vpop.f32.mrf.mxu0
  %v1649 = vadd.f32 %v1513, %v1648
  %v1650 = vpop.f32.mrf.mxu0
  %1651 = vmatprep.mubr.bf16.mxu0 %v691
  %1652 = vmatmul.mubr.bf16.gmra.mxu0 %v690
  %v1653 = vpop.f32.mrf.mxu0
  %v1654 = vadd.f32 %v1518, %v1653
  %v1655 = vpop.f32.mrf.mxu0
  %v1656 = vpop.f32.mrf.mxu0
  %v1657 = vadd.f32 %v1521, %v1656
  %v1658 = vpop.f32.mrf.mxu0
  %1659 = vmatprep.mubr.bf16.mxu0 %v700
  %1660 = vmatmul.mubr.bf16.gmra.mxu0 %v699
  %v1661 = vpop.f32.mrf.mxu0
  %v1662 = vadd.f32 %v1526, %v1661
  %v1663 = vpop.f32.mrf.mxu0
  %v1664 = vpop.f32.mrf.mxu0
  %v1665 = vadd.f32 %v1529, %v1664
  %v1666 = vpop.f32.mrf.mxu0
  %1667 = vmatprep.mubr.bf16.mxu0 %v709
  %1668 = vmatmul.mubr.bf16.gmra.mxu0 %v708
  %v1669 = vpop.f32.mrf.mxu0
  %v1670 = vadd.f32 %v1534, %v1669
  %v1671 = vpop.f32.mrf.mxu0
  %v1672 = vpop.f32.mrf.mxu0
  %v1673 = vadd.f32 %v1537, %v1672
  %v1674 = vpop.f32.mrf.mxu0
  %1675 = vmatprep.mubr.bf16.mxu0 %v718
  %1676 = vmatmul.mubr.bf16.gmra.mxu0 %v717
  %v1677 = vpop.f32.mrf.mxu0
  %v1678 = vadd.f32 %v1542, %v1677
  %v1679 = vpop.f32.mrf.mxu0
  %v1680 = vpop.f32.mrf.mxu0
  %v1681 = vadd.f32 %v1545, %v1680
  %v1682 = vpop.f32.mrf.mxu0
  %1683 = vmatprep.mubr.bf16.mxu0 %v727
  %1684 = vmatmul.mubr.bf16.gmra.mxu0 %v726
  %v1685 = vpop.f32.mrf.mxu0
  %v1686 = vadd.f32 %v1550, %v1685
  %v1687 = vpop.f32.mrf.mxu0
  %v1688 = vpop.f32.mrf.mxu0
  %v1689 = vadd.f32 %v1553, %v1688
  %v1690 = vpop.f32.mrf.mxu0
  %1691 = vmatprep.mubr.bf16.mxu0 %v736
  %1692 = vmatmul.mubr.bf16.gmra.mxu0 %v735
  %v1693 = vpop.f32.mrf.mxu0
  %v1694 = vadd.f32 %v1558, %v1693
  %v1695 = vpop.f32.mrf.mxu0
  %v1696 = vpop.f32.mrf.mxu0
  %v1697 = vadd.f32 %v1561, %v1696
  %v1698 = vpop.f32.mrf.mxu0
  %1699 = vmatprep.mubr.bf16.mxu0 %v745
  %1700 = vmatmul.mubr.bf16.gmra.mxu0 %v744
  %v1701 = vpop.f32.mrf.mxu0
  %v1702 = vadd.f32 %v1566, %v1701
  %v1703 = vpop.f32.mrf.mxu0
  %v1704 = vpop.f32.mrf.mxu0
  %v1705 = vadd.f32 %v1569, %v1704
  %v1706 = vpop.f32.mrf.mxu0
  %1707 = vmatprep.mubr.bf16.mxu0 %v754
  %1708 = vmatmul.mubr.bf16.gmra.mxu0 %v753
  %v1709 = vpop.f32.mrf.mxu0
  %v1710 = vadd.f32 %v1574, %v1709
  %v1711 = vpop.f32.mrf.mxu0
  %v1712 = vpop.f32.mrf.mxu0
  %v1713 = vpop.f32.mrf.mxu0
  %1714 = vdwg.mxu0
  %1715 = vmatprep.subr.bf16.mxu0 0
  %1716 = vmatpush1.bf16.msra.mxu0 %v1218
  %1717 = vmatprep.subr.bf16.mxu0 0
  %1718 = vmatpush1.bf16.msra.mxu0 %v1217
  %1719 = vmatprep.subr.bf16.mxu0 0
  %1720 = vmatpush1.bf16.msra.mxu0 %v1216
  %1721 = vmatprep.subr.bf16.mxu0 0
  %1722 = vmatpush1.bf16.msra.mxu0 %v1215
  %1723 = vmatprep.subr.bf16.mxu0 0
  %1724 = vmatpush1.bf16.msra.mxu0 %v1214
  %1725 = vmatprep.subr.bf16.mxu0 0
  %1726 = vmatpush1.bf16.msra.mxu0 %v1213
  %1727 = vmatprep.subr.bf16.mxu0 0
  %1728 = vmatpush1.bf16.msra.mxu0 %v1212
  %1729 = vmatprep.subr.bf16.mxu0 0
  %1730 = vmatpush1.bf16.msra.mxu0 %v1211
  %1731 = vmatprep.subr.bf16.mxu0 0
  %1732 = vmatpush2.bf16.msra.mxu0 %v1226
  %1733 = vmatprep.subr.bf16.mxu0 0
  %1734 = vmatpush2.bf16.msra.mxu0 %v1225
  %1735 = vmatprep.subr.bf16.mxu0 0
  %1736 = vmatpush2.bf16.msra.mxu0 %v1224
  %1737 = vmatprep.subr.bf16.mxu0 0
  %1738 = vmatpush2.bf16.msra.mxu0 %v1223
  %1739 = vmatprep.subr.bf16.mxu0 0
  %1740 = vmatpush2.bf16.msra.mxu0 %v1222
  %1741 = vmatprep.subr.bf16.mxu0 0
  %1742 = vmatpush2.bf16.msra.mxu0 %v1221
  %1743 = vmatprep.subr.bf16.mxu0 0
  %1744 = vmatpush2.bf16.msra.mxu0 %v1220
  %1745 = vmatprep.subr.bf16.mxu0 0
  %1746 = vmatpush2.bf16.msra.mxu0 %v1219
  %1747 = vmatprep.mubr.bf16.mxu0 %v648
  %1748 = vmatmul.mubr.bf16.gmra.mxu0 %v647
  %v1749 = vpop.f32.mrf.mxu0
  %v1750 = vadd.f32 %v1614, %v1749
  %v1751 = vpop.f32.mrf.mxu0
  %v1752 = vpop.f32.mrf.mxu0
  %v1753 = vadd.f32 %v1617, %v1752
  %v1754 = vpop.f32.mrf.mxu0
  %1755 = vmatprep.mubr.bf16.mxu0 %v657
  %1756 = vmatmul.mubr.bf16.gmra.mxu0 %v656
  %v1757 = vpop.f32.mrf.mxu0
  %v1758 = vadd.f32 %v1622, %v1757
  %v1759 = vpop.f32.mrf.mxu0
  %v1760 = vpop.f32.mrf.mxu0
  %v1761 = vadd.f32 %v1625, %v1760
  %v1762 = vpop.f32.mrf.mxu0
  %1763 = vmatprep.mubr.bf16.mxu0 %v666
  %1764 = vmatmul.mubr.bf16.gmra.mxu0 %v665
  %v1765 = vpop.f32.mrf.mxu0
  %v1766 = vadd.f32 %v1630, %v1765
  %v1767 = vpop.f32.mrf.mxu0
  %v1768 = vpop.f32.mrf.mxu0
  %v1769 = vadd.f32 %v1633, %v1768
  %v1770 = vpop.f32.mrf.mxu0
  %1771 = vmatprep.mubr.bf16.mxu0 %v675
  %1772 = vmatmul.mubr.bf16.gmra.mxu0 %v674
  %v1773 = vpop.f32.mrf.mxu0
  %v1774 = vadd.f32 %v1638, %v1773
  %v1775 = vpop.f32.mrf.mxu0
  %v1776 = vpop.f32.mrf.mxu0
  %v1777 = vadd.f32 %v1641, %v1776
  %v1778 = vpop.f32.mrf.mxu0
  %1779 = vmatprep.mubr.bf16.mxu0 %v684
  %1780 = vmatmul.mubr.bf16.gmra.mxu0 %v683
  %v1781 = vpop.f32.mrf.mxu0
  %v1782 = vadd.f32 %v1646, %v1781
  %v1783 = vpop.f32.mrf.mxu0
  %v1784 = vpop.f32.mrf.mxu0
  %v1785 = vadd.f32 %v1649, %v1784
  %v1786 = vpop.f32.mrf.mxu0
  %1787 = vmatprep.mubr.bf16.mxu0 %v693
  %1788 = vmatmul.mubr.bf16.gmra.mxu0 %v692
  %v1789 = vpop.f32.mrf.mxu0
  %v1790 = vadd.f32 %v1654, %v1789
  %v1791 = vpop.f32.mrf.mxu0
  %v1792 = vpop.f32.mrf.mxu0
  %v1793 = vadd.f32 %v1657, %v1792
  %v1794 = vpop.f32.mrf.mxu0
  %1795 = vmatprep.mubr.bf16.mxu0 %v702
  %1796 = vmatmul.mubr.bf16.gmra.mxu0 %v701
  %v1797 = vpop.f32.mrf.mxu0
  %v1798 = vadd.f32 %v1662, %v1797
  %v1799 = vpop.f32.mrf.mxu0
  %v1800 = vpop.f32.mrf.mxu0
  %v1801 = vadd.f32 %v1665, %v1800
  %v1802 = vpop.f32.mrf.mxu0
  %1803 = vmatprep.mubr.bf16.mxu0 %v711
  %1804 = vmatmul.mubr.bf16.gmra.mxu0 %v710
  %v1805 = vpop.f32.mrf.mxu0
  %v1806 = vadd.f32 %v1670, %v1805
  %v1807 = vpop.f32.mrf.mxu0
  %v1808 = vpop.f32.mrf.mxu0
  %v1809 = vadd.f32 %v1673, %v1808
  %v1810 = vpop.f32.mrf.mxu0
  %1811 = vmatprep.mubr.bf16.mxu0 %v720
  %1812 = vmatmul.mubr.bf16.gmra.mxu0 %v719
  %v1813 = vpop.f32.mrf.mxu0
  %v1814 = vadd.f32 %v1678, %v1813
  %v1815 = vpop.f32.mrf.mxu0
  %v1816 = vpop.f32.mrf.mxu0
  %v1817 = vadd.f32 %v1681, %v1816
  %v1818 = vpop.f32.mrf.mxu0
  %1819 = vmatprep.mubr.bf16.mxu0 %v729
  %1820 = vmatmul.mubr.bf16.gmra.mxu0 %v728
  %v1821 = vpop.f32.mrf.mxu0
  %v1822 = vadd.f32 %v1686, %v1821
  %v1823 = vpop.f32.mrf.mxu0
  %v1824 = vpop.f32.mrf.mxu0
  %v1825 = vadd.f32 %v1689, %v1824
  %v1826 = vpop.f32.mrf.mxu0
  %1827 = vmatprep.mubr.bf16.mxu0 %v738
  %1828 = vmatmul.mubr.bf16.gmra.mxu0 %v737
  %v1829 = vpop.f32.mrf.mxu0
  %v1830 = vadd.f32 %v1694, %v1829
  %v1831 = vpop.f32.mrf.mxu0
  %v1832 = vpop.f32.mrf.mxu0
  %v1833 = vadd.f32 %v1697, %v1832
  %v1834 = vpop.f32.mrf.mxu0
  %1835 = vmatprep.mubr.bf16.mxu0 %v747
  %1836 = vmatmul.mubr.bf16.gmra.mxu0 %v746
  %v1837 = vpop.f32.mrf.mxu0
  %v1838 = vadd.f32 %v1702, %v1837
  %v1839 = vpop.f32.mrf.mxu0
  %v1840 = vpop.f32.mrf.mxu0
  %v1841 = vadd.f32 %v1705, %v1840
  %v1842 = vpop.f32.mrf.mxu0
  %1843 = vmatprep.mubr.bf16.mxu0 %v756
  %1844 = vmatmul.mubr.bf16.gmra.mxu0 %v755
  %v1845 = vpop.f32.mrf.mxu0
  %v1846 = vadd.f32 %v1710, %v1845
  %v1847 = vpop.f32.mrf.mxu0
  %v1848 = vpop.f32.mrf.mxu0
  %v1849 = vpop.f32.mrf.mxu0
  %1850 = vdwg.mxu0
  %1851 = vmatprep.subr.bf16.mxu0 0
  %1852 = vmatpush1.bf16.msra.mxu0 %v1234
  %1853 = vmatprep.subr.bf16.mxu0 0
  %1854 = vmatpush1.bf16.msra.mxu0 %v1233
  %1855 = vmatprep.subr.bf16.mxu0 0
  %1856 = vmatpush1.bf16.msra.mxu0 %v1232
  %1857 = vmatprep.subr.bf16.mxu0 0
  %1858 = vmatpush1.bf16.msra.mxu0 %v1231
  %1859 = vmatprep.subr.bf16.mxu0 0
  %1860 = vmatpush1.bf16.msra.mxu0 %v1230
  %1861 = vmatprep.subr.bf16.mxu0 0
  %1862 = vmatpush1.bf16.msra.mxu0 %v1229
  %1863 = vmatprep.subr.bf16.mxu0 0
  %1864 = vmatpush1.bf16.msra.mxu0 %v1228
  %1865 = vmatprep.subr.bf16.mxu0 0
  %1866 = vmatpush1.bf16.msra.mxu0 %v1227
  %1867 = vmatprep.subr.bf16.mxu0 0
  %1868 = vmatpush2.bf16.msra.mxu0 0
  %1869 = vmatprep.subr.bf16.mxu0 0
  %1870 = vmatpush2.bf16.msra.mxu0 0
  %1871 = vmatprep.subr.bf16.mxu0 0
  %1872 = vmatpush2.bf16.msra.mxu0 0
  %1873 = vmatprep.subr.bf16.mxu0 0
  %1874 = vmatpush2.bf16.msra.mxu0 0
  %1875 = vmatprep.subr.bf16.mxu0 0
  %1876 = vmatpush2.bf16.msra.mxu0 0
  %1877 = vmatprep.subr.bf16.mxu0 0
  %1878 = vmatpush2.bf16.msra.mxu0 0
  %1879 = vmatprep.subr.bf16.mxu0 0
  %1880 = vmatpush2.bf16.msra.mxu0 0
  %1881 = vmatprep.subr.bf16.mxu0 0
  %1882 = vmatpush2.bf16.msra.mxu0 0
  %1883 = vmatprep.mubr.bf16.mxu0 0
  %1884 = vmatmul.mubr.bf16.gmra.mxu0 %v649
  %v1885 = vpop.f32.mrf.mxu0
  %v1886 = vadd.f32 %v1750, %v1885
  %v1887 = vpop.f32.mrf.mxu0
  %v1888 = vpop.f32.mrf.mxu0
  %v1889 = vadd.f32 %v1753, %v1888
  %v1890 = vpop.f32.mrf.mxu0
  %1891 = vmatprep.mubr.bf16.mxu0 0
  %1892 = vmatmul.mubr.bf16.gmra.mxu0 %v658
  %v1893 = vpop.f32.mrf.mxu0
  %v1894 = vadd.f32 %v1758, %v1893
  %v1895 = vpop.f32.mrf.mxu0
  %v1896 = vpop.f32.mrf.mxu0
  %v1897 = vadd.f32 %v1761, %v1896
  %v1898 = vpop.f32.mrf.mxu0
  %1899 = vmatprep.mubr.bf16.mxu0 0
  %1900 = vmatmul.mubr.bf16.gmra.mxu0 %v667
  %v1901 = vpop.f32.mrf.mxu0
  %v1902 = vadd.f32 %v1766, %v1901
  %v1903 = vpop.f32.mrf.mxu0
  %v1904 = vpop.f32.mrf.mxu0
  %v1905 = vadd.f32 %v1769, %v1904
  %v1906 = vpop.f32.mrf.mxu0
  %1907 = vmatprep.mubr.bf16.mxu0 0
  %1908 = vmatmul.mubr.bf16.gmra.mxu0 %v676
  %v1909 = vpop.f32.mrf.mxu0
  %v1910 = vadd.f32 %v1774, %v1909
  %v1911 = vpop.f32.mrf.mxu0
  %v1912 = vpop.f32.mrf.mxu0
  %v1913 = vadd.f32 %v1777, %v1912
  %v1914 = vpop.f32.mrf.mxu0
  %1915 = vmatprep.mubr.bf16.mxu0 0
  %1916 = vmatmul.mubr.bf16.gmra.mxu0 %v685
  %v1917 = vpop.f32.mrf.mxu0
  %v1918 = vadd.f32 %v1782, %v1917
  %v1919 = vpop.f32.mrf.mxu0
  %v1920 = vpop.f32.mrf.mxu0
  %v1921 = vadd.f32 %v1785, %v1920
  %v1922 = vpop.f32.mrf.mxu0
  %1923 = vmatprep.mubr.bf16.mxu0 0
  %1924 = vmatmul.mubr.bf16.gmra.mxu0 %v694
  %v1925 = vpop.f32.mrf.mxu0
  %v1926 = vadd.f32 %v1790, %v1925
  %v1927 = vpop.f32.mrf.mxu0
  %v1928 = vpop.f32.mrf.mxu0
  %v1929 = vadd.f32 %v1793, %v1928
  %v1930 = vpop.f32.mrf.mxu0
  %1931 = vmatprep.mubr.bf16.mxu0 0
  %1932 = vmatmul.mubr.bf16.gmra.mxu0 %v703
  %v1933 = vpop.f32.mrf.mxu0
  %v1934 = vadd.f32 %v1798, %v1933
  %v1935 = vpop.f32.mrf.mxu0
  %v1936 = vpop.f32.mrf.mxu0
  %v1937 = vadd.f32 %v1801, %v1936
  %v1938 = vpop.f32.mrf.mxu0
  %1939 = vmatprep.mubr.bf16.mxu0 0
  %1940 = vmatmul.mubr.bf16.gmra.mxu0 %v712
  %v1941 = vpop.f32.mrf.mxu0
  %v1942 = vadd.f32 %v1806, %v1941
  %v1943 = vpop.f32.mrf.mxu0
  %v1944 = vpop.f32.mrf.mxu0
  %v1945 = vadd.f32 %v1809, %v1944
  %v1946 = vpop.f32.mrf.mxu0
  %1947 = vmatprep.mubr.bf16.mxu0 0
  %1948 = vmatmul.mubr.bf16.gmra.mxu0 %v721
  %v1949 = vpop.f32.mrf.mxu0
  %v1950 = vadd.f32 %v1814, %v1949
  %v1951 = vpop.f32.mrf.mxu0
  %v1952 = vpop.f32.mrf.mxu0
  %v1953 = vadd.f32 %v1817, %v1952
  %v1954 = vpop.f32.mrf.mxu0
  %1955 = vmatprep.mubr.bf16.mxu0 0
  %1956 = vmatmul.mubr.bf16.gmra.mxu0 %v730
  %v1957 = vpop.f32.mrf.mxu0
  %v1958 = vadd.f32 %v1822, %v1957
  %v1959 = vpop.f32.mrf.mxu0
  %v1960 = vpop.f32.mrf.mxu0
  %v1961 = vadd.f32 %v1825, %v1960
  %v1962 = vpop.f32.mrf.mxu0
  %1963 = vmatprep.mubr.bf16.mxu0 0
  %1964 = vmatmul.mubr.bf16.gmra.mxu0 %v739
  %v1965 = vpop.f32.mrf.mxu0
  %v1966 = vadd.f32 %v1830, %v1965
  %v1967 = vpop.f32.mrf.mxu0
  %v1968 = vpop.f32.mrf.mxu0
  %v1969 = vadd.f32 %v1833, %v1968
  %v1970 = vpop.f32.mrf.mxu0
  %1971 = vmatprep.mubr.bf16.mxu0 0
  %1972 = vmatmul.mubr.bf16.gmra.mxu0 %v748
  %v1973 = vpop.f32.mrf.mxu0
  %v1974 = vadd.f32 %v1838, %v1973
  %v1975 = vpop.f32.mrf.mxu0
  %v1976 = vpop.f32.mrf.mxu0
  %v1977 = vadd.f32 %v1841, %v1976
  %v1978 = vpop.f32.mrf.mxu0
  %1979 = vmatprep.mubr.bf16.mxu0 0
  %1980 = vmatmul.mubr.bf16.gmra.mxu0 %v757
  %v1981 = vpop.f32.mrf.mxu0
  %v1982 = vadd.f32 %v1846, %v1981
  %v1983 = vpop.f32.mrf.mxu0
  %v1984 = vpop.f32.mrf.mxu0
  %v1985 = vpop.f32.mrf.mxu0
  %1986 = vdwg.mxu0
  %v1987 = vmax.f32 %v1886, 0.0
  %v1988 = vmax.f32 %v1889, 0.0
  %v1989 = vmax.f32 %v1894, 0.0
  %v1990 = vmax.f32 %v1897, 0.0
  %v1991 = vmax.f32 %v1902, 0.0
  %v1992 = vmax.f32 %v1905, 0.0
  %v1993 = vmax.f32 %v1910, 0.0
  %v1994 = vmax.f32 %v1913, 0.0
  %v1995 = vmax.f32 %v1918, 0.0
  %v1996 = vmax.f32 %v1921, 0.0
  %v1997 = vmax.f32 %v1926, 0.0
  %v1998 = vmax.f32 %v1929, 0.0
  %v1999 = vmax.f32 %v1934, 0.0
  %v2000 = vmax.f32 %v1937, 0.0
  %v2001 = vmax.f32 %v1942, 0.0
  %v2002 = vmax.f32 %v1945, 0.0
  %v2003 = vmax.f32 %v1950, 0.0
  %v2004 = vmax.f32 %v1953, 0.0
  %v2005 = vmax.f32 %v1958, 0.0
  %v2006 = vmax.f32 %v1961, 0.0
  %v2007 = vmax.f32 %v1966, 0.0
  %v2008 = vmax.f32 %v1969, 0.0
  %v2009 = vmax.f32 %v1974, 0.0
  %v2010 = vmax.f32 %v1977, 0.0
  %v2011 = vmax.f32 %v1982, 0.0
  %vm2012 = vcmask 261120
  %2013 = vst.msk [vmem:[%s3] sm:$0xff] %vm2012, %v1987
  %2014 = vst.msk [vmem:[%s3 + $0x8] sm:$0xff] %vm2012, %v1988
  %2015 = vst.msk [vmem:[%s3 + $0x10] sm:$0xff] %vm2012, %v1989
  %2016 = vst.msk [vmem:[%s3 + $0x18] sm:$0xff] %vm2012, %v1990
  %2017 = vst.msk [vmem:[%s3 + $0x20] sm:$0xff] %vm2012, %v1991
  %2018 = vst.msk [vmem:[%s3 + $0x28] sm:$0xff] %vm2012, %v1992
  %2019 = vst.msk [vmem:[%s3 + $0x30] sm:$0xff] %vm2012, %v1993
  %2020 = vst.msk [vmem:[%s3 + $0x38] sm:$0xff] %vm2012, %v1994
  %2021 = vst.msk [vmem:[%s3 + $0x40] sm:$0xff] %vm2012, %v1995
  %2022 = vst.msk [vmem:[%s3 + $0x48] sm:$0xff] %vm2012, %v1996
  %2023 = vst.msk [vmem:[%s3 + $0x50] sm:$0xff] %vm2012, %v1997
  %2024 = vst.msk [vmem:[%s3 + $0x58] sm:$0xff] %vm2012, %v1998
  %2025 = vst.msk [vmem:[%s3 + $0x60] sm:$0xff] %vm2012, %v1999
  %2026 = vst.msk [vmem:[%s3 + $0x68] sm:$0xff] %vm2012, %v2000
  %2027 = vst.msk [vmem:[%s3 + $0x70] sm:$0xff] %vm2012, %v2001
  %2028 = vst.msk [vmem:[%s3 + $0x78] sm:$0xff] %vm2012, %v2002
  %2029 = vst.msk [vmem:[%s3 + $0x80] sm:$0xff] %vm2012, %v2003
  %2030 = vst.msk [vmem:[%s3 + $0x88] sm:$0xff] %vm2012, %v2004
  %2031 = vst.msk [vmem:[%s3 + $0x90] sm:$0xff] %vm2012, %v2005
  %2032 = vst.msk [vmem:[%s3 + $0x98] sm:$0xff] %vm2012, %v2006
  %2033 = vst.msk [vmem:[%s3 + $0xa0] sm:$0xff] %vm2012, %v2007
  %2034 = vst.msk [vmem:[%s3 + $0xa8] sm:$0xff] %vm2012, %v2008
  %2035 = vst.msk [vmem:[%s3 + $0xb0] sm:$0xff] %vm2012, %v2009
  %2036 = vst.msk [vmem:[%s3 + $0xb8] sm:$0xff] %vm2012, %v2010
  %2037 = vst.msk [vmem:[%s3 + $0xc0] sm:$0xff] %vm2012, %v2011
  // Predicated region
  $region14: #{sr_model_forward.10} parent=0 // pred_check
    _
  $region15: #{sr_model_forward.10} parent=0 // pred_check_branch
    %2039 = sbr.rel (0) target = $region17
  $region16: #{sr_model_forward.10} parent=0 // pred_region
    _
  $region17: #{sr_model_forward.10} parent=0 // pred_fallthru
    _
  // Predicated region
  $region18: #{sr_model_forward.10} parent=0 // pred_check
    _
  $region19: #{sr_model_forward.10} parent=0 // pred_check_branch
    %2041 = sbr.rel (0) target = $region21
  $region20: #{sr_model_forward.10} parent=0 // pred_region
    _
  $region21: #{sr_model_forward.10} parent=0 // pred_fallthru
    _

// kernel: sr_model_forward.11
$region0: #{sr_model_forward.11}
  #allocation0 [shape = 'u32[]', space=smem, size = 0x4, offset = 0x4, fixed_abs, tag = 'smem constant byte address 0x4 - core index']
  #allocation1 [shape = 'u32[144,128]{1,0:T(1,128)}', space=vmem, size = 0x12000, scoped, tag = 'internal scratch']
  %s0 = inlined_call_operand.vmem [shape: bf16[200,288], index: 0, kind: input, shape index: {}]
  %s1 = inlined_call_operand.vmem [shape: bf16[288,12], index: 1, kind: input, shape index: {}]
  %s2 = inlined_call_operand.vmem [shape: f32[1,12], index: 2, kind: input, shape index: {}]
  %s3 = inlined_call_operand.vmem [shape: f32[200,12], index: 3, kind: output, shape index: {}]
  %s4 = sld [smem:[#allocation0]]
  $region22: #{sr_model_forward.11} parent=0
    _
  %s6 = ssub.s32 1, %s4
  %s7 = scalar_select 0, %s6, %s4
  // Predicated region
  $region2: #{sr_model_forward.11} parent=0 // pred_check
    _
  $region3: #{sr_model_forward.11} parent=0 // pred_check_branch
    %9 = sbr.rel (0) target = $region5
  $region4: #{sr_model_forward.11} parent=0 // pred_region
    _
  $region5: #{sr_model_forward.11} parent=0 // pred_fallthru
    _
  // Predicated region
  $region6: #{sr_model_forward.11} parent=0 // pred_check
    _
  $region7: #{sr_model_forward.11} parent=0 // pred_check_branch
    %11 = sbr.rel (0) target = $region9
  $region8: #{sr_model_forward.11} parent=0 // pred_region
    _
  $region9: #{sr_model_forward.11} parent=0 // pred_fallthru
    _
  // Predicated region
  $region10: #{sr_model_forward.11} parent=0 // pred_check
    _
  $region11: #{sr_model_forward.11} parent=0 // pred_check_branch
    %13 = sbr.rel (0) target = $region13
  $region12: #{sr_model_forward.11} parent=0 // pred_region
    _
  $region13: #{sr_model_forward.11} parent=0 // pred_fallthru
    _
  %v15 = vld [vmem:[%s0] sm:$0xff]
  %v16 = vld [vmem:[%s0 + $0x8] sm:$0xf]
  %v17 = vld [vmem:[%s0 + $0xc] sm:$0xff]
  %v18 = vld [vmem:[%s0 + $0x14] sm:$0xf]
  %v19 = vld [vmem:[%s0 + $0x18] sm:$0xff]
  %v20 = vld [vmem:[%s0 + $0x20] sm:$0xf]
  %v21 = vld [vmem:[%s0 + $0x24] sm:$0xff]
  %v22 = vld [vmem:[%s0 + $0x2c] sm:$0xf]
  %v23 = vld [vmem:[%s0 + $0x30] sm:$0xff]
  %v24 = vld [vmem:[%s0 + $0x38] sm:$0xf]
  %v25 = vld [vmem:[%s0 + $0x3c] sm:$0xff]
  %v26 = vld [vmem:[%s0 + $0x44] sm:$0xf]
  %v27 = vld [vmem:[%s0 + $0x48] sm:$0xff]
  %v28 = vld [vmem:[%s0 + $0x50] sm:$0xf]
  %v29 = vld [vmem:[%s0 + $0x54] sm:$0xff]
  %v30 = vld [vmem:[%s0 + $0x5c] sm:$0xf]
  %v31 = vld [vmem:[%s0 + $0x60] sm:$0xff]
  %v32 = vld [vmem:[%s0 + $0x68] sm:$0xf]
  %v33 = vld [vmem:[%s0 + $0x6c] sm:$0xff]
  %v34 = vld [vmem:[%s0 + $0x74] sm:$0xf]
  %v35 = vld [vmem:[%s0 + $0x78] sm:$0xff]
  %v36 = vld [vmem:[%s0 + $0x80] sm:$0xf]
  %v37 = vld [vmem:[%s0 + $0x84] sm:$0xff]
  %v38 = vld [vmem:[%s0 + $0x8c] sm:$0xf]
  %v39 = vld [vmem:[%s0 + $0x90] sm:$0xff]
  %v40 = vld [vmem:[%s0 + $0x98] sm:$0xf]
  %v41 = vld [vmem:[%s0 + $0x9c] sm:$0xff]
  %v42 = vld [vmem:[%s0 + $0xa4] sm:$0xf]
  %v43 = vld [vmem:[%s0 + $0xa8] sm:$0xff]
  %v44 = vld [vmem:[%s0 + $0xb0] sm:$0xf]
  %v45 = vld [vmem:[%s0 + $0xb4] sm:$0xff]
  %v46 = vld [vmem:[%s0 + $0xbc] sm:$0xf]
  %v47 = vld [vmem:[%s0 + $0xc0] sm:$0xff]
  %v48 = vld [vmem:[%s0 + $0xc8] sm:$0xf]
  %v49 = vld [vmem:[%s0 + $0xcc] sm:$0xff]
  %v50 = vld [vmem:[%s0 + $0xd4] sm:$0xf]
  %v51 = vld [vmem:[%s0 + $0xd8] sm:$0xff]
  %v52 = vld [vmem:[%s0 + $0xe0] sm:$0xf]
  %v53 = vld [vmem:[%s0 + $0xe4] sm:$0xff]
  %v54 = vld [vmem:[%s0 + $0xec] sm:$0xf]
  %v55 = vld [vmem:[%s0 + $0xf0] sm:$0xff]
  %v56 = vld [vmem:[%s0 + $0xf8] sm:$0xf]
  %v57 = vld [vmem:[%s0 + $0xfc] sm:$0xff]
  %v58 = vld [vmem:[%s0 + $0x104] sm:$0xf]
  %v59 = vld [vmem:[%s0 + $0x108] sm:$0xff]
  %v60 = vld [vmem:[%s0 + $0x110] sm:$0xf]
  %v61 = vld [vmem:[%s0 + $0x114] sm:$0xff]
  %v62 = vld [vmem:[%s0 + $0x11c] sm:$0xf]
  %v63 = vld [vmem:[%s0 + $0x120] sm:$0xff]
  %v64 = vld [vmem:[%s0 + $0x128] sm:$0xf]
  %v65 = vld [vmem:[%s1] sm:$0xf]
  %v66 = vld [vmem:[%s1 + $0x4] sm:$0xf]
  %v67 = vld [vmem:[%s1 + $0x8] sm:$0xf]
  %v68 = vld [vmem:[%s1 + $0xc] sm:$0xf]
  %v69 = vld [vmem:[%s1 + $0x10] sm:$0xf]
  %v70 = vld [vmem:[%s1 + $0x14] sm:$0xf]
  %v71 = vld [vmem:[%s1 + $0x18] sm:$0xf]
  %v72 = vld [vmem:[%s1 + $0x1c] sm:$0xf]
  %v73 = vld [vmem:[%s1 + $0x20] sm:$0xf]
  %v74 = vld [vmem:[%s1 + $0x24] sm:$0xf]
  %v75 = vld [vmem:[%s1 + $0x28] sm:$0xf]
  %v76 = vld [vmem:[%s1 + $0x2c] sm:$0xf]
  %v77 = vld [vmem:[%s1 + $0x30] sm:$0xf]
  %v78 = vld [vmem:[%s1 + $0x34] sm:$0xf]
  %v79 = vld [vmem:[%s1 + $0x38] sm:$0xf]
  %v80 = vld [vmem:[%s1 + $0x3c] sm:$0xf]
  %v81 = vld [vmem:[%s1 + $0x40] sm:$0xf]
  %v82 = vld [vmem:[%s1 + $0x44] sm:$0xf]
  %v83 = vld [vmem:[%s1 + $0x48] sm:$0xf]
  %v84 = vld [vmem:[%s1 + $0x4c] sm:$0xf]
  %v85 = vld [vmem:[%s1 + $0x50] sm:$0xf]
  %v86 = vld [vmem:[%s1 + $0x54] sm:$0xf]
  %v87 = vld [vmem:[%s1 + $0x58] sm:$0xf]
  %v88 = vld [vmem:[%s1 + $0x5c] sm:$0xf]
  %v89 = vld [vmem:[%s1 + $0x60] sm:$0xf]
  %v90 = vld [vmem:[%s1 + $0x64] sm:$0xf]
  %v91 = vld [vmem:[%s1 + $0x68] sm:$0xf]
  %v92 = vld [vmem:[%s1 + $0x6c] sm:$0xf]
  %v93 = vld [vmem:[%s1 + $0x70] sm:$0xf]
  %v94 = vld [vmem:[%s1 + $0x74] sm:$0xf]
  %v95 = vld [vmem:[%s1 + $0x78] sm:$0xf]
  %v96 = vld [vmem:[%s1 + $0x7c] sm:$0xf]
  %v97 = vld [vmem:[%s1 + $0x80] sm:$0xf]
  %v98 = vld [vmem:[%s1 + $0x84] sm:$0xf]
  %v99 = vld [vmem:[%s1 + $0x88] sm:$0xf]
  %v100 = vld [vmem:[%s1 + $0x8c] sm:$0xf]
  %v101 = vld [vmem:[%s2] sm:$0x1]
  %v103 = vlaneseq
  %v104 = vshrl.u32 %v103, 7
  %v105 = vsub.s32 0, %v104
  %v106 = vrot.slane %v101, %v105
  %v158 = vunpack.c.l.b16 %v15
  %v159 = vunpack.c.h.b16 %v15
  %v160 = vunpack.c.l.b16 %v16
  %v161 = vunpack.c.l.b16 %v17
  %v162 = vunpack.c.h.b16 %v17
  %v163 = vunpack.c.l.b16 %v18
  %v164 = vunpack.c.l.b16 %v19
  %v165 = vunpack.c.h.b16 %v19
  %v166 = vunpack.c.l.b16 %v20
  %v167 = vunpack.c.l.b16 %v21
  %v168 = vunpack.c.h.b16 %v21
  %v169 = vunpack.c.l.b16 %v22
  %v170 = vunpack.c.l.b16 %v23
  %v171 = vunpack.c.h.b16 %v23
  %v172 = vunpack.c.l.b16 %v24
  %v173 = vunpack.c.l.b16 %v25
  %v174 = vunpack.c.h.b16 %v25
  %v175 = vunpack.c.l.b16 %v26
  %v176 = vunpack.c.l.b16 %v27
  %v177 = vunpack.c.h.b16 %v27
  %v178 = vunpack.c.l.b16 %v28
  %v179 = vunpack.c.l.b16 %v29
  %v180 = vunpack.c.h.b16 %v29
  %v181 = vunpack.c.l.b16 %v30
  %v182 = vunpack.c.l.b16 %v31
  %v183 = vunpack.c.h.b16 %v31
  %v184 = vunpack.c.l.b16 %v32
  %v185 = vunpack.c.l.b16 %v33
  %v186 = vunpack.c.h.b16 %v33
  %v187 = vunpack.c.l.b16 %v34
  %v188 = vunpack.c.l.b16 %v35
  %v189 = vunpack.c.h.b16 %v35
  %v190 = vunpack.c.l.b16 %v36
  %v191 = vunpack.c.l.b16 %v37
  %v192 = vunpack.c.h.b16 %v37
  %v193 = vunpack.c.l.b16 %v38
  %v194 = vunpack.c.l.b16 %v39
  %v195 = vunpack.c.h.b16 %v39
  %v196 = vunpack.c.l.b16 %v40
  %v197 = vunpack.c.l.b16 %v41
  %v198 = vunpack.c.h.b16 %v41
  %v199 = vunpack.c.l.b16 %v42
  %v200 = vunpack.c.l.b16 %v43
  %v201 = vunpack.c.h.b16 %v43
  %v202 = vunpack.c.l.b16 %v44
  %v203 = vunpack.c.l.b16 %v45
  %v204 = vunpack.c.h.b16 %v45
  %v205 = vunpack.c.l.b16 %v46
  %v206 = vunpack.c.l.b16 %v47
  %v207 = vunpack.c.h.b16 %v47
  %v208 = vunpack.c.l.b16 %v48
  %v209 = vunpack.c.l.b16 %v49
  %v210 = vunpack.c.h.b16 %v49
  %v211 = vunpack.c.l.b16 %v50
  %v212 = vunpack.c.l.b16 %v51
  %v213 = vunpack.c.h.b16 %v51
  %v214 = vunpack.c.l.b16 %v52
  %v215 = vunpack.c.l.b16 %v53
  %v216 = vunpack.c.h.b16 %v53
  %v217 = vunpack.c.l.b16 %v54
  %v218 = vunpack.c.l.b16 %v55
  %v219 = vunpack.c.h.b16 %v55
  %v220 = vunpack.c.l.b16 %v56
  %v221 = vunpack.c.l.b16 %v57
  %v222 = vunpack.c.h.b16 %v57
  %v223 = vunpack.c.l.b16 %v58
  %v224 = vunpack.c.l.b16 %v59
  %v225 = vunpack.c.h.b16 %v59
  %v226 = vunpack.c.l.b16 %v60
  %v227 = vunpack.c.l.b16 %v61
  %v228 = vunpack.c.h.b16 %v61
  %v229 = vunpack.c.l.b16 %v62
  %v230 = vunpack.c.l.b16 %v63
  %v231 = vunpack.c.h.b16 %v63
  %v232 = vunpack.c.l.b16 %v64
  %v233 = vpack.c.b16 %v161, %v158
  %v234 = vpack.c.b16 %v162, %v159
  %v235 = vpack.c.b16 %v163, %v160
  %v236 = vpack.c.b16 %v167, %v164
  %v237 = vpack.c.b16 %v168, %v165
  %v238 = vpack.c.b16 %v169, %v166
  %v239 = vpack.c.b16 %v173, %v170
  %v240 = vpack.c.b16 %v174, %v171
  %v241 = vpack.c.b16 %v175, %v172
  %v242 = vpack.c.b16 %v179, %v176
  %v243 = vpack.c.b16 %v180, %v177
  %v244 = vpack.c.b16 %v181, %v178
  %v245 = vpack.c.b16 %v185, %v182
  %v246 = vpack.c.b16 %v186, %v183
  %v247 = vpack.c.b16 %v187, %v184
  %v248 = vpack.c.b16 %v191, %v188
  %v249 = vpack.c.b16 %v192, %v189
  %v250 = vpack.c.b16 %v193, %v190
  %v251 = vpack.c.b16 %v197, %v194
  %v252 = vpack.c.b16 %v198, %v195
  %v253 = vpack.c.b16 %v199, %v196
  %v254 = vpack.c.b16 %v203, %v200
  %v255 = vpack.c.b16 %v204, %v201
  %v256 = vpack.c.b16 %v205, %v202
  %v257 = vpack.c.b16 %v209, %v206
  %v258 = vpack.c.b16 %v210, %v207
  %v259 = vpack.c.b16 %v211, %v208
  %v260 = vpack.c.b16 %v215, %v212
  %v261 = vpack.c.b16 %v216, %v213
  %v262 = vpack.c.b16 %v217, %v214
  %v263 = vpack.c.b16 %v221, %v218
  %v264 = vpack.c.b16 %v222, %v219
  %v265 = vpack.c.b16 %v223, %v220
  %v266 = vpack.c.b16 %v227, %v224
  %v267 = vpack.c.b16 %v228, %v225
  %v268 = vpack.c.b16 %v229, %v226
  %v269 = vpack.c.b16 %v230, %v230
  %v270 = vpack.c.b16 %v231, %v231
  %v271 = vpack.c.b16 %v232, %v232
  %v334 = vunpack.c.l.b16 %v65
  %v335 = vunpack.c.l.b16 %v66
  %v336 = vunpack.c.l.b16 %v67
  %v337 = vunpack.c.l.b16 %v68
  %v338 = vunpack.c.l.b16 %v69
  %v339 = vunpack.c.l.b16 %v70
  %v340 = vunpack.c.l.b16 %v71
  %v341 = vunpack.c.l.b16 %v72
  %v342 = vunpack.c.l.b16 %v73
  %v343 = vunpack.c.l.b16 %v74
  %v344 = vunpack.c.l.b16 %v75
  %v345 = vunpack.c.l.b16 %v76
  %v346 = vunpack.c.l.b16 %v77
  %v347 = vunpack.c.l.b16 %v78
  %v348 = vunpack.c.l.b16 %v79
  %v349 = vunpack.c.l.b16 %v80
  %v350 = vunpack.c.l.b16 %v81
  %v351 = vunpack.c.l.b16 %v82
  %v352 = vunpack.c.l.b16 %v83
  %v353 = vunpack.c.l.b16 %v84
  %v354 = vunpack.c.l.b16 %v85
  %v355 = vunpack.c.l.b16 %v86
  %v356 = vunpack.c.l.b16 %v87
  %v357 = vunpack.c.l.b16 %v88
  %v358 = vunpack.c.l.b16 %v89
  %v359 = vunpack.c.l.b16 %v90
  %v360 = vunpack.c.l.b16 %v91
  %v361 = vunpack.c.l.b16 %v92
  %v362 = vunpack.c.l.b16 %v93
  %v363 = vunpack.c.l.b16 %v94
  %v364 = vunpack.c.l.b16 %v95
  %v365 = vunpack.c.l.b16 %v96
  %v366 = vunpack.c.l.b16 %v97
  %v367 = vunpack.c.l.b16 %v98
  %v368 = vunpack.c.l.b16 %v99
  %v369 = vunpack.c.l.b16 %v100
  %v370 = vpack.c.b16 %v335, %v334
  %v371 = vpack.c.b16 %v337, %v336
  %v372 = vpack.c.b16 %v339, %v338
  %v373 = vpack.c.b16 %v341, %v340
  %v374 = vpack.c.b16 %v343, %v342
  %v375 = vpack.c.b16 %v345, %v344
  %v376 = vpack.c.b16 %v347, %v346
  %v377 = vpack.c.b16 %v349, %v348
  %v378 = vpack.c.b16 %v351, %v350
  %v379 = vpack.c.b16 %v353, %v352
  %v380 = vpack.c.b16 %v355, %v354
  %v381 = vpack.c.b16 %v357, %v356
  %v382 = vpack.c.b16 %v359, %v358
  %v383 = vpack.c.b16 %v361, %v360
  %v384 = vpack.c.b16 %v363, %v362
  %v385 = vpack.c.b16 %v365, %v364
  %v386 = vpack.c.b16 %v367, %v366
  %v387 = vpack.c.b16 %v369, %v368
  %vm406 = vcmask 261120
  %v408 = vsel %vm406, %v235, 0
  %v411 = vsel %vm406, %v238, 0
  %v414 = vsel %vm406, %v241, 0
  %v417 = vsel %vm406, %v244, 0
  %v420 = vsel %vm406, %v247, 0
  %v423 = vsel %vm406, %v250, 0
  %v426 = vsel %vm406, %v253, 0
  %v429 = vsel %vm406, %v256, 0
  %v432 = vsel %vm406, %v259, 0
  %v435 = vsel %vm406, %v262, 0
  %v438 = vsel %vm406, %v265, 0
  %v441 = vsel %vm406, %v268, 0
  %v444 = vsel %vm406, %v271, 0
  %446 = vmatprep.subr.bf16.mxu0 0
  %447 = vmatpush1.bf16.msra.mxu0 %v377
  %448 = vmatprep.subr.bf16.mxu0 0
  %449 = vmatpush1.bf16.msra.mxu0 %v376
  %450 = vmatprep.subr.bf16.mxu0 0
  %451 = vmatpush1.bf16.msra.mxu0 %v375
  %452 = vmatprep.subr.bf16.mxu0 0
  %453 = vmatpush1.bf16.msra.mxu0 %v374
  %454 = vmatprep.subr.bf16.mxu0 0
  %455 = vmatpush1.bf16.msra.mxu0 %v373
  %456 = vmatprep.subr.bf16.mxu0 0
  %457 = vmatpush1.bf16.msra.mxu0 %v372
  %458 = vmatprep.subr.bf16.mxu0 0
  %459 = vmatpush1.bf16.msra.mxu0 %v371
  %460 = vmatprep.subr.bf16.mxu0 0
  %461 = vmatpush1.bf16.msra.mxu0 %v370
  %462 = vmatprep.subr.bf16.mxu0 0
  %463 = vmatpush2.bf16.msra.mxu0 %v385
  %464 = vmatprep.subr.bf16.mxu0 0
  %465 = vmatpush2.bf16.msra.mxu0 %v384
  %466 = vmatprep.subr.bf16.mxu0 0
  %467 = vmatpush2.bf16.msra.mxu0 %v383
  %468 = vmatprep.subr.bf16.mxu0 0
  %469 = vmatpush2.bf16.msra.mxu0 %v382
  %470 = vmatprep.subr.bf16.mxu0 0
  %471 = vmatpush2.bf16.msra.mxu0 %v381
  %472 = vmatprep.subr.bf16.mxu0 0
  %473 = vmatpush2.bf16.msra.mxu0 %v380
  %474 = vmatprep.subr.bf16.mxu0 0
  %475 = vmatpush2.bf16.msra.mxu0 %v379
  %476 = vmatprep.subr.bf16.mxu0 0
  %477 = vmatpush2.bf16.msra.mxu0 %v378
  %478 = vmatprep.mubr.bf16.mxu0 %v234
  %479 = vmatmul.mubr.bf16.gmra.mxu0 %v233
  %v480 = vpop.f32.mrf.mxu0
  %v481 = vadd.f32 %v106, %v480
  %v482 = vpop.f32.mrf.mxu0
  %v483 = vpop.f32.mrf.mxu0
  %v484 = vadd.f32 %v106, %v483
  %v485 = vpop.f32.mrf.mxu0
  %486 = vmatprep.mubr.bf16.mxu0 %v237
  %487 = vmatmul.mubr.bf16.gmra.mxu0 %v236
  %v488 = vpop.f32.mrf.mxu0
  %v489 = vadd.f32 %v106, %v488
  %v490 = vpop.f32.mrf.mxu0
  %v491 = vpop.f32.mrf.mxu0
  %v492 = vadd.f32 %v106, %v491
  %v493 = vpop.f32.mrf.mxu0
  %494 = vmatprep.mubr.bf16.mxu0 %v240
  %495 = vmatmul.mubr.bf16.gmra.mxu0 %v239
  %v496 = vpop.f32.mrf.mxu0
  %v497 = vadd.f32 %v106, %v496
  %v498 = vpop.f32.mrf.mxu0
  %v499 = vpop.f32.mrf.mxu0
  %v500 = vadd.f32 %v106, %v499
  %v501 = vpop.f32.mrf.mxu0
  %502 = vmatprep.mubr.bf16.mxu0 %v243
  %503 = vmatmul.mubr.bf16.gmra.mxu0 %v242
  %v504 = vpop.f32.mrf.mxu0
  %v505 = vadd.f32 %v106, %v504
  %v506 = vpop.f32.mrf.mxu0
  %v507 = vpop.f32.mrf.mxu0
  %v508 = vadd.f32 %v106, %v507
  %v509 = vpop.f32.mrf.mxu0
  %510 = vmatprep.mubr.bf16.mxu0 %v246
  %511 = vmatmul.mubr.bf16.gmra.mxu0 %v245
  %v512 = vpop.f32.mrf.mxu0
  %v513 = vadd.f32 %v106, %v512
  %v514 = vpop.f32.mrf.mxu0
  %v515 = vpop.f32.mrf.mxu0
  %v516 = vadd.f32 %v106, %v515
  %v517 = vpop.f32.mrf.mxu0
  %518 = vmatprep.mubr.bf16.mxu0 %v249
  %519 = vmatmul.mubr.bf16.gmra.mxu0 %v248
  %v520 = vpop.f32.mrf.mxu0
  %v521 = vadd.f32 %v106, %v520
  %v522 = vpop.f32.mrf.mxu0
  %v523 = vpop.f32.mrf.mxu0
  %v524 = vadd.f32 %v106, %v523
  %v525 = vpop.f32.mrf.mxu0
  %526 = vmatprep.mubr.bf16.mxu0 %v252
  %527 = vmatmul.mubr.bf16.gmra.mxu0 %v251
  %v528 = vpop.f32.mrf.mxu0
  %v529 = vadd.f32 %v106, %v528
  %v530 = vpop.f32.mrf.mxu0
  %v531 = vpop.f32.mrf.mxu0
  %v532 = vadd.f32 %v106, %v531
  %v533 = vpop.f32.mrf.mxu0
  %534 = vmatprep.mubr.bf16.mxu0 %v255
  %535 = vmatmul.mubr.bf16.gmra.mxu0 %v254
  %v536 = vpop.f32.mrf.mxu0
  %v537 = vadd.f32 %v106, %v536
  %v538 = vpop.f32.mrf.mxu0
  %v539 = vpop.f32.mrf.mxu0
  %v540 = vadd.f32 %v106, %v539
  %v541 = vpop.f32.mrf.mxu0
  %542 = vmatprep.mubr.bf16.mxu0 %v258
  %543 = vmatmul.mubr.bf16.gmra.mxu0 %v257
  %v544 = vpop.f32.mrf.mxu0
  %v545 = vadd.f32 %v106, %v544
  %v546 = vpop.f32.mrf.mxu0
  %v547 = vpop.f32.mrf.mxu0
  %v548 = vadd.f32 %v106, %v547
  %v549 = vpop.f32.mrf.mxu0
  %550 = vmatprep.mubr.bf16.mxu0 %v261
  %551 = vmatmul.mubr.bf16.gmra.mxu0 %v260
  %v552 = vpop.f32.mrf.mxu0
  %v553 = vadd.f32 %v106, %v552
  %v554 = vpop.f32.mrf.mxu0
  %v555 = vpop.f32.mrf.mxu0
  %v556 = vadd.f32 %v106, %v555
  %v557 = vpop.f32.mrf.mxu0
  %558 = vmatprep.mubr.bf16.mxu0 %v264
  %559 = vmatmul.mubr.bf16.gmra.mxu0 %v263
  %v560 = vpop.f32.mrf.mxu0
  %v561 = vadd.f32 %v106, %v560
  %v562 = vpop.f32.mrf.mxu0
  %v563 = vpop.f32.mrf.mxu0
  %v564 = vadd.f32 %v106, %v563
  %v565 = vpop.f32.mrf.mxu0
  %566 = vmatprep.mubr.bf16.mxu0 %v267
  %567 = vmatmul.mubr.bf16.gmra.mxu0 %v266
  %v568 = vpop.f32.mrf.mxu0
  %v569 = vadd.f32 %v106, %v568
  %v570 = vpop.f32.mrf.mxu0
  %v571 = vpop.f32.mrf.mxu0
  %v572 = vadd.f32 %v106, %v571
  %v573 = vpop.f32.mrf.mxu0
  %574 = vmatprep.mubr.bf16.mxu0 %v270
  %575 = vmatmul.mubr.bf16.gmra.mxu0 %v269
  %v576 = vpop.f32.mrf.mxu0
  %v577 = vadd.f32 %v106, %v576
  %v578 = vpop.f32.mrf.mxu0
  %v579 = vpop.f32.mrf.mxu0
  %v580 = vpop.f32.mrf.mxu0
  %581 = vdwg.mxu0
  %582 = vmatprep.subr.bf16.mxu0 0
  %583 = vmatpush1.bf16.msra.mxu0 0
  %584 = vmatprep.subr.bf16.mxu0 0
  %585 = vmatpush1.bf16.msra.mxu0 0
  %586 = vmatprep.subr.bf16.mxu0 0
  %587 = vmatpush1.bf16.msra.mxu0 0
  %588 = vmatprep.subr.bf16.mxu0 0
  %589 = vmatpush1.bf16.msra.mxu0 0
  %590 = vmatprep.subr.bf16.mxu0 0
  %591 = vmatpush1.bf16.msra.mxu0 0
  %592 = vmatprep.subr.bf16.mxu0 0
  %593 = vmatpush1.bf16.msra.mxu0 0
  %594 = vmatprep.subr.bf16.mxu0 0
  %595 = vmatpush1.bf16.msra.mxu0 %v387
  %596 = vmatprep.subr.bf16.mxu0 0
  %597 = vmatpush1.bf16.msra.mxu0 %v386
  %598 = vmatprep.subr.bf16.mxu0 0
  %599 = vmatpush2.bf16.msra.mxu0 0
  %600 = vmatprep.subr.bf16.mxu0 0
  %601 = vmatpush2.bf16.msra.mxu0 0
  %602 = vmatprep.subr.bf16.mxu0 0
  %603 = vmatpush2.bf16.msra.mxu0 0
  %604 = vmatprep.subr.bf16.mxu0 0
  %605 = vmatpush2.bf16.msra.mxu0 0
  %606 = vmatprep.subr.bf16.mxu0 0
  %607 = vmatpush2.bf16.msra.mxu0 0
  %608 = vmatprep.subr.bf16.mxu0 0
  %609 = vmatpush2.bf16.msra.mxu0 0
  %610 = vmatprep.subr.bf16.mxu0 0
  %611 = vmatpush2.bf16.msra.mxu0 0
  %612 = vmatprep.subr.bf16.mxu0 0
  %613 = vmatpush2.bf16.msra.mxu0 0
  %614 = vmatprep.mubr.bf16.mxu0 0
  %615 = vmatmul.mubr.bf16.gmra.mxu0 %v408
  %v616 = vpop.f32.mrf.mxu0
  %v617 = vadd.f32 %v481, %v616
  %v618 = vpop.f32.mrf.mxu0
  %v619 = vpop.f32.mrf.mxu0
  %v620 = vadd.f32 %v484, %v619
  %v621 = vpop.f32.mrf.mxu0
  %622 = vmatprep.mubr.bf16.mxu0 0
  %623 = vmatmul.mubr.bf16.gmra.mxu0 %v411
  %v624 = vpop.f32.mrf.mxu0
  %v625 = vadd.f32 %v489, %v624
  %v626 = vpop.f32.mrf.mxu0
  %v627 = vpop.f32.mrf.mxu0
  %v628 = vadd.f32 %v492, %v627
  %v629 = vpop.f32.mrf.mxu0
  %630 = vmatprep.mubr.bf16.mxu0 0
  %631 = vmatmul.mubr.bf16.gmra.mxu0 %v414
  %v632 = vpop.f32.mrf.mxu0
  %v633 = vadd.f32 %v497, %v632
  %v634 = vpop.f32.mrf.mxu0
  %v635 = vpop.f32.mrf.mxu0
  %v636 = vadd.f32 %v500, %v635
  %v637 = vpop.f32.mrf.mxu0
  %638 = vmatprep.mubr.bf16.mxu0 0
  %639 = vmatmul.mubr.bf16.gmra.mxu0 %v417
  %v640 = vpop.f32.mrf.mxu0
  %v641 = vadd.f32 %v505, %v640
  %v642 = vpop.f32.mrf.mxu0
  %v643 = vpop.f32.mrf.mxu0
  %v644 = vadd.f32 %v508, %v643
  %v645 = vpop.f32.mrf.mxu0
  %646 = vmatprep.mubr.bf16.mxu0 0
  %647 = vmatmul.mubr.bf16.gmra.mxu0 %v420
  %v648 = vpop.f32.mrf.mxu0
  %v649 = vadd.f32 %v513, %v648
  %v650 = vpop.f32.mrf.mxu0
  %v651 = vpop.f32.mrf.mxu0
  %v652 = vadd.f32 %v516, %v651
  %v653 = vpop.f32.mrf.mxu0
  %654 = vmatprep.mubr.bf16.mxu0 0
  %655 = vmatmul.mubr.bf16.gmra.mxu0 %v423
  %v656 = vpop.f32.mrf.mxu0
  %v657 = vadd.f32 %v521, %v656
  %v658 = vpop.f32.mrf.mxu0
  %v659 = vpop.f32.mrf.mxu0
  %v660 = vadd.f32 %v524, %v659
  %v661 = vpop.f32.mrf.mxu0
  %662 = vmatprep.mubr.bf16.mxu0 0
  %663 = vmatmul.mubr.bf16.gmra.mxu0 %v426
  %v664 = vpop.f32.mrf.mxu0
  %v665 = vadd.f32 %v529, %v664
  %v666 = vpop.f32.mrf.mxu0
  %v667 = vpop.f32.mrf.mxu0
  %v668 = vadd.f32 %v532, %v667
  %v669 = vpop.f32.mrf.mxu0
  %670 = vmatprep.mubr.bf16.mxu0 0
  %671 = vmatmul.mubr.bf16.gmra.mxu0 %v429
  %v672 = vpop.f32.mrf.mxu0
  %v673 = vadd.f32 %v537, %v672
  %v674 = vpop.f32.mrf.mxu0
  %v675 = vpop.f32.mrf.mxu0
  %v676 = vadd.f32 %v540, %v675
  %v677 = vpop.f32.mrf.mxu0
  %678 = vmatprep.mubr.bf16.mxu0 0
  %679 = vmatmul.mubr.bf16.gmra.mxu0 %v432
  %v680 = vpop.f32.mrf.mxu0
  %v681 = vadd.f32 %v545, %v680
  %v682 = vpop.f32.mrf.mxu0
  %v683 = vpop.f32.mrf.mxu0
  %v684 = vadd.f32 %v548, %v683
  %v685 = vpop.f32.mrf.mxu0
  %686 = vmatprep.mubr.bf16.mxu0 0
  %687 = vmatmul.mubr.bf16.gmra.mxu0 %v435
  %v688 = vpop.f32.mrf.mxu0
  %v689 = vadd.f32 %v553, %v688
  %v690 = vpop.f32.mrf.mxu0
  %v691 = vpop.f32.mrf.mxu0
  %v692 = vadd.f32 %v556, %v691
  %v693 = vpop.f32.mrf.mxu0
  %694 = vmatprep.mubr.bf16.mxu0 0
  %695 = vmatmul.mubr.bf16.gmra.mxu0 %v438
  %v696 = vpop.f32.mrf.mxu0
  %v697 = vadd.f32 %v561, %v696
  %v698 = vpop.f32.mrf.mxu0
  %v699 = vpop.f32.mrf.mxu0
  %v700 = vadd.f32 %v564, %v699
  %v701 = vpop.f32.mrf.mxu0
  %702 = vmatprep.mubr.bf16.mxu0 0
  %703 = vmatmul.mubr.bf16.gmra.mxu0 %v441
  %v704 = vpop.f32.mrf.mxu0
  %v705 = vadd.f32 %v569, %v704
  %v706 = vpop.f32.mrf.mxu0
  %v707 = vpop.f32.mrf.mxu0
  %v708 = vadd.f32 %v572, %v707
  %v709 = vpop.f32.mrf.mxu0
  %710 = vmatprep.mubr.bf16.mxu0 0
  %711 = vmatmul.mubr.bf16.gmra.mxu0 %v444
  %v712 = vpop.f32.mrf.mxu0
  %v713 = vadd.f32 %v577, %v712
  %v714 = vpop.f32.mrf.mxu0
  %v715 = vpop.f32.mrf.mxu0
  %v716 = vpop.f32.mrf.mxu0
  %717 = vdwg.mxu0
  %vm718 = vcmask 97280
  %719 = vst.msk [vmem:[%s3] sm:$0xff] %vm718, %v617
  %720 = vst.msk [vmem:[%s3 + $0x8] sm:$0xff] %vm718, %v620
  %721 = vst.msk [vmem:[%s3 + $0x10] sm:$0xff] %vm718, %v625
  %722 = vst.msk [vmem:[%s3 + $0x18] sm:$0xff] %vm718, %v628
  %723 = vst.msk [vmem:[%s3 + $0x20] sm:$0xff] %vm718, %v633
  %724 = vst.msk [vmem:[%s3 + $0x28] sm:$0xff] %vm718, %v636
  %725 = vst.msk [vmem:[%s3 + $0x30] sm:$0xff] %vm718, %v641
  %726 = vst.msk [vmem:[%s3 + $0x38] sm:$0xff] %vm718, %v644
  %727 = vst.msk [vmem:[%s3 + $0x40] sm:$0xff] %vm718, %v649
  %728 = vst.msk [vmem:[%s3 + $0x48] sm:$0xff] %vm718, %v652
  %729 = vst.msk [vmem:[%s3 + $0x50] sm:$0xff] %vm718, %v657
  %730 = vst.msk [vmem:[%s3 + $0x58] sm:$0xff] %vm718, %v660
  %731 = vst.msk [vmem:[%s3 + $0x60] sm:$0xff] %vm718, %v665
  %732 = vst.msk [vmem:[%s3 + $0x68] sm:$0xff] %vm718, %v668
  %733 = vst.msk [vmem:[%s3 + $0x70] sm:$0xff] %vm718, %v673
  %734 = vst.msk [vmem:[%s3 + $0x78] sm:$0xff] %vm718, %v676
  %735 = vst.msk [vmem:[%s3 + $0x80] sm:$0xff] %vm718, %v681
  %736 = vst.msk [vmem:[%s3 + $0x88] sm:$0xff] %vm718, %v684
  %737 = vst.msk [vmem:[%s3 + $0x90] sm:$0xff] %vm718, %v689
  %738 = vst.msk [vmem:[%s3 + $0x98] sm:$0xff] %vm718, %v692
  %739 = vst.msk [vmem:[%s3 + $0xa0] sm:$0xff] %vm718, %v697
  %740 = vst.msk [vmem:[%s3 + $0xa8] sm:$0xff] %vm718, %v700
  %741 = vst.msk [vmem:[%s3 + $0xb0] sm:$0xff] %vm718, %v705
  %742 = vst.msk [vmem:[%s3 + $0xb8] sm:$0xff] %vm718, %v708
  %743 = vst.msk [vmem:[%s3 + $0xc0] sm:$0xff] %vm718, %v713
  // Predicated region
  $region14: #{sr_model_forward.11} parent=0 // pred_check
    _
  $region15: #{sr_model_forward.11} parent=0 // pred_check_branch
    %745 = sbr.rel (0) target = $region17
  $region16: #{sr_model_forward.11} parent=0 // pred_region
    _
  $region17: #{sr_model_forward.11} parent=0 // pred_fallthru
    _
  // Predicated region
  $region18: #{sr_model_forward.11} parent=0 // pred_check
    _
  $region19: #{sr_model_forward.11} parent=0 // pred_check_branch
    %747 = sbr.rel (0) target = $region21
  $region20: #{sr_model_forward.11} parent=0 // pred_region
    _
  $region21: #{sr_model_forward.11} parent=0 // pred_fallthru
    _

</llo_original>
